<compile_context>
chip_gen: v6e
topology: v6e:2x2x1
jax: 0.10.0
libtpu: 0.0.40
codegen_flags: <defaults>
</compile_context>

<pallas_src>
import jax
import jax.numpy as jnp
from jax.experimental import pallas as pl
from jax.experimental.pallas import tpu as pltpu


def _round_up(x, m):
    return (x + m - 1) // m * m


def meta_network_kernel(x_ref, w1_ref, b1_ref, w2_ref, w3_ref, b3_ref,
                        w4_ref, b4_ref, o_ref):
    bt, n, e = x_ref.shape
    h_dim = w1_ref.shape[1]

    x3 = x_ref[...]                       # (bt, n, E_pad)
    x2 = x3.reshape(bt * n, e)            # layout-friendly merge (n == sublane group)

    # ---- attnet layer 1: real MXU matmul over bt*n rows ----
    h = jnp.dot(x2, w1_ref[...], preferred_element_type=jnp.float32) + b1_ref[...]
    h = jnp.maximum(h, 0.0)               # (bt*n, H)
    h3 = h.reshape(bt, n, h_dim)          # (bt, n, H)

    # ---- attnet layer 2: rank-1 contraction -> VPU mul + lane reduce ----
    # (avoids a (*,1) MXU matmul).  b2 omitted: softmax is shift-invariant.
    w2_row = w2_ref[...].reshape(1, 1, h_dim)
    s = jnp.sum(h3 * w2_row, axis=-1, keepdims=True)        # (bt, n, 1)

    # ---- per-problem softmax over the entity axis (axis=1) ----
    m = jnp.max(s, axis=1, keepdims=True)                    # (bt, 1, 1)
    p = jnp.exp(s - m)                                       # (bt, n, 1)
    denom = jnp.sum(p, axis=1, keepdims=True)                # (bt, 1, 1)
    atts = p * pl.reciprocal(denom, approx=True)             # (bt, n, 1)

    # ---- fea_emb = sum_n atts * x ----
    fea = jnp.sum(atts * x3, axis=1, keepdims=True).reshape(bt, e)   # (bt, E_pad)

    # ---- metanet: Linear(E->M) -> ReLU -> Linear(M->E), batched over bt ----
    hm = jnp.dot(fea, w3_ref[...], preferred_element_type=jnp.float32) + b3_ref[...]
    hm = jnp.maximum(hm, 0.0)                                 # (bt, M)
    o_ref[...] = (jnp.dot(hm, w4_ref[...], preferred_element_type=jnp.float32)
                  + b4_ref[...])                              # (bt, E_pad)


def meta_network_forward(x, params, *, block_b=128):
    """x: (B, N, emb_dim) f32 batch of problems, or a single (N, emb_dim).

    Returns (B, emb_dim) (or (emb_dim,) for a single problem), matching the
    PyTorch MetaNetwork.forward applied independently to each problem."""
    single = x.ndim == 2
    if single:
        x = x[None]
    b, n, emb_dim = x.shape

    w1, b1 = params["w1"], params["b1"]
    w2 = params["w2"]                      # (H, 1); b2 dropped (softmax-invariant)
    w3, b3 = params["w3"], params["b3"]
    w4, b4 = params["w4"], params["b4"]

    # Zero-pad emb_dim to a multiple of 128 -> lane-dense loads & stores.
    e_pad = _round_up(emb_dim, 128)
    pe = e_pad - emb_dim
    if pe:
        x = jnp.pad(x, ((0, 0), (0, 0), (0, pe)))
        w1 = jnp.pad(w1, ((0, pe), (0, 0)))
        w3 = jnp.pad(w3, ((0, pe), (0, 0)))
        w4 = jnp.pad(w4, ((0, 0), (0, pe)))
        b4 = jnp.pad(b4, ((0, 0), (0, pe)))

    # Pad the batch so the grid divides evenly (padded rows are sliced off).
    b_tile = min(block_b, _round_up(b, 8))
    b_pad = _round_up(b, b_tile)
    if b_pad != b:
        x = jnp.pad(x, ((0, b_pad - b), (0, 0), (0, 0)))

    w2_row = w2.reshape(1, -1)             # (1, H) broadcast row for the VPU path

    # Weights/biases: constant block index -> VMEM-resident across the grid.
    const2 = lambda a: pl.BlockSpec(a.shape, lambda i: (0, 0))

    out = pl.pallas_call(
        meta_network_kernel,
        out_shape=jax.ShapeDtypeStruct((b_pad, e_pad), jnp.float32),
        grid=(b_pad // b_tile,),
        in_specs=[pl.BlockSpec((b_tile, n, e_pad), lambda i: (i, 0, 0)),
                  const2(w1), const2(b1), const2(w2_row),
                  const2(w3), const2(b3), const2(w4), const2(b4)],
        out_specs=pl.BlockSpec((b_tile, e_pad), lambda i: (i, 0)),
        compiler_params=pltpu.CompilerParams(
            dimension_semantics=("parallel",)),
    )(x, w1, b1, w2_row, w3, b3, w4, b4)

    out = out[:b, :emb_dim]
    return out[0] if single else out


def init_params(key, emb_dim, meta_dim, att_hidden_dim):
    """Deterministic init mimicking torch.nn.Linear defaults (U(-k, k), k=1/sqrt(fan_in)).
    Weights stored transposed as (in, out), biases as (1, out)."""
    ks = jax.random.split(key, 8)

    def lin(kw, kb, fan_in, fan_out):
        k = 1.0 / jnp.sqrt(jnp.asarray(fan_in, jnp.float32))
        w = jax.random.uniform(kw, (fan_in, fan_out), jnp.float32, -k, k)
        b = jax.random.uniform(kb, (1, fan_out), jnp.float32, -k, k)
        return w, b

    w1, b1 = lin(ks[0], ks[1], emb_dim, att_hidden_dim)
    w2, b2 = lin(ks[2], ks[3], att_hidden_dim, 1)
    w3, b3 = lin(ks[4], ks[5], emb_dim, meta_dim)
    w4, b4 = lin(ks[6], ks[7], meta_dim, emb_dim)
    return dict(w1=w1, b1=b1, w2=w2, b2=b2, w3=w3, b3=b3, w4=w4, b4=b4)


def meta_network_ref(x, p):
    """Pure-JAX reference of the PyTorch forward (single problem, (N, E) -> (E,))."""
    h = jnp.maximum(x @ p["w1"] + p["b1"], 0.0)
    s = h @ p["w2"] + p["b2"]
    atts = jax.nn.softmax(s, axis=0)
    fea = jnp.sum(atts * x, axis=0)
    hm = jnp.maximum(fea @ p["w3"] + p["b3"][0], 0.0)
    return hm @ p["w4"] + p["b4"][0]


if __name__ == "__main__":
    B, N, EMB, META, ATT_H = 256, 8, 32, 16, 32

    key = jax.random.PRNGKey(0)
    k_x, k_p = jax.random.split(key)
    x = jax.random.normal(k_x, (B, N, EMB), jnp.float32)
    params = init_params(k_p, EMB, META, ATT_H)

    out = meta_network_forward(x, params)
    jax.block_until_ready(out)
    assert out.shape == (B, EMB)

    ref = jax.vmap(lambda xb: meta_network_ref(xb, params))(x)
    # Tolerance relaxed vs exact f32 because the softmax normalization uses the
    # EUP approximate reciprocal.
    assert jnp.allclose(out, ref, atol=5e-3, rtol=5e-3), float(jnp.max(jnp.abs(out - ref)))

    # Single-problem path matches the original module's (N, E) -> (E,) forward.
    out1 = meta_network_forward(x[0], params)
    jax.block_until_ready(out1)
    assert out1.shape == (EMB,)
    assert jnp.allclose(out1, ref[0], atol=5e-3, rtol=5e-3)

    print("KERNEL_OK")
</pallas_src>

<mosaic_0001>
module attributes {stable_mosaic.version = 11 : i64} {
  func.func @meta_network_kernel(%arg0: i32, %arg1: memref<128x8x128xf32, #tpu.memory_space<vmem>>, %arg2: memref<128x32xf32, #tpu.memory_space<vmem>>, %arg3: memref<1x32xf32, #tpu.memory_space<vmem>>, %arg4: memref<1x32xf32, #tpu.memory_space<vmem>>, %arg5: memref<128x16xf32, #tpu.memory_space<vmem>>, %arg6: memref<1x16xf32, #tpu.memory_space<vmem>>, %arg7: memref<16x128xf32, #tpu.memory_space<vmem>>, %arg8: memref<1x128xf32, #tpu.memory_space<vmem>>, %arg9: memref<128x128xf32, #tpu.memory_space<vmem>>) attributes {dimension_semantics = [#tpu.dimension_semantics<parallel>], iteration_bounds = array<i64: 2>, scalar_prefetch = 0 : i64, scratch_operands = 0 : i64, tpu.core_type = #tpu.core_type<tc>, window_params = [{transform_indices = @transform_0, window_bounds = array<i64: 128, 8, 128>}, {pipeline_mode = #tpu.pipeline_mode<synchronous>, transform_indices = @transform_1, window_bounds = array<i64: 128, 32>}, {pipeline_mode = #tpu.pipeline_mode<synchronous>, transform_indices = @transform_2, window_bounds = array<i64: 1, 32>}, {pipeline_mode = #tpu.pipeline_mode<synchronous>, transform_indices = @transform_3, window_bounds = array<i64: 1, 32>}, {pipeline_mode = #tpu.pipeline_mode<synchronous>, transform_indices = @transform_4, window_bounds = array<i64: 128, 16>}, {pipeline_mode = #tpu.pipeline_mode<synchronous>, transform_indices = @transform_5, window_bounds = array<i64: 1, 16>}, {pipeline_mode = #tpu.pipeline_mode<synchronous>, transform_indices = @transform_6, window_bounds = array<i64: 16, 128>}, {pipeline_mode = #tpu.pipeline_mode<synchronous>, transform_indices = @transform_7, window_bounds = array<i64: 1, 128>}, {transform_indices = @transform_8, window_bounds = array<i64: 128, 128>}]} {
    %c0 = arith.constant 0 : index
    %c0_0 = arith.constant 0 : index
    %c0_1 = arith.constant 0 : index
    %0 = vector.load %arg1[%c0, %c0_0, %c0_1] : memref<128x8x128xf32, #tpu.memory_space<vmem>>, vector<128x8x128xf32>
    %1 = vector.shape_cast %0 : vector<128x8x128xf32> to vector<1024x128xf32>
    %c0_2 = arith.constant 0 : index
    %c0_3 = arith.constant 0 : index
    %2 = vector.load %arg2[%c0_2, %c0_3] : memref<128x32xf32, #tpu.memory_space<vmem>>, vector<128x32xf32>
    %cst = arith.constant dense<0.000000e+00> : vector<1024x32xf32>
    %3 = tpu.matmul %1, %2, %cst {dimension_numbers = #tpu.dot_dimension_numbers<[1], [0], [0], [1], [0, 0, 1, 1], [], []>} : vector<1024x128xf32>, vector<128x32xf32>, vector<1024x32xf32> -> vector<1024x32xf32>
    %c0_4 = arith.constant 0 : index
    %c0_5 = arith.constant 0 : index
    %4 = vector.load %arg3[%c0_4, %c0_5] : memref<1x32xf32, #tpu.memory_space<vmem>>, vector<1x32xf32>
    %5 = vector.broadcast %4 : vector<1x32xf32> to vector<1024x32xf32>
    %6 = arith.addf %3, %5 : vector<1024x32xf32>
    %cst_6 = arith.constant 0.000000e+00 : f32
    %7 = vector.broadcast %cst_6 : f32 to vector<1024x32xf32>
    %8 = arith.maximumf %6, %7 : vector<1024x32xf32>
    %9 = vector.shape_cast %8 : vector<1024x32xf32> to vector<128x8x32xf32>
    %c0_7 = arith.constant 0 : index
    %c0_8 = arith.constant 0 : index
    %10 = vector.load %arg4[%c0_7, %c0_8] : memref<1x32xf32, #tpu.memory_space<vmem>>, vector<1x32xf32>
    %11 = vector.shape_cast %10 : vector<1x32xf32> to vector<1x1x32xf32>
    %12 = vector.broadcast %11 : vector<1x1x32xf32> to vector<128x8x32xf32>
    %13 = arith.mulf %9, %12 : vector<128x8x32xf32>
    %cst_9 = arith.constant dense<0.000000e+00> : vector<128x8xf32>
    %14 = vector.multi_reduction <add>, %13, %cst_9 [2] : vector<128x8x32xf32> to vector<128x8xf32>
    %15 = vector.shape_cast %14 : vector<128x8xf32> to vector<128x8x1xf32>
    %cst_10 = arith.constant dense<0xFF800000> : vector<128x1xf32>
    %16 = vector.multi_reduction <maximumf>, %15, %cst_10 [1] : vector<128x8x1xf32> to vector<128x1xf32>
    %17 = vector.shape_cast %16 : vector<128x1xf32> to vector<128x1x1xf32>
    %18 = vector.broadcast %17 : vector<128x1x1xf32> to vector<128x8x1xf32>
    %19 = arith.subf %15, %18 : vector<128x8x1xf32>
    %20 = math.exp %19 : vector<128x8x1xf32>
    %cst_11 = arith.constant dense<0.000000e+00> : vector<128x1xf32>
    %21 = vector.multi_reduction <add>, %20, %cst_11 [1] : vector<128x8x1xf32> to vector<128x1xf32>
    %22 = vector.shape_cast %21 : vector<128x1xf32> to vector<128x1x1xf32>
    %23 = tpu.reciprocal %22 {approx = true} : vector<128x1x1xf32> -> vector<128x1x1xf32>
    %24 = vector.broadcast %23 : vector<128x1x1xf32> to vector<128x8x1xf32>
    %25 = arith.mulf %20, %24 : vector<128x8x1xf32>
    %26 = vector.broadcast %25 : vector<128x8x1xf32> to vector<128x8x128xf32>
    %27 = arith.mulf %26, %0 : vector<128x8x128xf32>
    %cst_12 = arith.constant dense<0.000000e+00> : vector<128x128xf32>
    %28 = vector.multi_reduction <add>, %27, %cst_12 [1] : vector<128x8x128xf32> to vector<128x128xf32>
    %29 = vector.shape_cast %28 : vector<128x128xf32> to vector<128x1x128xf32>
    %30 = vector.shape_cast %29 : vector<128x1x128xf32> to vector<128x128xf32>
    %c0_13 = arith.constant 0 : index
    %c0_14 = arith.constant 0 : index
    %31 = vector.load %arg5[%c0_13, %c0_14] : memref<128x16xf32, #tpu.memory_space<vmem>>, vector<128x16xf32>
    %cst_15 = arith.constant dense<0.000000e+00> : vector<128x16xf32>
    %32 = tpu.matmul %30, %31, %cst_15 {dimension_numbers = #tpu.dot_dimension_numbers<[1], [0], [0], [1], [0, 0, 1, 1], [], []>} : vector<128x128xf32>, vector<128x16xf32>, vector<128x16xf32> -> vector<128x16xf32>
    %c0_16 = arith.constant 0 : index
    %c0_17 = arith.constant 0 : index
    %33 = vector.load %arg6[%c0_16, %c0_17] : memref<1x16xf32, #tpu.memory_space<vmem>>, vector<1x16xf32>
    %34 = vector.broadcast %33 : vector<1x16xf32> to vector<128x16xf32>
    %35 = arith.addf %32, %34 : vector<128x16xf32>
    %cst_18 = arith.constant 0.000000e+00 : f32
    %36 = vector.broadcast %cst_18 : f32 to vector<128x16xf32>
    %37 = arith.maximumf %35, %36 : vector<128x16xf32>
    %c0_19 = arith.constant 0 : index
    %c0_20 = arith.constant 0 : index
    %38 = vector.load %arg7[%c0_19, %c0_20] : memref<16x128xf32, #tpu.memory_space<vmem>>, vector<16x128xf32>
    %cst_21 = arith.constant dense<0.000000e+00> : vector<128x128xf32>
    %39 = tpu.matmul %37, %38, %cst_21 {dimension_numbers = #tpu.dot_dimension_numbers<[1], [0], [0], [1], [0, 0, 1, 1], [], []>} : vector<128x16xf32>, vector<16x128xf32>, vector<128x128xf32> -> vector<128x128xf32>
    %c0_22 = arith.constant 0 : index
    %c0_23 = arith.constant 0 : index
    %40 = vector.load %arg8[%c0_22, %c0_23] : memref<1x128xf32, #tpu.memory_space<vmem>>, vector<1x128xf32>
    %41 = vector.broadcast %40 : vector<1x128xf32> to vector<128x128xf32>
    %42 = arith.addf %39, %41 : vector<128x128xf32>
    %c0_24 = arith.constant 0 : index
    %c0_25 = arith.constant 0 : index
    %43 = vector.load %arg9[%c0_24, %c0_25] : memref<128x128xf32, #tpu.memory_space<vmem>>, vector<128x128xf32>
    tpu.vector_store %arg9[%c0_24, %c0_25], %42 {strides = array<i32>} : memref<128x128xf32, #tpu.memory_space<vmem>>, vector<128x128xf32>,
    return
  }
  func.func @transform_0(%arg0: i32) -> (i32, i32, i32) {
    %c0_i32 = arith.constant 0 : i32
    %c0_i32_0 = arith.constant 0 : i32
    %c0_i32_1 = arith.constant 0 : i32
    return %arg0, %c0_i32, %c0_i32_0 : i32, i32, i32
  }
  func.func @transform_1(%arg0: i32) -> (i32, i32) {
    %c0_i32 = arith.constant 0 : i32
    %c0_i32_0 = arith.constant 0 : i32
    %c0_i32_1 = arith.constant 0 : i32
    return %c0_i32, %c0_i32_0 : i32, i32
  }
  func.func @transform_2(%arg0: i32) -> (i32, i32) {
    %c0_i32 = arith.constant 0 : i32
    %c0_i32_0 = arith.constant 0 : i32
    %c0_i32_1 = arith.constant 0 : i32
    return %c0_i32, %c0_i32_0 : i32, i32
  }
  func.func @transform_3(%arg0: i32) -> (i32, i32) {
    %c0_i32 = arith.constant 0 : i32
    %c0_i32_0 = arith.constant 0 : i32
    %c0_i32_1 = arith.constant 0 : i32
    return %c0_i32, %c0_i32_0 : i32, i32
  }
  func.func @transform_4(%arg0: i32) -> (i32, i32) {
    %c0_i32 = arith.constant 0 : i32
    %c0_i32_0 = arith.constant 0 : i32
    %c0_i32_1 = arith.constant 0 : i32
    return %c0_i32, %c0_i32_0 : i32, i32
  }
  func.func @transform_5(%arg0: i32) -> (i32, i32) {
    %c0_i32 = arith.constant 0 : i32
    %c0_i32_0 = arith.constant 0 : i32
    %c0_i32_1 = arith.constant 0 : i32
    return %c0_i32, %c0_i32_0 : i32, i32
  }
  func.func @transform_6(%arg0: i32) -> (i32, i32) {
    %c0_i32 = arith.constant 0 : i32
    %c0_i32_0 = arith.constant 0 : i32
    %c0_i32_1 = arith.constant 0 : i32
    return %c0_i32, %c0_i32_0 : i32, i32
  }
  func.func @transform_7(%arg0: i32) -> (i32, i32) {
    %c0_i32 = arith.constant 0 : i32
    %c0_i32_0 = arith.constant 0 : i32
    %c0_i32_1 = arith.constant 0 : i32
    return %c0_i32, %c0_i32_0 : i32, i32
  }
  func.func @transform_8(%arg0: i32) -> (i32, i32) {
    %c0_i32 = arith.constant 0 : i32
    %c0_i32_0 = arith.constant 0 : i32
    return %arg0, %c0_i32 : i32, i32
  }
}

</mosaic_0001>

<llo_original>
// kernel: tpu_custom_call.1
$region0: #{tpu_custom_call.1}
  #allocation0 [shape = 'u32[]', space=smem, size = 0x4, offset = 0x4, fixed_abs, tag = 'smem constant byte address 0x4 - core index']
  #allocation1 [shape = 'u32[144,128]{1,0:T(1,128)}', space=vmem, size = 0x12000, scoped, tag = 'internal scratch']
  %s0 = inlined_call_operand.hbm [shape: f32[256,8,128], index: 0, kind: input, shape index: {}]
  %s1 = inlined_call_operand.vmem [shape: f32[128,32], index: 1, kind: input, shape index: {}]
  %s2 = inlined_call_operand.vmem [shape: f32[1,32], index: 2, kind: input, shape index: {}]
  %s3 = inlined_call_operand.vmem [shape: f32[1,32], index: 3, kind: input, shape index: {}]
  %s4 = inlined_call_operand.vmem [shape: f32[128,16], index: 4, kind: input, shape index: {}]
  %s5 = inlined_call_operand.vmem [shape: f32[1,16], index: 5, kind: input, shape index: {}]
  %s6 = inlined_call_operand.vmem [shape: f32[16,128], index: 6, kind: input, shape index: {}]
  %s7 = inlined_call_operand.vmem [shape: f32[1,128], index: 7, kind: input, shape index: {}]
  %s8 = inlined_call_operand.hbm [shape: f32[256,128], index: 8, kind: output, shape index: {}]
  %s9 = sld [smem:[#allocation0]]
  $region69: #{tpu_custom_call.1} parent=0
    _
  %s11 = ssub.s32 1, %s9
  %s12 = scalar_select 0, %s11, %s9
  $region1: #{tpu_custom_call.1} parent=0
    #allocation2 [shape = 'u8[1048576]{0}', space=vmem, size = 0x100000, scoped, tag = 'input window, operand 0']
    #allocation3 [shape = 's32[2]{0}', space=sflag, size = 0x8, scoped, tag = 'scoped memory for tpu_custom_call.1']
    #allocation4 [shape = 's32[2]{0}', space=sflag, size = 0x8, scoped, tag = 'scoped memory for tpu_custom_call.1']
    #allocation5 [shape = 'u8[131072]{0}', space=vmem, size = 0x20000, scoped, tag = 'output window, operand 0']
    %13 = vsyncpa [#allocation3], 0
    %s14 = scalar_lea.sflag [#allocation3], 1
    %15 = vsyncpa %s14, 0
    %16 = vsyncpa [#allocation4], 0
    %s17 = scalar_lea.sflag [#allocation4], 1
    %18 = vsyncpa %s17, 0
    loop: start=0, step=1, limit=4
    $region2: #{tpu_custom_call.1} parent=1 // loop_pre_header
      _
    $region3: #{tpu_custom_call.1} parent=1 // loop_header
      %s20 = sphi 0, %s24
      %p21 = scmp.ge.s32.totalorder %s20, 4
      %s30 = sphi 0, %s32
      %s33 = sphi 0, %s30
      %s34 = sphi 0, %s33
      %s50 = sphi 0, %s34
      %s54 = sphi 0, %s54
      %s56 = sphi 0, %s54
      %s57 = sphi 0, %s56
      %s71 = sphi 0, %s57
      %s75 = sphi 0, %s75
      %s77 = sphi 0, %s75
      %s78 = sphi 0, %s77
      %s92 = sphi 0, %s78
      %s96 = sphi 0, %s96
      %s98 = sphi 0, %s96
      %s99 = sphi 0, %s98
      %s113 = sphi 0, %s99
      %s117 = sphi 0, %s117
      %s119 = sphi 0, %s117
      %s120 = sphi 0, %s119
      %s134 = sphi 0, %s120
      %s138 = sphi 0, %s138
      %s140 = sphi 0, %s138
      %s141 = sphi 0, %s140
      %s155 = sphi 0, %s141
      %s159 = sphi 0, %s159
      %s161 = sphi 0, %s159
      %s162 = sphi 0, %s161
      %s176 = sphi 0, %s162
      %s180 = sphi 0, %s180
      %s182 = sphi 0, %s180
      %s183 = sphi 0, %s182
      %s197 = sphi 0, %s183
      %s203 = sphi 0, %s205
      %s206 = sphi 0, %s203
      %s207 = sphi 0, %s206
      %s223 = sphi 0, %s207
    $region4: #{tpu_custom_call.1} parent=1 // loop_header_branch
      %23 = sbr.rel (%p21) target = $region8
    $region5: #{tpu_custom_call.1} parent=1 // loop_body
      %s25 = ssub.s32 %s20, 1
      %s26 = ssub.s32 %s20, 2
      %s27 = sadd.s32 %s20, 1
      %s28 = ssub.s32 %s20, %s27
      %p29 = scmp.eq.s32.totalorder %s28, 0
      %s31 = sadd.s32 %s30, 1
      %s32 = scalar_select %p29, %s30, %s31
      %p35 = pneg %p29
      %p36 = scmp.eq.s32.totalorder %s20, 1
      %p37 = por %p35, %p36
      %p38 = scmp.ne.s32.totalorder %s30, %s33
      %p39 = scmp.eq.s32.totalorder %s20, 0
      %p40 = por %p38, %p39
      %p41 = scmp.ne.s32.totalorder %s30, %s33
      %p42 = scmp.eq.s32.totalorder %s25, 1
      %p43 = por %p41, %p42
      %p44 = scmp.ne.s32.totalorder %s33, %s34
      %p45 = scmp.eq.s32.totalorder %s25, 0
      %p46 = por %p44, %p45
      %p47 = scmp.ne.s32.totalorder %s33, %s34
      %p48 = scmp.eq.s32.totalorder %s26, 1
      %p49 = por %p47, %p48
      %p51 = scmp.ne.s32.totalorder %s34, %s50
      %p52 = scmp.eq.s32.totalorder %s26, 0
      %p53 = por %p51, %p52
      %s55 = sadd.s32 %s54, 1
      %p58 = scmp.eq.s32.totalorder %s20, 1
      %p59 = scmp.ne.s32.totalorder %s54, %s56
      %p60 = scmp.eq.s32.totalorder %s20, 0
      %p61 = por %p59, %p60
      %p62 = scmp.ne.s32.totalorder %s54, %s56
      %p63 = scmp.eq.s32.totalorder %s25, 1
      %p64 = por %p62, %p63
      %p65 = scmp.ne.s32.totalorder %s56, %s57
      %p66 = scmp.eq.s32.totalorder %s25, 0
      %p67 = por %p65, %p66
      %p68 = scmp.ne.s32.totalorder %s56, %s57
      %p69 = scmp.eq.s32.totalorder %s26, 1
      %p70 = por %p68, %p69
      %p72 = scmp.ne.s32.totalorder %s57, %s71
      %p73 = scmp.eq.s32.totalorder %s26, 0
      %p74 = por %p72, %p73
      %s76 = sadd.s32 %s75, 1
      %p79 = scmp.eq.s32.totalorder %s20, 1
      %p80 = scmp.ne.s32.totalorder %s75, %s77
      %p81 = scmp.eq.s32.totalorder %s20, 0
      %p82 = por %p80, %p81
      %p83 = scmp.ne.s32.totalorder %s75, %s77
      %p84 = scmp.eq.s32.totalorder %s25, 1
      %p85 = por %p83, %p84
      %p86 = scmp.ne.s32.totalorder %s77, %s78
      %p87 = scmp.eq.s32.totalorder %s25, 0
      %p88 = por %p86, %p87
      %p89 = scmp.ne.s32.totalorder %s77, %s78
      %p90 = scmp.eq.s32.totalorder %s26, 1
      %p91 = por %p89, %p90
      %p93 = scmp.ne.s32.totalorder %s78, %s92
      %p94 = scmp.eq.s32.totalorder %s26, 0
      %p95 = por %p93, %p94
      %s97 = sadd.s32 %s96, 1
      %p100 = scmp.eq.s32.totalorder %s20, 1
      %p101 = scmp.ne.s32.totalorder %s96, %s98
      %p102 = scmp.eq.s32.totalorder %s20, 0
      %p103 = por %p101, %p102
      %p104 = scmp.ne.s32.totalorder %s96, %s98
      %p105 = scmp.eq.s32.totalorder %s25, 1
      %p106 = por %p104, %p105
      %p107 = scmp.ne.s32.totalorder %s98, %s99
      %p108 = scmp.eq.s32.totalorder %s25, 0
      %p109 = por %p107, %p108
      %p110 = scmp.ne.s32.totalorder %s98, %s99
      %p111 = scmp.eq.s32.totalorder %s26, 1
      %p112 = por %p110, %p111
      %p114 = scmp.ne.s32.totalorder %s99, %s113
      %p115 = scmp.eq.s32.totalorder %s26, 0
      %p116 = por %p114, %p115
      %s118 = sadd.s32 %s117, 1
      %p121 = scmp.eq.s32.totalorder %s20, 1
      %p122 = scmp.ne.s32.totalorder %s117, %s119
      %p123 = scmp.eq.s32.totalorder %s20, 0
      %p124 = por %p122, %p123
      %p125 = scmp.ne.s32.totalorder %s117, %s119
      %p126 = scmp.eq.s32.totalorder %s25, 1
      %p127 = por %p125, %p126
      %p128 = scmp.ne.s32.totalorder %s119, %s120
      %p129 = scmp.eq.s32.totalorder %s25, 0
      %p130 = por %p128, %p129
      %p131 = scmp.ne.s32.totalorder %s119, %s120
      %p132 = scmp.eq.s32.totalorder %s26, 1
      %p133 = por %p131, %p132
      %p135 = scmp.ne.s32.totalorder %s120, %s134
      %p136 = scmp.eq.s32.totalorder %s26, 0
      %p137 = por %p135, %p136
      %s139 = sadd.s32 %s138, 1
      %p142 = scmp.eq.s32.totalorder %s20, 1
      %p143 = scmp.ne.s32.totalorder %s138, %s140
      %p144 = scmp.eq.s32.totalorder %s20, 0
      %p145 = por %p143, %p144
      %p146 = scmp.ne.s32.totalorder %s138, %s140
      %p147 = scmp.eq.s32.totalorder %s25, 1
      %p148 = por %p146, %p147
      %p149 = scmp.ne.s32.totalorder %s140, %s141
      %p150 = scmp.eq.s32.totalorder %s25, 0
      %p151 = por %p149, %p150
      %p152 = scmp.ne.s32.totalorder %s140, %s141
      %p153 = scmp.eq.s32.totalorder %s26, 1
      %p154 = por %p152, %p153
      %p156 = scmp.ne.s32.totalorder %s141, %s155
      %p157 = scmp.eq.s32.totalorder %s26, 0
      %p158 = por %p156, %p157
      %s160 = sadd.s32 %s159, 1
      %p163 = scmp.eq.s32.totalorder %s20, 1
      %p164 = scmp.ne.s32.totalorder %s159, %s161
      %p165 = scmp.eq.s32.totalorder %s20, 0
      %p166 = por %p164, %p165
      %p167 = scmp.ne.s32.totalorder %s159, %s161
      %p168 = scmp.eq.s32.totalorder %s25, 1
      %p169 = por %p167, %p168
      %p170 = scmp.ne.s32.totalorder %s161, %s162
      %p171 = scmp.eq.s32.totalorder %s25, 0
      %p172 = por %p170, %p171
      %p173 = scmp.ne.s32.totalorder %s161, %s162
      %p174 = scmp.eq.s32.totalorder %s26, 1
      %p175 = por %p173, %p174
      %p177 = scmp.ne.s32.totalorder %s162, %s176
      %p178 = scmp.eq.s32.totalorder %s26, 0
      %p179 = por %p177, %p178
      %s181 = sadd.s32 %s180, 1
      %p184 = scmp.eq.s32.totalorder %s20, 1
      %p185 = scmp.ne.s32.totalorder %s180, %s182
      %p186 = scmp.eq.s32.totalorder %s20, 0
      %p187 = por %p185, %p186
      %p188 = scmp.ne.s32.totalorder %s180, %s182
      %p189 = scmp.eq.s32.totalorder %s25, 1
      %p190 = por %p188, %p189
      %p191 = scmp.ne.s32.totalorder %s182, %s183
      %p192 = scmp.eq.s32.totalorder %s25, 0
      %p193 = por %p191, %p192
      %p194 = scmp.ne.s32.totalorder %s182, %s183
      %p195 = scmp.eq.s32.totalorder %s26, 1
      %p196 = por %p194, %p195
      %p198 = scmp.ne.s32.totalorder %s183, %s197
      %p199 = scmp.eq.s32.totalorder %s26, 0
      %p200 = por %p198, %p199
      %s201 = ssub.s32 %s20, %s27
      %p202 = scmp.eq.s32.totalorder %s201, 0
      %s204 = sadd.s32 %s203, 1
      %s205 = scalar_select %p202, %s203, %s204
      %p208 = pneg %p202
      %p209 = scmp.eq.s32.totalorder %s20, 1
      %p210 = por %p208, %p209
      %p211 = scmp.ne.s32.totalorder %s203, %s206
      %p212 = scmp.eq.s32.totalorder %s20, 0
      %p213 = por %p211, %p212
      %p214 = scmp.ne.s32.totalorder %s203, %s206
      %p215 = scmp.eq.s32.totalorder %s25, 1
      %p216 = por %p214, %p215
      %p217 = scmp.ne.s32.totalorder %s206, %s207
      %p218 = scmp.eq.s32.totalorder %s25, 0
      %p219 = por %p217, %p218
      %p220 = scmp.ne.s32.totalorder %s206, %s207
      %p221 = scmp.eq.s32.totalorder %s26, 1
      %p222 = por %p220, %p221
      %p224 = scmp.ne.s32.totalorder %s207, %s223
      %p225 = scmp.eq.s32.totalorder %s26, 0
      %p226 = por %p224, %p225
      %p227 = scmp.le.s32.totalorder 1, %s20
      %p228 = scmp.lt.s32.totalorder %s20, 3
      %p229 = pnand %p227, %p228
      %p230 = pneg %p229
      // Predicated region
      $region9: #{tpu_custom_call.1} parent=5 // pred_check
        _
      $region10: #{tpu_custom_call.1} parent=5 // pred_check_branch
        %232 = sbr.rel (%p229) target = $region12
      $region11: #{tpu_custom_call.1} parent=5 // pred_region
        %s233 = ssub.s32 %s20, 1
        // Predicated region
        $region13: #{tpu_custom_call.1} parent=11 // pred_check
          %p234 = pneg %p67
        $region14: #{tpu_custom_call.1} parent=11 // pred_check_branch
          %236 = sbr.rel (%p234) target = $region16
        $region15: #{tpu_custom_call.1} parent=11 // pred_region
          _
        $region16: #{tpu_custom_call.1} parent=11 // pred_fallthru
          _
        // Predicated region
        $region17: #{tpu_custom_call.1} parent=11 // pred_check
          %p237 = pneg %p88
        $region18: #{tpu_custom_call.1} parent=11 // pred_check_branch
          %239 = sbr.rel (%p237) target = $region20
        $region19: #{tpu_custom_call.1} parent=11 // pred_region
          _
        $region20: #{tpu_custom_call.1} parent=11 // pred_fallthru
          _
        // Predicated region
        $region21: #{tpu_custom_call.1} parent=11 // pred_check
          %p240 = pneg %p109
        $region22: #{tpu_custom_call.1} parent=11 // pred_check_branch
          %242 = sbr.rel (%p240) target = $region24
        $region23: #{tpu_custom_call.1} parent=11 // pred_region
          _
        $region24: #{tpu_custom_call.1} parent=11 // pred_fallthru
          _
        // Predicated region
        $region25: #{tpu_custom_call.1} parent=11 // pred_check
          %p243 = pneg %p130
        $region26: #{tpu_custom_call.1} parent=11 // pred_check_branch
          %245 = sbr.rel (%p243) target = $region28
        $region27: #{tpu_custom_call.1} parent=11 // pred_region
          _
        $region28: #{tpu_custom_call.1} parent=11 // pred_fallthru
          _
        // Predicated region
        $region29: #{tpu_custom_call.1} parent=11 // pred_check
          %p246 = pneg %p151
        $region30: #{tpu_custom_call.1} parent=11 // pred_check_branch
          %248 = sbr.rel (%p246) target = $region32
        $region31: #{tpu_custom_call.1} parent=11 // pred_region
          _
        $region32: #{tpu_custom_call.1} parent=11 // pred_fallthru
          _
        // Predicated region
        $region33: #{tpu_custom_call.1} parent=11 // pred_check
          %p249 = pneg %p172
        $region34: #{tpu_custom_call.1} parent=11 // pred_check_branch
          %251 = sbr.rel (%p249) target = $region36
        $region35: #{tpu_custom_call.1} parent=11 // pred_region
          _
        $region36: #{tpu_custom_call.1} parent=11 // pred_fallthru
          _
        // Predicated region
        $region37: #{tpu_custom_call.1} parent=11 // pred_check
          %p252 = pneg %p193
        $region38: #{tpu_custom_call.1} parent=11 // pred_check_branch
          %254 = sbr.rel (%p252) target = $region40
        $region39: #{tpu_custom_call.1} parent=11 // pred_region
          _
        $region40: #{tpu_custom_call.1} parent=11 // pred_fallthru
          _
      $region12: #{tpu_custom_call.1} parent=5 // pred_fallthru
        _
      %p255 = scmp.lt.s32.totalorder %s20, 2
      // Predicated region
      $region41: #{tpu_custom_call.1} parent=5 // pred_check
        %p256 = pneg %p255
      $region42: #{tpu_custom_call.1} parent=5 // pred_check_branch
        %258 = sbr.rel (%p256) target = $region44
      $region43: #{tpu_custom_call.1} parent=5 // pred_region
        // Predicated region
        $region45: #{tpu_custom_call.1} parent=43 // pred_check
          %p259 = pneg %p40
        $region46: #{tpu_custom_call.1} parent=43 // pred_check_branch
          %261 = sbr.rel (%p259) target = $region48
        $region47: #{tpu_custom_call.1} parent=43 // pred_region
          %s262 = sand.u32 %s30, 1
          %s263 = scalar_lea.sflag [#allocation3], %s262
          %s264 = sand.u32 %s30, 1
          %s265 = smul.addr %s264, 1024
          %s266 = scalar_lea.vmem [#allocation2], %s265
          %s267 = smul.u32 128, %s20
          %s269 = ssub.s32 16384, 16384
          %270 = vsyncadd %s263, %s269
          %s271 = smul.addr %s267, 128
          %s272 = scalar_lea.hbm %s0, %s271
          %s273 = sshll.u32 %s266, 4
          %s274 = int_to_ptr.vmem [resolvable:$true] %s273
          %279 = dma.hbm_to_vmem [thread:$0]  %s272, 16384, %s274, %s263, 128, 128, 8
        $region48: #{tpu_custom_call.1} parent=43 // pred_fallthru
          _
      $region44: #{tpu_custom_call.1} parent=5 // pred_fallthru
        _
      %p280 = scmp.le.s32.totalorder 1, %s20
      %p281 = scmp.lt.s32.totalorder %s20, 3
      %p282 = pnand %p280, %p281
      %p283 = pneg %p282
      // Predicated region
      $region49: #{tpu_custom_call.1} parent=5 // pred_check
        _
      $region50: #{tpu_custom_call.1} parent=5 // pred_check_branch
        %285 = sbr.rel (%p282) target = $region52
      $region51: #{tpu_custom_call.1} parent=5 // pred_region
        %s286 = ssub.s32 %s20, 1
        %s287 = sand.u32 %s33, 1
        %s288 = scalar_lea.sflag [#allocation3], %s287
        %s289 = sand.u32 %s33, 1
        %s290 = smul.addr %s289, 1024
        %s291 = scalar_lea.vmem [#allocation2], %s290
        // Predicated region
        $region53: #{tpu_custom_call.1} parent=51 // pred_check
          %p292 = pneg %p46
        $region54: #{tpu_custom_call.1} parent=51 // pred_check_branch
          %294 = sbr.rel (%p292) target = $region56
        $region55: #{tpu_custom_call.1} parent=51 // pred_region
          %295 = dma.done %s288, 16384
        $region56: #{tpu_custom_call.1} parent=51 // pred_fallthru
          _
        %s296 = sand.u32 %s33, 1
        %s297 = scalar_lea.sflag [#allocation3], %s296
        %s298 = sand.u32 %s33, 1
        %s299 = smul.addr %s298, 1024
        %s300 = scalar_lea.vmem [#allocation2], %s299
        %p301 = pneg %p46
        %p302 = pneg %p43
        %p303 = pneg %p67
        %p304 = pneg %p64
        %p305 = pneg %p88
        %p306 = pneg %p85
        %p307 = pneg %p109
        %p308 = pneg %p106
        %p309 = pneg %p130
        %p310 = pneg %p127
        %p311 = pneg %p151
        %p312 = pneg %p148
        %p313 = pneg %p172
        %p314 = pneg %p169
        %p315 = pneg %p193
        %p316 = pneg %p190
        %p317 = pneg %p219
        %p318 = pneg %p216
        %s319 = sand.u32 %s206, 1
        %s320 = scalar_lea.sflag [#allocation4], %s319
        %s321 = sand.u32 %s206, 1
        %s322 = smul.addr %s321, 128
        %s323 = scalar_lea.vmem [#allocation5], %s322
        %s324 = smul.u32 128, %s25
        %s325 = smul.u32 16, %s25
        %v326 = vld [vmem:[%s291] sm:$0xff]
        %v327 = vld [vmem:[%s291 + $0x8] sm:$0xff]
        %v328 = vld [vmem:[%s291 + $0x10] sm:$0xff]
        %v329 = vld [vmem:[%s291 + $0x18] sm:$0xff]
        %v330 = vld [vmem:[%s291 + $0x20] sm:$0xff]
        %v331 = vld [vmem:[%s291 + $0x28] sm:$0xff]
        %v332 = vld [vmem:[%s291 + $0x30] sm:$0xff]
        %v333 = vld [vmem:[%s291 + $0x38] sm:$0xff]
        %v334 = vld [vmem:[%s291 + $0x40] sm:$0xff]
        %v335 = vld [vmem:[%s291 + $0x48] sm:$0xff]
        %v336 = vld [vmem:[%s291 + $0x50] sm:$0xff]
        %v337 = vld [vmem:[%s291 + $0x58] sm:$0xff]
        %v338 = vld [vmem:[%s291 + $0x60] sm:$0xff]
        %v339 = vld [vmem:[%s291 + $0x68] sm:$0xff]
        %v340 = vld [vmem:[%s291 + $0x70] sm:$0xff]
        %v341 = vld [vmem:[%s291 + $0x78] sm:$0xff]
        %v342 = vld [vmem:[%s291 + $0x80] sm:$0xff]
        %v343 = vld [vmem:[%s291 + $0x88] sm:$0xff]
        %v344 = vld [vmem:[%s291 + $0x90] sm:$0xff]
        %v345 = vld [vmem:[%s291 + $0x98] sm:$0xff]
        %v346 = vld [vmem:[%s291 + $0xa0] sm:$0xff]
        %v347 = vld [vmem:[%s291 + $0xa8] sm:$0xff]
        %v348 = vld [vmem:[%s291 + $0xb0] sm:$0xff]
        %v349 = vld [vmem:[%s291 + $0xb8] sm:$0xff]
        %v350 = vld [vmem:[%s291 + $0xc0] sm:$0xff]
        %v351 = vld [vmem:[%s291 + $0xc8] sm:$0xff]
        %v352 = vld [vmem:[%s291 + $0xd0] sm:$0xff]
        %v353 = vld [vmem:[%s291 + $0xd8] sm:$0xff]
        %v354 = vld [vmem:[%s291 + $0xe0] sm:$0xff]
        %v355 = vld [vmem:[%s291 + $0xe8] sm:$0xff]
        %v356 = vld [vmem:[%s291 + $0xf0] sm:$0xff]
        %v357 = vld [vmem:[%s291 + $0xf8] sm:$0xff]
        %v358 = vld [vmem:[%s291 + $0x100] sm:$0xff]
        %v359 = vld [vmem:[%s291 + $0x108] sm:$0xff]
        %v360 = vld [vmem:[%s291 + $0x110] sm:$0xff]
        %v361 = vld [vmem:[%s291 + $0x118] sm:$0xff]
        %v362 = vld [vmem:[%s291 + $0x120] sm:$0xff]
        %v363 = vld [vmem:[%s291 + $0x128] sm:$0xff]
        %v364 = vld [vmem:[%s291 + $0x130] sm:$0xff]
        %v365 = vld [vmem:[%s291 + $0x138] sm:$0xff]
        %v366 = vld [vmem:[%s291 + $0x140] sm:$0xff]
        %v367 = vld [vmem:[%s291 + $0x148] sm:$0xff]
        %v368 = vld [vmem:[%s291 + $0x150] sm:$0xff]
        %v369 = vld [vmem:[%s291 + $0x158] sm:$0xff]
        %v370 = vld [vmem:[%s291 + $0x160] sm:$0xff]
        %v371 = vld [vmem:[%s291 + $0x168] sm:$0xff]
        %v372 = vld [vmem:[%s291 + $0x170] sm:$0xff]
        %v373 = vld [vmem:[%s291 + $0x178] sm:$0xff]
        %v374 = vld [vmem:[%s291 + $0x180] sm:$0xff]
        %v375 = vld [vmem:[%s291 + $0x188] sm:$0xff]
        %v376 = vld [vmem:[%s291 + $0x190] sm:$0xff]
        %v377 = vld [vmem:[%s291 + $0x198] sm:$0xff]
        %v378 = vld [vmem:[%s291 + $0x1a0] sm:$0xff]
        %v379 = vld [vmem:[%s291 + $0x1a8] sm:$0xff]
        %v380 = vld [vmem:[%s291 + $0x1b0] sm:$0xff]
        %v381 = vld [vmem:[%s291 + $0x1b8] sm:$0xff]
        %v382 = vld [vmem:[%s291 + $0x1c0] sm:$0xff]
        %v383 = vld [vmem:[%s291 + $0x1c8] sm:$0xff]
        %v384 = vld [vmem:[%s291 + $0x1d0] sm:$0xff]
        %v385 = vld [vmem:[%s291 + $0x1d8] sm:$0xff]
        %v386 = vld [vmem:[%s291 + $0x1e0] sm:$0xff]
        %v387 = vld [vmem:[%s291 + $0x1e8] sm:$0xff]
        %v388 = vld [vmem:[%s291 + $0x1f0] sm:$0xff]
        %v389 = vld [vmem:[%s291 + $0x1f8] sm:$0xff]
        %v390 = vld [vmem:[%s291 + $0x200] sm:$0xff]
        %v391 = vld [vmem:[%s291 + $0x208] sm:$0xff]
        %v392 = vld [vmem:[%s291 + $0x210] sm:$0xff]
        %v393 = vld [vmem:[%s291 + $0x218] sm:$0xff]
        %v394 = vld [vmem:[%s291 + $0x220] sm:$0xff]
        %v395 = vld [vmem:[%s291 + $0x228] sm:$0xff]
        %v396 = vld [vmem:[%s291 + $0x230] sm:$0xff]
        %v397 = vld [vmem:[%s291 + $0x238] sm:$0xff]
        %v398 = vld [vmem:[%s291 + $0x240] sm:$0xff]
        %v399 = vld [vmem:[%s291 + $0x248] sm:$0xff]
        %v400 = vld [vmem:[%s291 + $0x250] sm:$0xff]
        %v401 = vld [vmem:[%s291 + $0x258] sm:$0xff]
        %v402 = vld [vmem:[%s291 + $0x260] sm:$0xff]
        %v403 = vld [vmem:[%s291 + $0x268] sm:$0xff]
        %v404 = vld [vmem:[%s291 + $0x270] sm:$0xff]
        %v405 = vld [vmem:[%s291 + $0x278] sm:$0xff]
        %v406 = vld [vmem:[%s291 + $0x280] sm:$0xff]
        %v407 = vld [vmem:[%s291 + $0x288] sm:$0xff]
        %v408 = vld [vmem:[%s291 + $0x290] sm:$0xff]
        %v409 = vld [vmem:[%s291 + $0x298] sm:$0xff]
        %v410 = vld [vmem:[%s291 + $0x2a0] sm:$0xff]
        %v411 = vld [vmem:[%s291 + $0x2a8] sm:$0xff]
        %v412 = vld [vmem:[%s291 + $0x2b0] sm:$0xff]
        %v413 = vld [vmem:[%s291 + $0x2b8] sm:$0xff]
        %v414 = vld [vmem:[%s291 + $0x2c0] sm:$0xff]
        %v415 = vld [vmem:[%s291 + $0x2c8] sm:$0xff]
        %v416 = vld [vmem:[%s291 + $0x2d0] sm:$0xff]
        %v417 = vld [vmem:[%s291 + $0x2d8] sm:$0xff]
        %v418 = vld [vmem:[%s291 + $0x2e0] sm:$0xff]
        %v419 = vld [vmem:[%s291 + $0x2e8] sm:$0xff]
        %v420 = vld [vmem:[%s291 + $0x2f0] sm:$0xff]
        %v421 = vld [vmem:[%s291 + $0x2f8] sm:$0xff]
        %v422 = vld [vmem:[%s291 + $0x300] sm:$0xff]
        %v423 = vld [vmem:[%s291 + $0x308] sm:$0xff]
        %v424 = vld [vmem:[%s291 + $0x310] sm:$0xff]
        %v425 = vld [vmem:[%s291 + $0x318] sm:$0xff]
        %v426 = vld [vmem:[%s291 + $0x320] sm:$0xff]
        %v427 = vld [vmem:[%s291 + $0x328] sm:$0xff]
        %v428 = vld [vmem:[%s291 + $0x330] sm:$0xff]
        %v429 = vld [vmem:[%s291 + $0x338] sm:$0xff]
        %v430 = vld [vmem:[%s291 + $0x340] sm:$0xff]
        %v431 = vld [vmem:[%s291 + $0x348] sm:$0xff]
        %v432 = vld [vmem:[%s291 + $0x350] sm:$0xff]
        %v433 = vld [vmem:[%s291 + $0x358] sm:$0xff]
        %v434 = vld [vmem:[%s291 + $0x360] sm:$0xff]
        %v435 = vld [vmem:[%s291 + $0x368] sm:$0xff]
        %v436 = vld [vmem:[%s291 + $0x370] sm:$0xff]
        %v437 = vld [vmem:[%s291 + $0x378] sm:$0xff]
        %v438 = vld [vmem:[%s291 + $0x380] sm:$0xff]
        %v439 = vld [vmem:[%s291 + $0x388] sm:$0xff]
        %v440 = vld [vmem:[%s291 + $0x390] sm:$0xff]
        %v441 = vld [vmem:[%s291 + $0x398] sm:$0xff]
        %v442 = vld [vmem:[%s291 + $0x3a0] sm:$0xff]
        %v443 = vld [vmem:[%s291 + $0x3a8] sm:$0xff]
        %v444 = vld [vmem:[%s291 + $0x3b0] sm:$0xff]
        %v445 = vld [vmem:[%s291 + $0x3b8] sm:$0xff]
        %v446 = vld [vmem:[%s291 + $0x3c0] sm:$0xff]
        %v447 = vld [vmem:[%s291 + $0x3c8] sm:$0xff]
        %v448 = vld [vmem:[%s291 + $0x3d0] sm:$0xff]
        %v449 = vld [vmem:[%s291 + $0x3d8] sm:$0xff]
        %v450 = vld [vmem:[%s291 + $0x3e0] sm:$0xff]
        %v451 = vld [vmem:[%s291 + $0x3e8] sm:$0xff]
        %v452 = vld [vmem:[%s291 + $0x3f0] sm:$0xff]
        %v453 = vld [vmem:[%s291 + $0x3f8] sm:$0xff]
        %v454 = vld [vmem:[%s1] sm:$0xff]
        %v455 = vld [vmem:[%s1 + $0x8] sm:$0xff]
        %v456 = vld [vmem:[%s1 + $0x10] sm:$0xff]
        %v457 = vld [vmem:[%s1 + $0x18] sm:$0xff]
        %v458 = vld [vmem:[%s1 + $0x20] sm:$0xff]
        %v459 = vld [vmem:[%s1 + $0x28] sm:$0xff]
        %v460 = vld [vmem:[%s1 + $0x30] sm:$0xff]
        %v461 = vld [vmem:[%s1 + $0x38] sm:$0xff]
        %v462 = vld [vmem:[%s1 + $0x40] sm:$0xff]
        %v463 = vld [vmem:[%s1 + $0x48] sm:$0xff]
        %v464 = vld [vmem:[%s1 + $0x50] sm:$0xff]
        %v465 = vld [vmem:[%s1 + $0x58] sm:$0xff]
        %v466 = vld [vmem:[%s1 + $0x60] sm:$0xff]
        %v467 = vld [vmem:[%s1 + $0x68] sm:$0xff]
        %v468 = vld [vmem:[%s1 + $0x70] sm:$0xff]
        %v469 = vld [vmem:[%s1 + $0x78] sm:$0xff]
        %v470 = vld [vmem:[%s2] sm:$0x1]
        %v472 = vlaneseq
        %v473 = vshrl.u32 %v472, 7
        %v474 = vsub.s32 0, %v473
        %v475 = vrot.slane %v470, %v474
        %477 = vmatprep.subr.mxu0 0.0
        %478 = vmatpush1.msra.mxu0 %v469
        %479 = vmatprep.subr.mxu0 0.0
        %480 = vmatpush1.msra.mxu0 %v468
        %481 = vmatprep.subr.mxu0 0.0
        %482 = vmatpush1.msra.mxu0 %v467
        %483 = vmatprep.subr.mxu0 0.0
        %484 = vmatpush1.msra.mxu0 %v466
        %485 = vmatprep.subr.mxu0 0.0
        %486 = vmatpush1.msra.mxu0 %v465
        %487 = vmatprep.subr.mxu0 0.0
        %488 = vmatpush1.msra.mxu0 %v464
        %489 = vmatprep.subr.mxu0 0.0
        %490 = vmatpush1.msra.mxu0 %v463
        %491 = vmatprep.subr.mxu0 0.0
        %492 = vmatpush1.msra.mxu0 %v462
        %493 = vmatprep.subr.mxu0 0.0
        %494 = vmatpush1.msra.mxu0 %v461
        %495 = vmatprep.subr.mxu0 0.0
        %496 = vmatpush1.msra.mxu0 %v460
        %497 = vmatprep.subr.mxu0 0.0
        %498 = vmatpush1.msra.mxu0 %v459
        %499 = vmatprep.subr.mxu0 0.0
        %500 = vmatpush1.msra.mxu0 %v458
        %501 = vmatprep.subr.mxu0 0.0
        %502 = vmatpush1.msra.mxu0 %v457
        %503 = vmatprep.subr.mxu0 0.0
        %504 = vmatpush1.msra.mxu0 %v456
        %505 = vmatprep.subr.mxu0 0.0
        %506 = vmatpush1.msra.mxu0 %v455
        %507 = vmatprep.subr.mxu0 0.0
        %508 = vmatpush1.msra.mxu0 %v454
        %509 = vmatprep.subr.mxu0 0.0
        %510 = vmatpush2.msra.mxu0 0.0
        %511 = vmatprep.subr.mxu0 0.0
        %512 = vmatpush2.msra.mxu0 0.0
        %513 = vmatprep.subr.mxu0 0.0
        %514 = vmatpush2.msra.mxu0 0.0
        %515 = vmatprep.subr.mxu0 0.0
        %516 = vmatpush2.msra.mxu0 0.0
        %517 = vmatprep.subr.mxu0 0.0
        %518 = vmatpush2.msra.mxu0 0.0
        %519 = vmatprep.subr.mxu0 0.0
        %520 = vmatpush2.msra.mxu0 0.0
        %521 = vmatprep.subr.mxu0 0.0
        %522 = vmatpush2.msra.mxu0 0.0
        %523 = vmatprep.subr.mxu0 0.0
        %524 = vmatpush2.msra.mxu0 0.0
        %525 = vmatprep.subr.mxu0 0.0
        %526 = vmatpush2.msra.mxu0 0.0
        %527 = vmatprep.subr.mxu0 0.0
        %528 = vmatpush2.msra.mxu0 0.0
        %529 = vmatprep.subr.mxu0 0.0
        %530 = vmatpush2.msra.mxu0 0.0
        %531 = vmatprep.subr.mxu0 0.0
        %532 = vmatpush2.msra.mxu0 0.0
        %533 = vmatprep.subr.mxu0 0.0
        %534 = vmatpush2.msra.mxu0 0.0
        %535 = vmatprep.subr.mxu0 0.0
        %536 = vmatpush2.msra.mxu0 0.0
        %537 = vmatprep.subr.mxu0 0.0
        %538 = vmatpush2.msra.mxu0 0.0
        %539 = vmatprep.subr.mxu0 0.0
        %540 = vmatpush2.msra.mxu0 0.0
        %541 = vmatprep.mubr.f32.mxu0 0.0
        %542 = vmatmul.mubr.f32.gmra.mxu0 %v326
        %v543 = vpop.f32.mrf.mxu0
        %v544 = vadd.f32 %v475, %v543
        %v545 = vpop.f32.mrf.mxu0
        %546 = vmatprep.mubr.f32.mxu0 0.0
        %547 = vmatmul.mubr.f32.gmra.mxu0 %v327
        %v548 = vpop.f32.mrf.mxu0
        %v549 = vadd.f32 %v475, %v548
        %v550 = vpop.f32.mrf.mxu0
        %551 = vmatprep.mubr.f32.mxu0 0.0
        %552 = vmatmul.mubr.f32.gmra.mxu0 %v328
        %v553 = vpop.f32.mrf.mxu0
        %v554 = vadd.f32 %v475, %v553
        %v555 = vpop.f32.mrf.mxu0
        %556 = vmatprep.mubr.f32.mxu0 0.0
        %557 = vmatmul.mubr.f32.gmra.mxu0 %v329
        %v558 = vpop.f32.mrf.mxu0
        %v559 = vadd.f32 %v475, %v558
        %v560 = vpop.f32.mrf.mxu0
        %561 = vmatprep.mubr.f32.mxu0 0.0
        %562 = vmatmul.mubr.f32.gmra.mxu0 %v330
        %v563 = vpop.f32.mrf.mxu0
        %v564 = vadd.f32 %v475, %v563
        %v565 = vpop.f32.mrf.mxu0
        %566 = vmatprep.mubr.f32.mxu0 0.0
        %567 = vmatmul.mubr.f32.gmra.mxu0 %v331
        %v568 = vpop.f32.mrf.mxu0
        %v569 = vadd.f32 %v475, %v568
        %v570 = vpop.f32.mrf.mxu0
        %571 = vmatprep.mubr.f32.mxu0 0.0
        %572 = vmatmul.mubr.f32.gmra.mxu0 %v332
        %v573 = vpop.f32.mrf.mxu0
        %v574 = vadd.f32 %v475, %v573
        %v575 = vpop.f32.mrf.mxu0
        %576 = vmatprep.mubr.f32.mxu0 0.0
        %577 = vmatmul.mubr.f32.gmra.mxu0 %v333
        %v578 = vpop.f32.mrf.mxu0
        %v579 = vadd.f32 %v475, %v578
        %v580 = vpop.f32.mrf.mxu0
        %581 = vmatprep.mubr.f32.mxu0 0.0
        %582 = vmatmul.mubr.f32.gmra.mxu0 %v334
        %v583 = vpop.f32.mrf.mxu0
        %v584 = vadd.f32 %v475, %v583
        %v585 = vpop.f32.mrf.mxu0
        %586 = vmatprep.mubr.f32.mxu0 0.0
        %587 = vmatmul.mubr.f32.gmra.mxu0 %v335
        %v588 = vpop.f32.mrf.mxu0
        %v589 = vadd.f32 %v475, %v588
        %v590 = vpop.f32.mrf.mxu0
        %591 = vmatprep.mubr.f32.mxu0 0.0
        %592 = vmatmul.mubr.f32.gmra.mxu0 %v336
        %v593 = vpop.f32.mrf.mxu0
        %v594 = vadd.f32 %v475, %v593
        %v595 = vpop.f32.mrf.mxu0
        %596 = vmatprep.mubr.f32.mxu0 0.0
        %597 = vmatmul.mubr.f32.gmra.mxu0 %v337
        %v598 = vpop.f32.mrf.mxu0
        %v599 = vadd.f32 %v475, %v598
        %v600 = vpop.f32.mrf.mxu0
        %601 = vmatprep.mubr.f32.mxu0 0.0
        %602 = vmatmul.mubr.f32.gmra.mxu0 %v338
        %v603 = vpop.f32.mrf.mxu0
        %v604 = vadd.f32 %v475, %v603
        %v605 = vpop.f32.mrf.mxu0
        %606 = vmatprep.mubr.f32.mxu0 0.0
        %607 = vmatmul.mubr.f32.gmra.mxu0 %v339
        %v608 = vpop.f32.mrf.mxu0
        %v609 = vadd.f32 %v475, %v608
        %v610 = vpop.f32.mrf.mxu0
        %611 = vmatprep.mubr.f32.mxu0 0.0
        %612 = vmatmul.mubr.f32.gmra.mxu0 %v340
        %v613 = vpop.f32.mrf.mxu0
        %v614 = vadd.f32 %v475, %v613
        %v615 = vpop.f32.mrf.mxu0
        %616 = vmatprep.mubr.f32.mxu0 0.0
        %617 = vmatmul.mubr.f32.gmra.mxu0 %v341
        %v618 = vpop.f32.mrf.mxu0
        %v619 = vadd.f32 %v475, %v618
        %v620 = vpop.f32.mrf.mxu0
        %621 = vmatprep.mubr.f32.mxu0 0.0
        %622 = vmatmul.mubr.f32.gmra.mxu0 %v342
        %v623 = vpop.f32.mrf.mxu0
        %v624 = vadd.f32 %v475, %v623
        %v625 = vpop.f32.mrf.mxu0
        %626 = vmatprep.mubr.f32.mxu0 0.0
        %627 = vmatmul.mubr.f32.gmra.mxu0 %v343
        %v628 = vpop.f32.mrf.mxu0
        %v629 = vadd.f32 %v475, %v628
        %v630 = vpop.f32.mrf.mxu0
        %631 = vmatprep.mubr.f32.mxu0 0.0
        %632 = vmatmul.mubr.f32.gmra.mxu0 %v344
        %v633 = vpop.f32.mrf.mxu0
        %v634 = vadd.f32 %v475, %v633
        %v635 = vpop.f32.mrf.mxu0
        %636 = vmatprep.mubr.f32.mxu0 0.0
        %637 = vmatmul.mubr.f32.gmra.mxu0 %v345
        %v638 = vpop.f32.mrf.mxu0
        %v639 = vadd.f32 %v475, %v638
        %v640 = vpop.f32.mrf.mxu0
        %641 = vmatprep.mubr.f32.mxu0 0.0
        %642 = vmatmul.mubr.f32.gmra.mxu0 %v346
        %v643 = vpop.f32.mrf.mxu0
        %v644 = vadd.f32 %v475, %v643
        %v645 = vpop.f32.mrf.mxu0
        %646 = vmatprep.mubr.f32.mxu0 0.0
        %647 = vmatmul.mubr.f32.gmra.mxu0 %v347
        %v648 = vpop.f32.mrf.mxu0
        %v649 = vadd.f32 %v475, %v648
        %v650 = vpop.f32.mrf.mxu0
        %651 = vmatprep.mubr.f32.mxu0 0.0
        %652 = vmatmul.mubr.f32.gmra.mxu0 %v348
        %v653 = vpop.f32.mrf.mxu0
        %v654 = vadd.f32 %v475, %v653
        %v655 = vpop.f32.mrf.mxu0
        %656 = vmatprep.mubr.f32.mxu0 0.0
        %657 = vmatmul.mubr.f32.gmra.mxu0 %v349
        %v658 = vpop.f32.mrf.mxu0
        %v659 = vadd.f32 %v475, %v658
        %v660 = vpop.f32.mrf.mxu0
        %661 = vmatprep.mubr.f32.mxu0 0.0
        %662 = vmatmul.mubr.f32.gmra.mxu0 %v350
        %v663 = vpop.f32.mrf.mxu0
        %v664 = vadd.f32 %v475, %v663
        %v665 = vpop.f32.mrf.mxu0
        %666 = vmatprep.mubr.f32.mxu0 0.0
        %667 = vmatmul.mubr.f32.gmra.mxu0 %v351
        %v668 = vpop.f32.mrf.mxu0
        %v669 = vadd.f32 %v475, %v668
        %v670 = vpop.f32.mrf.mxu0
        %671 = vmatprep.mubr.f32.mxu0 0.0
        %672 = vmatmul.mubr.f32.gmra.mxu0 %v352
        %v673 = vpop.f32.mrf.mxu0
        %v674 = vadd.f32 %v475, %v673
        %v675 = vpop.f32.mrf.mxu0
        %676 = vmatprep.mubr.f32.mxu0 0.0
        %677 = vmatmul.mubr.f32.gmra.mxu0 %v353
        %v678 = vpop.f32.mrf.mxu0
        %v679 = vadd.f32 %v475, %v678
        %v680 = vpop.f32.mrf.mxu0
        %681 = vmatprep.mubr.f32.mxu0 0.0
        %682 = vmatmul.mubr.f32.gmra.mxu0 %v354
        %v683 = vpop.f32.mrf.mxu0
        %v684 = vadd.f32 %v475, %v683
        %v685 = vpop.f32.mrf.mxu0
        %686 = vmatprep.mubr.f32.mxu0 0.0
        %687 = vmatmul.mubr.f32.gmra.mxu0 %v355
        %v688 = vpop.f32.mrf.mxu0
        %v689 = vadd.f32 %v475, %v688
        %v690 = vpop.f32.mrf.mxu0
        %691 = vmatprep.mubr.f32.mxu0 0.0
        %692 = vmatmul.mubr.f32.gmra.mxu0 %v356
        %v693 = vpop.f32.mrf.mxu0
        %v694 = vadd.f32 %v475, %v693
        %v695 = vpop.f32.mrf.mxu0
        %696 = vmatprep.mubr.f32.mxu0 0.0
        %697 = vmatmul.mubr.f32.gmra.mxu0 %v357
        %v698 = vpop.f32.mrf.mxu0
        %v699 = vadd.f32 %v475, %v698
        %v700 = vpop.f32.mrf.mxu0
        %701 = vmatprep.mubr.f32.mxu0 0.0
        %702 = vmatmul.mubr.f32.gmra.mxu0 %v358
        %v703 = vpop.f32.mrf.mxu0
        %v704 = vadd.f32 %v475, %v703
        %v705 = vpop.f32.mrf.mxu0
        %706 = vmatprep.mubr.f32.mxu0 0.0
        %707 = vmatmul.mubr.f32.gmra.mxu0 %v359
        %v708 = vpop.f32.mrf.mxu0
        %v709 = vadd.f32 %v475, %v708
        %v710 = vpop.f32.mrf.mxu0
        %711 = vmatprep.mubr.f32.mxu0 0.0
        %712 = vmatmul.mubr.f32.gmra.mxu0 %v360
        %v713 = vpop.f32.mrf.mxu0
        %v714 = vadd.f32 %v475, %v713
        %v715 = vpop.f32.mrf.mxu0
        %716 = vmatprep.mubr.f32.mxu0 0.0
        %717 = vmatmul.mubr.f32.gmra.mxu0 %v361
        %v718 = vpop.f32.mrf.mxu0
        %v719 = vadd.f32 %v475, %v718
        %v720 = vpop.f32.mrf.mxu0
        %721 = vmatprep.mubr.f32.mxu0 0.0
        %722 = vmatmul.mubr.f32.gmra.mxu0 %v362
        %v723 = vpop.f32.mrf.mxu0
        %v724 = vadd.f32 %v475, %v723
        %v725 = vpop.f32.mrf.mxu0
        %726 = vmatprep.mubr.f32.mxu0 0.0
        %727 = vmatmul.mubr.f32.gmra.mxu0 %v363
        %v728 = vpop.f32.mrf.mxu0
        %v729 = vadd.f32 %v475, %v728
        %v730 = vpop.f32.mrf.mxu0
        %731 = vmatprep.mubr.f32.mxu0 0.0
        %732 = vmatmul.mubr.f32.gmra.mxu0 %v364
        %v733 = vpop.f32.mrf.mxu0
        %v734 = vadd.f32 %v475, %v733
        %v735 = vpop.f32.mrf.mxu0
        %736 = vmatprep.mubr.f32.mxu0 0.0
        %737 = vmatmul.mubr.f32.gmra.mxu0 %v365
        %v738 = vpop.f32.mrf.mxu0
        %v739 = vadd.f32 %v475, %v738
        %v740 = vpop.f32.mrf.mxu0
        %741 = vmatprep.mubr.f32.mxu0 0.0
        %742 = vmatmul.mubr.f32.gmra.mxu0 %v366
        %v743 = vpop.f32.mrf.mxu0
        %v744 = vadd.f32 %v475, %v743
        %v745 = vpop.f32.mrf.mxu0
        %746 = vmatprep.mubr.f32.mxu0 0.0
        %747 = vmatmul.mubr.f32.gmra.mxu0 %v367
        %v748 = vpop.f32.mrf.mxu0
        %v749 = vadd.f32 %v475, %v748
        %v750 = vpop.f32.mrf.mxu0
        %751 = vmatprep.mubr.f32.mxu0 0.0
        %752 = vmatmul.mubr.f32.gmra.mxu0 %v368
        %v753 = vpop.f32.mrf.mxu0
        %v754 = vadd.f32 %v475, %v753
        %v755 = vpop.f32.mrf.mxu0
        %756 = vmatprep.mubr.f32.mxu0 0.0
        %757 = vmatmul.mubr.f32.gmra.mxu0 %v369
        %v758 = vpop.f32.mrf.mxu0
        %v759 = vadd.f32 %v475, %v758
        %v760 = vpop.f32.mrf.mxu0
        %761 = vmatprep.mubr.f32.mxu0 0.0
        %762 = vmatmul.mubr.f32.gmra.mxu0 %v370
        %v763 = vpop.f32.mrf.mxu0
        %v764 = vadd.f32 %v475, %v763
        %v765 = vpop.f32.mrf.mxu0
        %766 = vmatprep.mubr.f32.mxu0 0.0
        %767 = vmatmul.mubr.f32.gmra.mxu0 %v371
        %v768 = vpop.f32.mrf.mxu0
        %v769 = vadd.f32 %v475, %v768
        %v770 = vpop.f32.mrf.mxu0
        %771 = vmatprep.mubr.f32.mxu0 0.0
        %772 = vmatmul.mubr.f32.gmra.mxu0 %v372
        %v773 = vpop.f32.mrf.mxu0
        %v774 = vadd.f32 %v475, %v773
        %v775 = vpop.f32.mrf.mxu0
        %776 = vmatprep.mubr.f32.mxu0 0.0
        %777 = vmatmul.mubr.f32.gmra.mxu0 %v373
        %v778 = vpop.f32.mrf.mxu0
        %v779 = vadd.f32 %v475, %v778
        %v780 = vpop.f32.mrf.mxu0
        %781 = vmatprep.mubr.f32.mxu0 0.0
        %782 = vmatmul.mubr.f32.gmra.mxu0 %v374
        %v783 = vpop.f32.mrf.mxu0
        %v784 = vadd.f32 %v475, %v783
        %v785 = vpop.f32.mrf.mxu0
        %786 = vmatprep.mubr.f32.mxu0 0.0
        %787 = vmatmul.mubr.f32.gmra.mxu0 %v375
        %v788 = vpop.f32.mrf.mxu0
        %v789 = vadd.f32 %v475, %v788
        %v790 = vpop.f32.mrf.mxu0
        %791 = vmatprep.mubr.f32.mxu0 0.0
        %792 = vmatmul.mubr.f32.gmra.mxu0 %v376
        %v793 = vpop.f32.mrf.mxu0
        %v794 = vadd.f32 %v475, %v793
        %v795 = vpop.f32.mrf.mxu0
        %796 = vmatprep.mubr.f32.mxu0 0.0
        %797 = vmatmul.mubr.f32.gmra.mxu0 %v377
        %v798 = vpop.f32.mrf.mxu0
        %v799 = vadd.f32 %v475, %v798
        %v800 = vpop.f32.mrf.mxu0
        %801 = vmatprep.mubr.f32.mxu0 0.0
        %802 = vmatmul.mubr.f32.gmra.mxu0 %v378
        %v803 = vpop.f32.mrf.mxu0
        %v804 = vadd.f32 %v475, %v803
        %v805 = vpop.f32.mrf.mxu0
        %806 = vmatprep.mubr.f32.mxu0 0.0
        %807 = vmatmul.mubr.f32.gmra.mxu0 %v379
        %v808 = vpop.f32.mrf.mxu0
        %v809 = vadd.f32 %v475, %v808
        %v810 = vpop.f32.mrf.mxu0
        %811 = vmatprep.mubr.f32.mxu0 0.0
        %812 = vmatmul.mubr.f32.gmra.mxu0 %v380
        %v813 = vpop.f32.mrf.mxu0
        %v814 = vadd.f32 %v475, %v813
        %v815 = vpop.f32.mrf.mxu0
        %816 = vmatprep.mubr.f32.mxu0 0.0
        %817 = vmatmul.mubr.f32.gmra.mxu0 %v381
        %v818 = vpop.f32.mrf.mxu0
        %v819 = vadd.f32 %v475, %v818
        %v820 = vpop.f32.mrf.mxu0
        %821 = vmatprep.mubr.f32.mxu0 0.0
        %822 = vmatmul.mubr.f32.gmra.mxu0 %v382
        %v823 = vpop.f32.mrf.mxu0
        %v824 = vadd.f32 %v475, %v823
        %v825 = vpop.f32.mrf.mxu0
        %826 = vmatprep.mubr.f32.mxu0 0.0
        %827 = vmatmul.mubr.f32.gmra.mxu0 %v383
        %v828 = vpop.f32.mrf.mxu0
        %v829 = vadd.f32 %v475, %v828
        %v830 = vpop.f32.mrf.mxu0
        %831 = vmatprep.mubr.f32.mxu0 0.0
        %832 = vmatmul.mubr.f32.gmra.mxu0 %v384
        %v833 = vpop.f32.mrf.mxu0
        %v834 = vadd.f32 %v475, %v833
        %v835 = vpop.f32.mrf.mxu0
        %836 = vmatprep.mubr.f32.mxu0 0.0
        %837 = vmatmul.mubr.f32.gmra.mxu0 %v385
        %v838 = vpop.f32.mrf.mxu0
        %v839 = vadd.f32 %v475, %v838
        %v840 = vpop.f32.mrf.mxu0
        %841 = vmatprep.mubr.f32.mxu0 0.0
        %842 = vmatmul.mubr.f32.gmra.mxu0 %v386
        %v843 = vpop.f32.mrf.mxu0
        %v844 = vadd.f32 %v475, %v843
        %v845 = vpop.f32.mrf.mxu0
        %846 = vmatprep.mubr.f32.mxu0 0.0
        %847 = vmatmul.mubr.f32.gmra.mxu0 %v387
        %v848 = vpop.f32.mrf.mxu0
        %v849 = vadd.f32 %v475, %v848
        %v850 = vpop.f32.mrf.mxu0
        %851 = vmatprep.mubr.f32.mxu0 0.0
        %852 = vmatmul.mubr.f32.gmra.mxu0 %v388
        %v853 = vpop.f32.mrf.mxu0
        %v854 = vadd.f32 %v475, %v853
        %v855 = vpop.f32.mrf.mxu0
        %856 = vmatprep.mubr.f32.mxu0 0.0
        %857 = vmatmul.mubr.f32.gmra.mxu0 %v389
        %v858 = vpop.f32.mrf.mxu0
        %v859 = vadd.f32 %v475, %v858
        %v860 = vpop.f32.mrf.mxu0
        %861 = vmatprep.mubr.f32.mxu0 0.0
        %862 = vmatmul.mubr.f32.gmra.mxu0 %v390
        %v863 = vpop.f32.mrf.mxu0
        %v864 = vadd.f32 %v475, %v863
        %v865 = vpop.f32.mrf.mxu0
        %866 = vmatprep.mubr.f32.mxu0 0.0
        %867 = vmatmul.mubr.f32.gmra.mxu0 %v391
        %v868 = vpop.f32.mrf.mxu0
        %v869 = vadd.f32 %v475, %v868
        %v870 = vpop.f32.mrf.mxu0
        %871 = vmatprep.mubr.f32.mxu0 0.0
        %872 = vmatmul.mubr.f32.gmra.mxu0 %v392
        %v873 = vpop.f32.mrf.mxu0
        %v874 = vadd.f32 %v475, %v873
        %v875 = vpop.f32.mrf.mxu0
        %876 = vmatprep.mubr.f32.mxu0 0.0
        %877 = vmatmul.mubr.f32.gmra.mxu0 %v393
        %v878 = vpop.f32.mrf.mxu0
        %v879 = vadd.f32 %v475, %v878
        %v880 = vpop.f32.mrf.mxu0
        %881 = vmatprep.mubr.f32.mxu0 0.0
        %882 = vmatmul.mubr.f32.gmra.mxu0 %v394
        %v883 = vpop.f32.mrf.mxu0
        %v884 = vadd.f32 %v475, %v883
        %v885 = vpop.f32.mrf.mxu0
        %886 = vmatprep.mubr.f32.mxu0 0.0
        %887 = vmatmul.mubr.f32.gmra.mxu0 %v395
        %v888 = vpop.f32.mrf.mxu0
        %v889 = vadd.f32 %v475, %v888
        %v890 = vpop.f32.mrf.mxu0
        %891 = vmatprep.mubr.f32.mxu0 0.0
        %892 = vmatmul.mubr.f32.gmra.mxu0 %v396
        %v893 = vpop.f32.mrf.mxu0
        %v894 = vadd.f32 %v475, %v893
        %v895 = vpop.f32.mrf.mxu0
        %896 = vmatprep.mubr.f32.mxu0 0.0
        %897 = vmatmul.mubr.f32.gmra.mxu0 %v397
        %v898 = vpop.f32.mrf.mxu0
        %v899 = vadd.f32 %v475, %v898
        %v900 = vpop.f32.mrf.mxu0
        %901 = vmatprep.mubr.f32.mxu0 0.0
        %902 = vmatmul.mubr.f32.gmra.mxu0 %v398
        %v903 = vpop.f32.mrf.mxu0
        %v904 = vadd.f32 %v475, %v903
        %v905 = vpop.f32.mrf.mxu0
        %906 = vmatprep.mubr.f32.mxu0 0.0
        %907 = vmatmul.mubr.f32.gmra.mxu0 %v399
        %v908 = vpop.f32.mrf.mxu0
        %v909 = vadd.f32 %v475, %v908
        %v910 = vpop.f32.mrf.mxu0
        %911 = vmatprep.mubr.f32.mxu0 0.0
        %912 = vmatmul.mubr.f32.gmra.mxu0 %v400
        %v913 = vpop.f32.mrf.mxu0
        %v914 = vadd.f32 %v475, %v913
        %v915 = vpop.f32.mrf.mxu0
        %916 = vmatprep.mubr.f32.mxu0 0.0
        %917 = vmatmul.mubr.f32.gmra.mxu0 %v401
        %v918 = vpop.f32.mrf.mxu0
        %v919 = vadd.f32 %v475, %v918
        %v920 = vpop.f32.mrf.mxu0
        %921 = vmatprep.mubr.f32.mxu0 0.0
        %922 = vmatmul.mubr.f32.gmra.mxu0 %v402
        %v923 = vpop.f32.mrf.mxu0
        %v924 = vadd.f32 %v475, %v923
        %v925 = vpop.f32.mrf.mxu0
        %926 = vmatprep.mubr.f32.mxu0 0.0
        %927 = vmatmul.mubr.f32.gmra.mxu0 %v403
        %v928 = vpop.f32.mrf.mxu0
        %v929 = vadd.f32 %v475, %v928
        %v930 = vpop.f32.mrf.mxu0
        %931 = vmatprep.mubr.f32.mxu0 0.0
        %932 = vmatmul.mubr.f32.gmra.mxu0 %v404
        %v933 = vpop.f32.mrf.mxu0
        %v934 = vadd.f32 %v475, %v933
        %v935 = vpop.f32.mrf.mxu0
        %936 = vmatprep.mubr.f32.mxu0 0.0
        %937 = vmatmul.mubr.f32.gmra.mxu0 %v405
        %v938 = vpop.f32.mrf.mxu0
        %v939 = vadd.f32 %v475, %v938
        %v940 = vpop.f32.mrf.mxu0
        %941 = vmatprep.mubr.f32.mxu0 0.0
        %942 = vmatmul.mubr.f32.gmra.mxu0 %v406
        %v943 = vpop.f32.mrf.mxu0
        %v944 = vadd.f32 %v475, %v943
        %v945 = vpop.f32.mrf.mxu0
        %946 = vmatprep.mubr.f32.mxu0 0.0
        %947 = vmatmul.mubr.f32.gmra.mxu0 %v407
        %v948 = vpop.f32.mrf.mxu0
        %v949 = vadd.f32 %v475, %v948
        %v950 = vpop.f32.mrf.mxu0
        %951 = vmatprep.mubr.f32.mxu0 0.0
        %952 = vmatmul.mubr.f32.gmra.mxu0 %v408
        %v953 = vpop.f32.mrf.mxu0
        %v954 = vadd.f32 %v475, %v953
        %v955 = vpop.f32.mrf.mxu0
        %956 = vmatprep.mubr.f32.mxu0 0.0
        %957 = vmatmul.mubr.f32.gmra.mxu0 %v409
        %v958 = vpop.f32.mrf.mxu0
        %v959 = vadd.f32 %v475, %v958
        %v960 = vpop.f32.mrf.mxu0
        %961 = vmatprep.mubr.f32.mxu0 0.0
        %962 = vmatmul.mubr.f32.gmra.mxu0 %v410
        %v963 = vpop.f32.mrf.mxu0
        %v964 = vadd.f32 %v475, %v963
        %v965 = vpop.f32.mrf.mxu0
        %966 = vmatprep.mubr.f32.mxu0 0.0
        %967 = vmatmul.mubr.f32.gmra.mxu0 %v411
        %v968 = vpop.f32.mrf.mxu0
        %v969 = vadd.f32 %v475, %v968
        %v970 = vpop.f32.mrf.mxu0
        %971 = vmatprep.mubr.f32.mxu0 0.0
        %972 = vmatmul.mubr.f32.gmra.mxu0 %v412
        %v973 = vpop.f32.mrf.mxu0
        %v974 = vadd.f32 %v475, %v973
        %v975 = vpop.f32.mrf.mxu0
        %976 = vmatprep.mubr.f32.mxu0 0.0
        %977 = vmatmul.mubr.f32.gmra.mxu0 %v413
        %v978 = vpop.f32.mrf.mxu0
        %v979 = vadd.f32 %v475, %v978
        %v980 = vpop.f32.mrf.mxu0
        %981 = vmatprep.mubr.f32.mxu0 0.0
        %982 = vmatmul.mubr.f32.gmra.mxu0 %v414
        %v983 = vpop.f32.mrf.mxu0
        %v984 = vadd.f32 %v475, %v983
        %v985 = vpop.f32.mrf.mxu0
        %986 = vmatprep.mubr.f32.mxu0 0.0
        %987 = vmatmul.mubr.f32.gmra.mxu0 %v415
        %v988 = vpop.f32.mrf.mxu0
        %v989 = vadd.f32 %v475, %v988
        %v990 = vpop.f32.mrf.mxu0
        %991 = vmatprep.mubr.f32.mxu0 0.0
        %992 = vmatmul.mubr.f32.gmra.mxu0 %v416
        %v993 = vpop.f32.mrf.mxu0
        %v994 = vadd.f32 %v475, %v993
        %v995 = vpop.f32.mrf.mxu0
        %996 = vmatprep.mubr.f32.mxu0 0.0
        %997 = vmatmul.mubr.f32.gmra.mxu0 %v417
        %v998 = vpop.f32.mrf.mxu0
        %v999 = vadd.f32 %v475, %v998
        %v1000 = vpop.f32.mrf.mxu0
        %1001 = vmatprep.mubr.f32.mxu0 0.0
        %1002 = vmatmul.mubr.f32.gmra.mxu0 %v418
        %v1003 = vpop.f32.mrf.mxu0
        %v1004 = vadd.f32 %v475, %v1003
        %v1005 = vpop.f32.mrf.mxu0
        %1006 = vmatprep.mubr.f32.mxu0 0.0
        %1007 = vmatmul.mubr.f32.gmra.mxu0 %v419
        %v1008 = vpop.f32.mrf.mxu0
        %v1009 = vadd.f32 %v475, %v1008
        %v1010 = vpop.f32.mrf.mxu0
        %1011 = vmatprep.mubr.f32.mxu0 0.0
        %1012 = vmatmul.mubr.f32.gmra.mxu0 %v420
        %v1013 = vpop.f32.mrf.mxu0
        %v1014 = vadd.f32 %v475, %v1013
        %v1015 = vpop.f32.mrf.mxu0
        %1016 = vmatprep.mubr.f32.mxu0 0.0
        %1017 = vmatmul.mubr.f32.gmra.mxu0 %v421
        %v1018 = vpop.f32.mrf.mxu0
        %v1019 = vadd.f32 %v475, %v1018
        %v1020 = vpop.f32.mrf.mxu0
        %1021 = vmatprep.mubr.f32.mxu0 0.0
        %1022 = vmatmul.mubr.f32.gmra.mxu0 %v422
        %v1023 = vpop.f32.mrf.mxu0
        %v1024 = vadd.f32 %v475, %v1023
        %v1025 = vpop.f32.mrf.mxu0
        %1026 = vmatprep.mubr.f32.mxu0 0.0
        %1027 = vmatmul.mubr.f32.gmra.mxu0 %v423
        %v1028 = vpop.f32.mrf.mxu0
        %v1029 = vadd.f32 %v475, %v1028
        %v1030 = vpop.f32.mrf.mxu0
        %1031 = vmatprep.mubr.f32.mxu0 0.0
        %1032 = vmatmul.mubr.f32.gmra.mxu0 %v424
        %v1033 = vpop.f32.mrf.mxu0
        %v1034 = vadd.f32 %v475, %v1033
        %v1035 = vpop.f32.mrf.mxu0
        %1036 = vmatprep.mubr.f32.mxu0 0.0
        %1037 = vmatmul.mubr.f32.gmra.mxu0 %v425
        %v1038 = vpop.f32.mrf.mxu0
        %v1039 = vadd.f32 %v475, %v1038
        %v1040 = vpop.f32.mrf.mxu0
        %1041 = vmatprep.mubr.f32.mxu0 0.0
        %1042 = vmatmul.mubr.f32.gmra.mxu0 %v426
        %v1043 = vpop.f32.mrf.mxu0
        %v1044 = vadd.f32 %v475, %v1043
        %v1045 = vpop.f32.mrf.mxu0
        %1046 = vmatprep.mubr.f32.mxu0 0.0
        %1047 = vmatmul.mubr.f32.gmra.mxu0 %v427
        %v1048 = vpop.f32.mrf.mxu0
        %v1049 = vadd.f32 %v475, %v1048
        %v1050 = vpop.f32.mrf.mxu0
        %1051 = vmatprep.mubr.f32.mxu0 0.0
        %1052 = vmatmul.mubr.f32.gmra.mxu0 %v428
        %v1053 = vpop.f32.mrf.mxu0
        %v1054 = vadd.f32 %v475, %v1053
        %v1055 = vpop.f32.mrf.mxu0
        %1056 = vmatprep.mubr.f32.mxu0 0.0
        %1057 = vmatmul.mubr.f32.gmra.mxu0 %v429
        %v1058 = vpop.f32.mrf.mxu0
        %v1059 = vadd.f32 %v475, %v1058
        %v1060 = vpop.f32.mrf.mxu0
        %1061 = vmatprep.mubr.f32.mxu0 0.0
        %1062 = vmatmul.mubr.f32.gmra.mxu0 %v430
        %v1063 = vpop.f32.mrf.mxu0
        %v1064 = vadd.f32 %v475, %v1063
        %v1065 = vpop.f32.mrf.mxu0
        %1066 = vmatprep.mubr.f32.mxu0 0.0
        %1067 = vmatmul.mubr.f32.gmra.mxu0 %v431
        %v1068 = vpop.f32.mrf.mxu0
        %v1069 = vadd.f32 %v475, %v1068
        %v1070 = vpop.f32.mrf.mxu0
        %1071 = vmatprep.mubr.f32.mxu0 0.0
        %1072 = vmatmul.mubr.f32.gmra.mxu0 %v432
        %v1073 = vpop.f32.mrf.mxu0
        %v1074 = vadd.f32 %v475, %v1073
        %v1075 = vpop.f32.mrf.mxu0
        %1076 = vmatprep.mubr.f32.mxu0 0.0
        %1077 = vmatmul.mubr.f32.gmra.mxu0 %v433
        %v1078 = vpop.f32.mrf.mxu0
        %v1079 = vadd.f32 %v475, %v1078
        %v1080 = vpop.f32.mrf.mxu0
        %1081 = vmatprep.mubr.f32.mxu0 0.0
        %1082 = vmatmul.mubr.f32.gmra.mxu0 %v434
        %v1083 = vpop.f32.mrf.mxu0
        %v1084 = vadd.f32 %v475, %v1083
        %v1085 = vpop.f32.mrf.mxu0
        %1086 = vmatprep.mubr.f32.mxu0 0.0
        %1087 = vmatmul.mubr.f32.gmra.mxu0 %v435
        %v1088 = vpop.f32.mrf.mxu0
        %v1089 = vadd.f32 %v475, %v1088
        %v1090 = vpop.f32.mrf.mxu0
        %1091 = vmatprep.mubr.f32.mxu0 0.0
        %1092 = vmatmul.mubr.f32.gmra.mxu0 %v436
        %v1093 = vpop.f32.mrf.mxu0
        %v1094 = vadd.f32 %v475, %v1093
        %v1095 = vpop.f32.mrf.mxu0
        %1096 = vmatprep.mubr.f32.mxu0 0.0
        %1097 = vmatmul.mubr.f32.gmra.mxu0 %v437
        %v1098 = vpop.f32.mrf.mxu0
        %v1099 = vadd.f32 %v475, %v1098
        %v1100 = vpop.f32.mrf.mxu0
        %1101 = vmatprep.mubr.f32.mxu0 0.0
        %1102 = vmatmul.mubr.f32.gmra.mxu0 %v438
        %v1103 = vpop.f32.mrf.mxu0
        %v1104 = vadd.f32 %v475, %v1103
        %v1105 = vpop.f32.mrf.mxu0
        %1106 = vmatprep.mubr.f32.mxu0 0.0
        %1107 = vmatmul.mubr.f32.gmra.mxu0 %v439
        %v1108 = vpop.f32.mrf.mxu0
        %v1109 = vadd.f32 %v475, %v1108
        %v1110 = vpop.f32.mrf.mxu0
        %1111 = vmatprep.mubr.f32.mxu0 0.0
        %1112 = vmatmul.mubr.f32.gmra.mxu0 %v440
        %v1113 = vpop.f32.mrf.mxu0
        %v1114 = vadd.f32 %v475, %v1113
        %v1115 = vpop.f32.mrf.mxu0
        %1116 = vmatprep.mubr.f32.mxu0 0.0
        %1117 = vmatmul.mubr.f32.gmra.mxu0 %v441
        %v1118 = vpop.f32.mrf.mxu0
        %v1119 = vadd.f32 %v475, %v1118
        %v1120 = vpop.f32.mrf.mxu0
        %1121 = vmatprep.mubr.f32.mxu0 0.0
        %1122 = vmatmul.mubr.f32.gmra.mxu0 %v442
        %v1123 = vpop.f32.mrf.mxu0
        %v1124 = vadd.f32 %v475, %v1123
        %v1125 = vpop.f32.mrf.mxu0
        %1126 = vmatprep.mubr.f32.mxu0 0.0
        %1127 = vmatmul.mubr.f32.gmra.mxu0 %v443
        %v1128 = vpop.f32.mrf.mxu0
        %v1129 = vadd.f32 %v475, %v1128
        %v1130 = vpop.f32.mrf.mxu0
        %1131 = vmatprep.mubr.f32.mxu0 0.0
        %1132 = vmatmul.mubr.f32.gmra.mxu0 %v444
        %v1133 = vpop.f32.mrf.mxu0
        %v1134 = vadd.f32 %v475, %v1133
        %v1135 = vpop.f32.mrf.mxu0
        %1136 = vmatprep.mubr.f32.mxu0 0.0
        %1137 = vmatmul.mubr.f32.gmra.mxu0 %v445
        %v1138 = vpop.f32.mrf.mxu0
        %v1139 = vadd.f32 %v475, %v1138
        %v1140 = vpop.f32.mrf.mxu0
        %1141 = vmatprep.mubr.f32.mxu0 0.0
        %1142 = vmatmul.mubr.f32.gmra.mxu0 %v446
        %v1143 = vpop.f32.mrf.mxu0
        %v1144 = vadd.f32 %v475, %v1143
        %v1145 = vpop.f32.mrf.mxu0
        %1146 = vmatprep.mubr.f32.mxu0 0.0
        %1147 = vmatmul.mubr.f32.gmra.mxu0 %v447
        %v1148 = vpop.f32.mrf.mxu0
        %v1149 = vadd.f32 %v475, %v1148
        %v1150 = vpop.f32.mrf.mxu0
        %1151 = vmatprep.mubr.f32.mxu0 0.0
        %1152 = vmatmul.mubr.f32.gmra.mxu0 %v448
        %v1153 = vpop.f32.mrf.mxu0
        %v1154 = vadd.f32 %v475, %v1153
        %v1155 = vpop.f32.mrf.mxu0
        %1156 = vmatprep.mubr.f32.mxu0 0.0
        %1157 = vmatmul.mubr.f32.gmra.mxu0 %v449
        %v1158 = vpop.f32.mrf.mxu0
        %v1159 = vadd.f32 %v475, %v1158
        %v1160 = vpop.f32.mrf.mxu0
        %1161 = vmatprep.mubr.f32.mxu0 0.0
        %1162 = vmatmul.mubr.f32.gmra.mxu0 %v450
        %v1163 = vpop.f32.mrf.mxu0
        %v1164 = vadd.f32 %v475, %v1163
        %v1165 = vpop.f32.mrf.mxu0
        %1166 = vmatprep.mubr.f32.mxu0 0.0
        %1167 = vmatmul.mubr.f32.gmra.mxu0 %v451
        %v1168 = vpop.f32.mrf.mxu0
        %v1169 = vadd.f32 %v475, %v1168
        %v1170 = vpop.f32.mrf.mxu0
        %1171 = vmatprep.mubr.f32.mxu0 0.0
        %1172 = vmatmul.mubr.f32.gmra.mxu0 %v452
        %v1173 = vpop.f32.mrf.mxu0
        %v1174 = vadd.f32 %v475, %v1173
        %v1175 = vpop.f32.mrf.mxu0
        %1176 = vmatprep.mubr.f32.mxu0 0.0
        %1177 = vmatmul.mubr.f32.gmra.mxu0 %v453
        %v1178 = vpop.f32.mrf.mxu0
        %v1179 = vadd.f32 %v475, %v1178
        %v1180 = vpop.f32.mrf.mxu0
        %1181 = vdwg.mxu0
        %v1182 = vmax.f32 %v544, 0.0
        %v1183 = vmax.f32 %v549, 0.0
        %v1184 = vmax.f32 %v554, 0.0
        %v1185 = vmax.f32 %v559, 0.0
        %v1186 = vmax.f32 %v564, 0.0
        %v1187 = vmax.f32 %v569, 0.0
        %v1188 = vmax.f32 %v574, 0.0
        %v1189 = vmax.f32 %v579, 0.0
        %v1190 = vmax.f32 %v584, 0.0
        %v1191 = vmax.f32 %v589, 0.0
        %v1192 = vmax.f32 %v594, 0.0
        %v1193 = vmax.f32 %v599, 0.0
        %v1194 = vmax.f32 %v604, 0.0
        %v1195 = vmax.f32 %v609, 0.0
        %v1196 = vmax.f32 %v614, 0.0
        %v1197 = vmax.f32 %v619, 0.0
        %v1198 = vmax.f32 %v624, 0.0
        %v1199 = vmax.f32 %v629, 0.0
        %v1200 = vmax.f32 %v634, 0.0
        %v1201 = vmax.f32 %v639, 0.0
        %v1202 = vmax.f32 %v644, 0.0
        %v1203 = vmax.f32 %v649, 0.0
        %v1204 = vmax.f32 %v654, 0.0
        %v1205 = vmax.f32 %v659, 0.0
        %v1206 = vmax.f32 %v664, 0.0
        %v1207 = vmax.f32 %v669, 0.0
        %v1208 = vmax.f32 %v674, 0.0
        %v1209 = vmax.f32 %v679, 0.0
        %v1210 = vmax.f32 %v684, 0.0
        %v1211 = vmax.f32 %v689, 0.0
        %v1212 = vmax.f32 %v694, 0.0
        %v1213 = vmax.f32 %v699, 0.0
        %v1214 = vmax.f32 %v704, 0.0
        %v1215 = vmax.f32 %v709, 0.0
        %v1216 = vmax.f32 %v714, 0.0
        %v1217 = vmax.f32 %v719, 0.0
        %v1218 = vmax.f32 %v724, 0.0
        %v1219 = vmax.f32 %v729, 0.0
        %v1220 = vmax.f32 %v734, 0.0
        %v1221 = vmax.f32 %v739, 0.0
        %v1222 = vmax.f32 %v744, 0.0
        %v1223 = vmax.f32 %v749, 0.0
        %v1224 = vmax.f32 %v754, 0.0
        %v1225 = vmax.f32 %v759, 0.0
        %v1226 = vmax.f32 %v764, 0.0
        %v1227 = vmax.f32 %v769, 0.0
        %v1228 = vmax.f32 %v774, 0.0
        %v1229 = vmax.f32 %v779, 0.0
        %v1230 = vmax.f32 %v784, 0.0
        %v1231 = vmax.f32 %v789, 0.0
        %v1232 = vmax.f32 %v794, 0.0
        %v1233 = vmax.f32 %v799, 0.0
        %v1234 = vmax.f32 %v804, 0.0
        %v1235 = vmax.f32 %v809, 0.0
        %v1236 = vmax.f32 %v814, 0.0
        %v1237 = vmax.f32 %v819, 0.0
        %v1238 = vmax.f32 %v824, 0.0
        %v1239 = vmax.f32 %v829, 0.0
        %v1240 = vmax.f32 %v834, 0.0
        %v1241 = vmax.f32 %v839, 0.0
        %v1242 = vmax.f32 %v844, 0.0
        %v1243 = vmax.f32 %v849, 0.0
        %v1244 = vmax.f32 %v854, 0.0
        %v1245 = vmax.f32 %v859, 0.0
        %v1246 = vmax.f32 %v864, 0.0
        %v1247 = vmax.f32 %v869, 0.0
        %v1248 = vmax.f32 %v874, 0.0
        %v1249 = vmax.f32 %v879, 0.0
        %v1250 = vmax.f32 %v884, 0.0
        %v1251 = vmax.f32 %v889, 0.0
        %v1252 = vmax.f32 %v894, 0.0
        %v1253 = vmax.f32 %v899, 0.0
        %v1254 = vmax.f32 %v904, 0.0
        %v1255 = vmax.f32 %v909, 0.0
        %v1256 = vmax.f32 %v914, 0.0
        %v1257 = vmax.f32 %v919, 0.0
        %v1258 = vmax.f32 %v924, 0.0
        %v1259 = vmax.f32 %v929, 0.0
        %v1260 = vmax.f32 %v934, 0.0
        %v1261 = vmax.f32 %v939, 0.0
        %v1262 = vmax.f32 %v944, 0.0
        %v1263 = vmax.f32 %v949, 0.0
        %v1264 = vmax.f32 %v954, 0.0
        %v1265 = vmax.f32 %v959, 0.0
        %v1266 = vmax.f32 %v964, 0.0
        %v1267 = vmax.f32 %v969, 0.0
        %v1268 = vmax.f32 %v974, 0.0
        %v1269 = vmax.f32 %v979, 0.0
        %v1270 = vmax.f32 %v984, 0.0
        %v1271 = vmax.f32 %v989, 0.0
        %v1272 = vmax.f32 %v994, 0.0
        %v1273 = vmax.f32 %v999, 0.0
        %v1274 = vmax.f32 %v1004, 0.0
        %v1275 = vmax.f32 %v1009, 0.0
        %v1276 = vmax.f32 %v1014, 0.0
        %v1277 = vmax.f32 %v1019, 0.0
        %v1278 = vmax.f32 %v1024, 0.0
        %v1279 = vmax.f32 %v1029, 0.0
        %v1280 = vmax.f32 %v1034, 0.0
        %v1281 = vmax.f32 %v1039, 0.0
        %v1282 = vmax.f32 %v1044, 0.0
        %v1283 = vmax.f32 %v1049, 0.0
        %v1284 = vmax.f32 %v1054, 0.0
        %v1285 = vmax.f32 %v1059, 0.0
        %v1286 = vmax.f32 %v1064, 0.0
        %v1287 = vmax.f32 %v1069, 0.0
        %v1288 = vmax.f32 %v1074, 0.0
        %v1289 = vmax.f32 %v1079, 0.0
        %v1290 = vmax.f32 %v1084, 0.0
        %v1291 = vmax.f32 %v1089, 0.0
        %v1292 = vmax.f32 %v1094, 0.0
        %v1293 = vmax.f32 %v1099, 0.0
        %v1294 = vmax.f32 %v1104, 0.0
        %v1295 = vmax.f32 %v1109, 0.0
        %v1296 = vmax.f32 %v1114, 0.0
        %v1297 = vmax.f32 %v1119, 0.0
        %v1298 = vmax.f32 %v1124, 0.0
        %v1299 = vmax.f32 %v1129, 0.0
        %v1300 = vmax.f32 %v1134, 0.0
        %v1301 = vmax.f32 %v1139, 0.0
        %v1302 = vmax.f32 %v1144, 0.0
        %v1303 = vmax.f32 %v1149, 0.0
        %v1304 = vmax.f32 %v1154, 0.0
        %v1305 = vmax.f32 %v1159, 0.0
        %v1306 = vmax.f32 %v1164, 0.0
        %v1307 = vmax.f32 %v1169, 0.0
        %v1308 = vmax.f32 %v1174, 0.0
        %v1309 = vmax.f32 %v1179, 0.0
        %v1310 = vld [vmem:[%s3] sm:$0x1]
        %v1312 = vlaneseq
        %v1313 = vshrl.u32 %v1312, 7
        %v1314 = vsub.s32 0, %v1313
        %v1315 = vrot.slane %v1310, %v1314
        %v1317 = vmul.f32 %v1182, %v1315
        %v1318 = vmul.f32 %v1183, %v1315
        %v1319 = vmul.f32 %v1184, %v1315
        %v1320 = vmul.f32 %v1185, %v1315
        %v1321 = vmul.f32 %v1186, %v1315
        %v1322 = vmul.f32 %v1187, %v1315
        %v1323 = vmul.f32 %v1188, %v1315
        %v1324 = vmul.f32 %v1189, %v1315
        %v1325 = vmul.f32 %v1190, %v1315
        %v1326 = vmul.f32 %v1191, %v1315
        %v1327 = vmul.f32 %v1192, %v1315
        %v1328 = vmul.f32 %v1193, %v1315
        %v1329 = vmul.f32 %v1194, %v1315
        %v1330 = vmul.f32 %v1195, %v1315
        %v1331 = vmul.f32 %v1196, %v1315
        %v1332 = vmul.f32 %v1197, %v1315
        %v1333 = vmul.f32 %v1198, %v1315
        %v1334 = vmul.f32 %v1199, %v1315
        %v1335 = vmul.f32 %v1200, %v1315
        %v1336 = vmul.f32 %v1201, %v1315
        %v1337 = vmul.f32 %v1202, %v1315
        %v1338 = vmul.f32 %v1203, %v1315
        %v1339 = vmul.f32 %v1204, %v1315
        %v1340 = vmul.f32 %v1205, %v1315
        %v1341 = vmul.f32 %v1206, %v1315
        %v1342 = vmul.f32 %v1207, %v1315
        %v1343 = vmul.f32 %v1208, %v1315
        %v1344 = vmul.f32 %v1209, %v1315
        %v1345 = vmul.f32 %v1210, %v1315
        %v1346 = vmul.f32 %v1211, %v1315
        %v1347 = vmul.f32 %v1212, %v1315
        %v1348 = vmul.f32 %v1213, %v1315
        %v1349 = vmul.f32 %v1214, %v1315
        %v1350 = vmul.f32 %v1215, %v1315
        %v1351 = vmul.f32 %v1216, %v1315
        %v1352 = vmul.f32 %v1217, %v1315
        %v1353 = vmul.f32 %v1218, %v1315
        %v1354 = vmul.f32 %v1219, %v1315
        %v1355 = vmul.f32 %v1220, %v1315
        %v1356 = vmul.f32 %v1221, %v1315
        %v1357 = vmul.f32 %v1222, %v1315
        %v1358 = vmul.f32 %v1223, %v1315
        %v1359 = vmul.f32 %v1224, %v1315
        %v1360 = vmul.f32 %v1225, %v1315
        %v1361 = vmul.f32 %v1226, %v1315
        %v1362 = vmul.f32 %v1227, %v1315
        %v1363 = vmul.f32 %v1228, %v1315
        %v1364 = vmul.f32 %v1229, %v1315
        %v1365 = vmul.f32 %v1230, %v1315
        %v1366 = vmul.f32 %v1231, %v1315
        %v1367 = vmul.f32 %v1232, %v1315
        %v1368 = vmul.f32 %v1233, %v1315
        %v1369 = vmul.f32 %v1234, %v1315
        %v1370 = vmul.f32 %v1235, %v1315
        %v1371 = vmul.f32 %v1236, %v1315
        %v1372 = vmul.f32 %v1237, %v1315
        %v1373 = vmul.f32 %v1238, %v1315
        %v1374 = vmul.f32 %v1239, %v1315
        %v1375 = vmul.f32 %v1240, %v1315
        %v1376 = vmul.f32 %v1241, %v1315
        %v1377 = vmul.f32 %v1242, %v1315
        %v1378 = vmul.f32 %v1243, %v1315
        %v1379 = vmul.f32 %v1244, %v1315
        %v1380 = vmul.f32 %v1245, %v1315
        %v1381 = vmul.f32 %v1246, %v1315
        %v1382 = vmul.f32 %v1247, %v1315
        %v1383 = vmul.f32 %v1248, %v1315
        %v1384 = vmul.f32 %v1249, %v1315
        %v1385 = vmul.f32 %v1250, %v1315
        %v1386 = vmul.f32 %v1251, %v1315
        %v1387 = vmul.f32 %v1252, %v1315
        %v1388 = vmul.f32 %v1253, %v1315
        %v1389 = vmul.f32 %v1254, %v1315
        %v1390 = vmul.f32 %v1255, %v1315
        %v1391 = vmul.f32 %v1256, %v1315
        %v1392 = vmul.f32 %v1257, %v1315
        %v1393 = vmul.f32 %v1258, %v1315
        %v1394 = vmul.f32 %v1259, %v1315
        %v1395 = vmul.f32 %v1260, %v1315
        %v1396 = vmul.f32 %v1261, %v1315
        %v1397 = vmul.f32 %v1262, %v1315
        %v1398 = vmul.f32 %v1263, %v1315
        %v1399 = vmul.f32 %v1264, %v1315
        %v1400 = vmul.f32 %v1265, %v1315
        %v1401 = vmul.f32 %v1266, %v1315
        %v1402 = vmul.f32 %v1267, %v1315
        %v1403 = vmul.f32 %v1268, %v1315
        %v1404 = vmul.f32 %v1269, %v1315
        %v1405 = vmul.f32 %v1270, %v1315
        %v1406 = vmul.f32 %v1271, %v1315
        %v1407 = vmul.f32 %v1272, %v1315
        %v1408 = vmul.f32 %v1273, %v1315
        %v1409 = vmul.f32 %v1274, %v1315
        %v1410 = vmul.f32 %v1275, %v1315
        %v1411 = vmul.f32 %v1276, %v1315
        %v1412 = vmul.f32 %v1277, %v1315
        %v1413 = vmul.f32 %v1278, %v1315
        %v1414 = vmul.f32 %v1279, %v1315
        %v1415 = vmul.f32 %v1280, %v1315
        %v1416 = vmul.f32 %v1281, %v1315
        %v1417 = vmul.f32 %v1282, %v1315
        %v1418 = vmul.f32 %v1283, %v1315
        %v1419 = vmul.f32 %v1284, %v1315
        %v1420 = vmul.f32 %v1285, %v1315
        %v1421 = vmul.f32 %v1286, %v1315
        %v1422 = vmul.f32 %v1287, %v1315
        %v1423 = vmul.f32 %v1288, %v1315
        %v1424 = vmul.f32 %v1289, %v1315
        %v1425 = vmul.f32 %v1290, %v1315
        %v1426 = vmul.f32 %v1291, %v1315
        %v1427 = vmul.f32 %v1292, %v1315
        %v1428 = vmul.f32 %v1293, %v1315
        %v1429 = vmul.f32 %v1294, %v1315
        %v1430 = vmul.f32 %v1295, %v1315
        %v1431 = vmul.f32 %v1296, %v1315
        %v1432 = vmul.f32 %v1297, %v1315
        %v1433 = vmul.f32 %v1298, %v1315
        %v1434 = vmul.f32 %v1299, %v1315
        %v1435 = vmul.f32 %v1300, %v1315
        %v1436 = vmul.f32 %v1301, %v1315
        %v1437 = vmul.f32 %v1302, %v1315
        %v1438 = vmul.f32 %v1303, %v1315
        %v1439 = vmul.f32 %v1304, %v1315
        %v1440 = vmul.f32 %v1305, %v1315
        %v1441 = vmul.f32 %v1306, %v1315
        %v1442 = vmul.f32 %v1307, %v1315
        %v1443 = vmul.f32 %v1308, %v1315
        %v1444 = vmul.f32 %v1309, %v1315
        %vm1445 = vcmask 261120
        %v1446 = vsel %vm1445, %v1317, 0.0
        %1447 = vadd.xlane.f32.xlu0 %v1446
        %v1448 = vpop.xlane.xlu0 %1447
        %v1449 = vsel %vm1445, %v1318, 0.0
        %1450 = vadd.xlane.f32.xlu0 %v1449
        %v1451 = vpop.xlane.xlu0 %1450
        %v1452 = vsel %vm1445, %v1319, 0.0
        %1453 = vadd.xlane.f32.xlu0 %v1452
        %v1454 = vpop.xlane.xlu0 %1453
        %v1455 = vsel %vm1445, %v1320, 0.0
        %1456 = vadd.xlane.f32.xlu0 %v1455
        %v1457 = vpop.xlane.xlu0 %1456
        %v1458 = vsel %vm1445, %v1321, 0.0
        %1459 = vadd.xlane.f32.xlu0 %v1458
        %v1460 = vpop.xlane.xlu0 %1459
        %v1461 = vsel %vm1445, %v1322, 0.0
        %1462 = vadd.xlane.f32.xlu0 %v1461
        %v1463 = vpop.xlane.xlu0 %1462
        %v1464 = vsel %vm1445, %v1323, 0.0
        %1465 = vadd.xlane.f32.xlu0 %v1464
        %v1466 = vpop.xlane.xlu0 %1465
        %v1467 = vsel %vm1445, %v1324, 0.0
        %1468 = vadd.xlane.f32.xlu0 %v1467
        %v1469 = vpop.xlane.xlu0 %1468
        %v1470 = vsel %vm1445, %v1325, 0.0
        %1471 = vadd.xlane.f32.xlu0 %v1470
        %v1472 = vpop.xlane.xlu0 %1471
        %v1473 = vsel %vm1445, %v1326, 0.0
        %1474 = vadd.xlane.f32.xlu0 %v1473
        %v1475 = vpop.xlane.xlu0 %1474
        %v1476 = vsel %vm1445, %v1327, 0.0
        %1477 = vadd.xlane.f32.xlu0 %v1476
        %v1478 = vpop.xlane.xlu0 %1477
        %v1479 = vsel %vm1445, %v1328, 0.0
        %1480 = vadd.xlane.f32.xlu0 %v1479
        %v1481 = vpop.xlane.xlu0 %1480
        %v1482 = vsel %vm1445, %v1329, 0.0
        %1483 = vadd.xlane.f32.xlu0 %v1482
        %v1484 = vpop.xlane.xlu0 %1483
        %v1485 = vsel %vm1445, %v1330, 0.0
        %1486 = vadd.xlane.f32.xlu0 %v1485
        %v1487 = vpop.xlane.xlu0 %1486
        %v1488 = vsel %vm1445, %v1331, 0.0
        %1489 = vadd.xlane.f32.xlu0 %v1488
        %v1490 = vpop.xlane.xlu0 %1489
        %v1491 = vsel %vm1445, %v1332, 0.0
        %1492 = vadd.xlane.f32.xlu0 %v1491
        %v1493 = vpop.xlane.xlu0 %1492
        %v1494 = vsel %vm1445, %v1333, 0.0
        %1495 = vadd.xlane.f32.xlu0 %v1494
        %v1496 = vpop.xlane.xlu0 %1495
        %v1497 = vsel %vm1445, %v1334, 0.0
        %1498 = vadd.xlane.f32.xlu0 %v1497
        %v1499 = vpop.xlane.xlu0 %1498
        %v1500 = vsel %vm1445, %v1335, 0.0
        %1501 = vadd.xlane.f32.xlu0 %v1500
        %v1502 = vpop.xlane.xlu0 %1501
        %v1503 = vsel %vm1445, %v1336, 0.0
        %1504 = vadd.xlane.f32.xlu0 %v1503
        %v1505 = vpop.xlane.xlu0 %1504
        %v1506 = vsel %vm1445, %v1337, 0.0
        %1507 = vadd.xlane.f32.xlu0 %v1506
        %v1508 = vpop.xlane.xlu0 %1507
        %v1509 = vsel %vm1445, %v1338, 0.0
        %1510 = vadd.xlane.f32.xlu0 %v1509
        %v1511 = vpop.xlane.xlu0 %1510
        %v1512 = vsel %vm1445, %v1339, 0.0
        %1513 = vadd.xlane.f32.xlu0 %v1512
        %v1514 = vpop.xlane.xlu0 %1513
        %v1515 = vsel %vm1445, %v1340, 0.0
        %1516 = vadd.xlane.f32.xlu0 %v1515
        %v1517 = vpop.xlane.xlu0 %1516
        %v1518 = vsel %vm1445, %v1341, 0.0
        %1519 = vadd.xlane.f32.xlu0 %v1518
        %v1520 = vpop.xlane.xlu0 %1519
        %v1521 = vsel %vm1445, %v1342, 0.0
        %1522 = vadd.xlane.f32.xlu0 %v1521
        %v1523 = vpop.xlane.xlu0 %1522
        %v1524 = vsel %vm1445, %v1343, 0.0
        %1525 = vadd.xlane.f32.xlu0 %v1524
        %v1526 = vpop.xlane.xlu0 %1525
        %v1527 = vsel %vm1445, %v1344, 0.0
        %1528 = vadd.xlane.f32.xlu0 %v1527
        %v1529 = vpop.xlane.xlu0 %1528
        %v1530 = vsel %vm1445, %v1345, 0.0
        %1531 = vadd.xlane.f32.xlu0 %v1530
        %v1532 = vpop.xlane.xlu0 %1531
        %v1533 = vsel %vm1445, %v1346, 0.0
        %1534 = vadd.xlane.f32.xlu0 %v1533
        %v1535 = vpop.xlane.xlu0 %1534
        %v1536 = vsel %vm1445, %v1347, 0.0
        %1537 = vadd.xlane.f32.xlu0 %v1536
        %v1538 = vpop.xlane.xlu0 %1537
        %v1539 = vsel %vm1445, %v1348, 0.0
        %1540 = vadd.xlane.f32.xlu0 %v1539
        %v1541 = vpop.xlane.xlu0 %1540
        %v1542 = vsel %vm1445, %v1349, 0.0
        %1543 = vadd.xlane.f32.xlu0 %v1542
        %v1544 = vpop.xlane.xlu0 %1543
        %v1545 = vsel %vm1445, %v1350, 0.0
        %1546 = vadd.xlane.f32.xlu0 %v1545
        %v1547 = vpop.xlane.xlu0 %1546
        %v1548 = vsel %vm1445, %v1351, 0.0
        %1549 = vadd.xlane.f32.xlu0 %v1548
        %v1550 = vpop.xlane.xlu0 %1549
        %v1551 = vsel %vm1445, %v1352, 0.0
        %1552 = vadd.xlane.f32.xlu0 %v1551
        %v1553 = vpop.xlane.xlu0 %1552
        %v1554 = vsel %vm1445, %v1353, 0.0
        %1555 = vadd.xlane.f32.xlu0 %v1554
        %v1556 = vpop.xlane.xlu0 %1555
        %v1557 = vsel %vm1445, %v1354, 0.0
        %1558 = vadd.xlane.f32.xlu0 %v1557
        %v1559 = vpop.xlane.xlu0 %1558
        %v1560 = vsel %vm1445, %v1355, 0.0
        %1561 = vadd.xlane.f32.xlu0 %v1560
        %v1562 = vpop.xlane.xlu0 %1561
        %v1563 = vsel %vm1445, %v1356, 0.0
        %1564 = vadd.xlane.f32.xlu0 %v1563
        %v1565 = vpop.xlane.xlu0 %1564
        %v1566 = vsel %vm1445, %v1357, 0.0
        %1567 = vadd.xlane.f32.xlu0 %v1566
        %v1568 = vpop.xlane.xlu0 %1567
        %v1569 = vsel %vm1445, %v1358, 0.0
        %1570 = vadd.xlane.f32.xlu0 %v1569
        %v1571 = vpop.xlane.xlu0 %1570
        %v1572 = vsel %vm1445, %v1359, 0.0
        %1573 = vadd.xlane.f32.xlu0 %v1572
        %v1574 = vpop.xlane.xlu0 %1573
        %v1575 = vsel %vm1445, %v1360, 0.0
        %1576 = vadd.xlane.f32.xlu0 %v1575
        %v1577 = vpop.xlane.xlu0 %1576
        %v1578 = vsel %vm1445, %v1361, 0.0
        %1579 = vadd.xlane.f32.xlu0 %v1578
        %v1580 = vpop.xlane.xlu0 %1579
        %v1581 = vsel %vm1445, %v1362, 0.0
        %1582 = vadd.xlane.f32.xlu0 %v1581
        %v1583 = vpop.xlane.xlu0 %1582
        %v1584 = vsel %vm1445, %v1363, 0.0
        %1585 = vadd.xlane.f32.xlu0 %v1584
        %v1586 = vpop.xlane.xlu0 %1585
        %v1587 = vsel %vm1445, %v1364, 0.0
        %1588 = vadd.xlane.f32.xlu0 %v1587
        %v1589 = vpop.xlane.xlu0 %1588
        %v1590 = vsel %vm1445, %v1365, 0.0
        %1591 = vadd.xlane.f32.xlu0 %v1590
        %v1592 = vpop.xlane.xlu0 %1591
        %v1593 = vsel %vm1445, %v1366, 0.0
        %1594 = vadd.xlane.f32.xlu0 %v1593
        %v1595 = vpop.xlane.xlu0 %1594
        %v1596 = vsel %vm1445, %v1367, 0.0
        %1597 = vadd.xlane.f32.xlu0 %v1596
        %v1598 = vpop.xlane.xlu0 %1597
        %v1599 = vsel %vm1445, %v1368, 0.0
        %1600 = vadd.xlane.f32.xlu0 %v1599
        %v1601 = vpop.xlane.xlu0 %1600
        %v1602 = vsel %vm1445, %v1369, 0.0
        %1603 = vadd.xlane.f32.xlu0 %v1602
        %v1604 = vpop.xlane.xlu0 %1603
        %v1605 = vsel %vm1445, %v1370, 0.0
        %1606 = vadd.xlane.f32.xlu0 %v1605
        %v1607 = vpop.xlane.xlu0 %1606
        %v1608 = vsel %vm1445, %v1371, 0.0
        %1609 = vadd.xlane.f32.xlu0 %v1608
        %v1610 = vpop.xlane.xlu0 %1609
        %v1611 = vsel %vm1445, %v1372, 0.0
        %1612 = vadd.xlane.f32.xlu0 %v1611
        %v1613 = vpop.xlane.xlu0 %1612
        %v1614 = vsel %vm1445, %v1373, 0.0
        %1615 = vadd.xlane.f32.xlu0 %v1614
        %v1616 = vpop.xlane.xlu0 %1615
        %v1617 = vsel %vm1445, %v1374, 0.0
        %1618 = vadd.xlane.f32.xlu0 %v1617
        %v1619 = vpop.xlane.xlu0 %1618
        %v1620 = vsel %vm1445, %v1375, 0.0
        %1621 = vadd.xlane.f32.xlu0 %v1620
        %v1622 = vpop.xlane.xlu0 %1621
        %v1623 = vsel %vm1445, %v1376, 0.0
        %1624 = vadd.xlane.f32.xlu0 %v1623
        %v1625 = vpop.xlane.xlu0 %1624
        %v1626 = vsel %vm1445, %v1377, 0.0
        %1627 = vadd.xlane.f32.xlu0 %v1626
        %v1628 = vpop.xlane.xlu0 %1627
        %v1629 = vsel %vm1445, %v1378, 0.0
        %1630 = vadd.xlane.f32.xlu0 %v1629
        %v1631 = vpop.xlane.xlu0 %1630
        %v1632 = vsel %vm1445, %v1379, 0.0
        %1633 = vadd.xlane.f32.xlu0 %v1632
        %v1634 = vpop.xlane.xlu0 %1633
        %v1635 = vsel %vm1445, %v1380, 0.0
        %1636 = vadd.xlane.f32.xlu0 %v1635
        %v1637 = vpop.xlane.xlu0 %1636
        %v1638 = vsel %vm1445, %v1381, 0.0
        %1639 = vadd.xlane.f32.xlu0 %v1638
        %v1640 = vpop.xlane.xlu0 %1639
        %v1641 = vsel %vm1445, %v1382, 0.0
        %1642 = vadd.xlane.f32.xlu0 %v1641
        %v1643 = vpop.xlane.xlu0 %1642
        %v1644 = vsel %vm1445, %v1383, 0.0
        %1645 = vadd.xlane.f32.xlu0 %v1644
        %v1646 = vpop.xlane.xlu0 %1645
        %v1647 = vsel %vm1445, %v1384, 0.0
        %1648 = vadd.xlane.f32.xlu0 %v1647
        %v1649 = vpop.xlane.xlu0 %1648
        %v1650 = vsel %vm1445, %v1385, 0.0
        %1651 = vadd.xlane.f32.xlu0 %v1650
        %v1652 = vpop.xlane.xlu0 %1651
        %v1653 = vsel %vm1445, %v1386, 0.0
        %1654 = vadd.xlane.f32.xlu0 %v1653
        %v1655 = vpop.xlane.xlu0 %1654
        %v1656 = vsel %vm1445, %v1387, 0.0
        %1657 = vadd.xlane.f32.xlu0 %v1656
        %v1658 = vpop.xlane.xlu0 %1657
        %v1659 = vsel %vm1445, %v1388, 0.0
        %1660 = vadd.xlane.f32.xlu0 %v1659
        %v1661 = vpop.xlane.xlu0 %1660
        %v1662 = vsel %vm1445, %v1389, 0.0
        %1663 = vadd.xlane.f32.xlu0 %v1662
        %v1664 = vpop.xlane.xlu0 %1663
        %v1665 = vsel %vm1445, %v1390, 0.0
        %1666 = vadd.xlane.f32.xlu0 %v1665
        %v1667 = vpop.xlane.xlu0 %1666
        %v1668 = vsel %vm1445, %v1391, 0.0
        %1669 = vadd.xlane.f32.xlu0 %v1668
        %v1670 = vpop.xlane.xlu0 %1669
        %v1671 = vsel %vm1445, %v1392, 0.0
        %1672 = vadd.xlane.f32.xlu0 %v1671
        %v1673 = vpop.xlane.xlu0 %1672
        %v1674 = vsel %vm1445, %v1393, 0.0
        %1675 = vadd.xlane.f32.xlu0 %v1674
        %v1676 = vpop.xlane.xlu0 %1675
        %v1677 = vsel %vm1445, %v1394, 0.0
        %1678 = vadd.xlane.f32.xlu0 %v1677
        %v1679 = vpop.xlane.xlu0 %1678
        %v1680 = vsel %vm1445, %v1395, 0.0
        %1681 = vadd.xlane.f32.xlu0 %v1680
        %v1682 = vpop.xlane.xlu0 %1681
        %v1683 = vsel %vm1445, %v1396, 0.0
        %1684 = vadd.xlane.f32.xlu0 %v1683
        %v1685 = vpop.xlane.xlu0 %1684
        %v1686 = vsel %vm1445, %v1397, 0.0
        %1687 = vadd.xlane.f32.xlu0 %v1686
        %v1688 = vpop.xlane.xlu0 %1687
        %v1689 = vsel %vm1445, %v1398, 0.0
        %1690 = vadd.xlane.f32.xlu0 %v1689
        %v1691 = vpop.xlane.xlu0 %1690
        %v1692 = vsel %vm1445, %v1399, 0.0
        %1693 = vadd.xlane.f32.xlu0 %v1692
        %v1694 = vpop.xlane.xlu0 %1693
        %v1695 = vsel %vm1445, %v1400, 0.0
        %1696 = vadd.xlane.f32.xlu0 %v1695
        %v1697 = vpop.xlane.xlu0 %1696
        %v1698 = vsel %vm1445, %v1401, 0.0
        %1699 = vadd.xlane.f32.xlu0 %v1698
        %v1700 = vpop.xlane.xlu0 %1699
        %v1701 = vsel %vm1445, %v1402, 0.0
        %1702 = vadd.xlane.f32.xlu0 %v1701
        %v1703 = vpop.xlane.xlu0 %1702
        %v1704 = vsel %vm1445, %v1403, 0.0
        %1705 = vadd.xlane.f32.xlu0 %v1704
        %v1706 = vpop.xlane.xlu0 %1705
        %v1707 = vsel %vm1445, %v1404, 0.0
        %1708 = vadd.xlane.f32.xlu0 %v1707
        %v1709 = vpop.xlane.xlu0 %1708
        %v1710 = vsel %vm1445, %v1405, 0.0
        %1711 = vadd.xlane.f32.xlu0 %v1710
        %v1712 = vpop.xlane.xlu0 %1711
        %v1713 = vsel %vm1445, %v1406, 0.0
        %1714 = vadd.xlane.f32.xlu0 %v1713
        %v1715 = vpop.xlane.xlu0 %1714
        %v1716 = vsel %vm1445, %v1407, 0.0
        %1717 = vadd.xlane.f32.xlu0 %v1716
        %v1718 = vpop.xlane.xlu0 %1717
        %v1719 = vsel %vm1445, %v1408, 0.0
        %1720 = vadd.xlane.f32.xlu0 %v1719
        %v1721 = vpop.xlane.xlu0 %1720
        %v1722 = vsel %vm1445, %v1409, 0.0
        %1723 = vadd.xlane.f32.xlu0 %v1722
        %v1724 = vpop.xlane.xlu0 %1723
        %v1725 = vsel %vm1445, %v1410, 0.0
        %1726 = vadd.xlane.f32.xlu0 %v1725
        %v1727 = vpop.xlane.xlu0 %1726
        %v1728 = vsel %vm1445, %v1411, 0.0
        %1729 = vadd.xlane.f32.xlu0 %v1728
        %v1730 = vpop.xlane.xlu0 %1729
        %v1731 = vsel %vm1445, %v1412, 0.0
        %1732 = vadd.xlane.f32.xlu0 %v1731
        %v1733 = vpop.xlane.xlu0 %1732
        %v1734 = vsel %vm1445, %v1413, 0.0
        %1735 = vadd.xlane.f32.xlu0 %v1734
        %v1736 = vpop.xlane.xlu0 %1735
        %v1737 = vsel %vm1445, %v1414, 0.0
        %1738 = vadd.xlane.f32.xlu0 %v1737
        %v1739 = vpop.xlane.xlu0 %1738
        %v1740 = vsel %vm1445, %v1415, 0.0
        %1741 = vadd.xlane.f32.xlu0 %v1740
        %v1742 = vpop.xlane.xlu0 %1741
        %v1743 = vsel %vm1445, %v1416, 0.0
        %1744 = vadd.xlane.f32.xlu0 %v1743
        %v1745 = vpop.xlane.xlu0 %1744
        %v1746 = vsel %vm1445, %v1417, 0.0
        %1747 = vadd.xlane.f32.xlu0 %v1746
        %v1748 = vpop.xlane.xlu0 %1747
        %v1749 = vsel %vm1445, %v1418, 0.0
        %1750 = vadd.xlane.f32.xlu0 %v1749
        %v1751 = vpop.xlane.xlu0 %1750
        %v1752 = vsel %vm1445, %v1419, 0.0
        %1753 = vadd.xlane.f32.xlu0 %v1752
        %v1754 = vpop.xlane.xlu0 %1753
        %v1755 = vsel %vm1445, %v1420, 0.0
        %1756 = vadd.xlane.f32.xlu0 %v1755
        %v1757 = vpop.xlane.xlu0 %1756
        %v1758 = vsel %vm1445, %v1421, 0.0
        %1759 = vadd.xlane.f32.xlu0 %v1758
        %v1760 = vpop.xlane.xlu0 %1759
        %v1761 = vsel %vm1445, %v1422, 0.0
        %1762 = vadd.xlane.f32.xlu0 %v1761
        %v1763 = vpop.xlane.xlu0 %1762
        %v1764 = vsel %vm1445, %v1423, 0.0
        %1765 = vadd.xlane.f32.xlu0 %v1764
        %v1766 = vpop.xlane.xlu0 %1765
        %v1767 = vsel %vm1445, %v1424, 0.0
        %1768 = vadd.xlane.f32.xlu0 %v1767
        %v1769 = vpop.xlane.xlu0 %1768
        %v1770 = vsel %vm1445, %v1425, 0.0
        %1771 = vadd.xlane.f32.xlu0 %v1770
        %v1772 = vpop.xlane.xlu0 %1771
        %v1773 = vsel %vm1445, %v1426, 0.0
        %1774 = vadd.xlane.f32.xlu0 %v1773
        %v1775 = vpop.xlane.xlu0 %1774
        %v1776 = vsel %vm1445, %v1427, 0.0
        %1777 = vadd.xlane.f32.xlu0 %v1776
        %v1778 = vpop.xlane.xlu0 %1777
        %v1779 = vsel %vm1445, %v1428, 0.0
        %1780 = vadd.xlane.f32.xlu0 %v1779
        %v1781 = vpop.xlane.xlu0 %1780
        %v1782 = vsel %vm1445, %v1429, 0.0
        %1783 = vadd.xlane.f32.xlu0 %v1782
        %v1784 = vpop.xlane.xlu0 %1783
        %v1785 = vsel %vm1445, %v1430, 0.0
        %1786 = vadd.xlane.f32.xlu0 %v1785
        %v1787 = vpop.xlane.xlu0 %1786
        %v1788 = vsel %vm1445, %v1431, 0.0
        %1789 = vadd.xlane.f32.xlu0 %v1788
        %v1790 = vpop.xlane.xlu0 %1789
        %v1791 = vsel %vm1445, %v1432, 0.0
        %1792 = vadd.xlane.f32.xlu0 %v1791
        %v1793 = vpop.xlane.xlu0 %1792
        %v1794 = vsel %vm1445, %v1433, 0.0
        %1795 = vadd.xlane.f32.xlu0 %v1794
        %v1796 = vpop.xlane.xlu0 %1795
        %v1797 = vsel %vm1445, %v1434, 0.0
        %1798 = vadd.xlane.f32.xlu0 %v1797
        %v1799 = vpop.xlane.xlu0 %1798
        %v1800 = vsel %vm1445, %v1435, 0.0
        %1801 = vadd.xlane.f32.xlu0 %v1800
        %v1802 = vpop.xlane.xlu0 %1801
        %v1803 = vsel %vm1445, %v1436, 0.0
        %1804 = vadd.xlane.f32.xlu0 %v1803
        %v1805 = vpop.xlane.xlu0 %1804
        %v1806 = vsel %vm1445, %v1437, 0.0
        %1807 = vadd.xlane.f32.xlu0 %v1806
        %v1808 = vpop.xlane.xlu0 %1807
        %v1809 = vsel %vm1445, %v1438, 0.0
        %1810 = vadd.xlane.f32.xlu0 %v1809
        %v1811 = vpop.xlane.xlu0 %1810
        %v1812 = vsel %vm1445, %v1439, 0.0
        %1813 = vadd.xlane.f32.xlu0 %v1812
        %v1814 = vpop.xlane.xlu0 %1813
        %v1815 = vsel %vm1445, %v1440, 0.0
        %1816 = vadd.xlane.f32.xlu0 %v1815
        %v1817 = vpop.xlane.xlu0 %1816
        %v1818 = vsel %vm1445, %v1441, 0.0
        %1819 = vadd.xlane.f32.xlu0 %v1818
        %v1820 = vpop.xlane.xlu0 %1819
        %v1821 = vsel %vm1445, %v1442, 0.0
        %1822 = vadd.xlane.f32.xlu0 %v1821
        %v1823 = vpop.xlane.xlu0 %1822
        %v1824 = vsel %vm1445, %v1443, 0.0
        %1825 = vadd.xlane.f32.xlu0 %v1824
        %v1826 = vpop.xlane.xlu0 %1825
        %v1827 = vsel %vm1445, %v1444, 0.0
        %1828 = vadd.xlane.f32.xlu0 %v1827
        %v1829 = vpop.xlane.xlu0 %1828
        %v1830 = vrot.slane %v1448, 4
        %v1831 = vmax.f32 %v1448, %v1830
        %v1832 = vrot.slane %v1831, 2
        %v1833 = vmax.f32 %v1831, %v1832
        %v1834 = vrot.slane %v1833, 1
        %v1835 = vmax.f32 %v1833, %v1834
        %v1836 = vrot.slane %v1451, 4
        %v1837 = vmax.f32 %v1451, %v1836
        %v1838 = vrot.slane %v1837, 2
        %v1839 = vmax.f32 %v1837, %v1838
        %v1840 = vrot.slane %v1839, 1
        %v1841 = vmax.f32 %v1839, %v1840
        %v1842 = vrot.slane %v1454, 4
        %v1843 = vmax.f32 %v1454, %v1842
        %v1844 = vrot.slane %v1843, 2
        %v1845 = vmax.f32 %v1843, %v1844
        %v1846 = vrot.slane %v1845, 1
        %v1847 = vmax.f32 %v1845, %v1846
        %v1848 = vrot.slane %v1457, 4
        %v1849 = vmax.f32 %v1457, %v1848
        %v1850 = vrot.slane %v1849, 2
        %v1851 = vmax.f32 %v1849, %v1850
        %v1852 = vrot.slane %v1851, 1
        %v1853 = vmax.f32 %v1851, %v1852
        %v1854 = vrot.slane %v1460, 4
        %v1855 = vmax.f32 %v1460, %v1854
        %v1856 = vrot.slane %v1855, 2
        %v1857 = vmax.f32 %v1855, %v1856
        %v1858 = vrot.slane %v1857, 1
        %v1859 = vmax.f32 %v1857, %v1858
        %v1860 = vrot.slane %v1463, 4
        %v1861 = vmax.f32 %v1463, %v1860
        %v1862 = vrot.slane %v1861, 2
        %v1863 = vmax.f32 %v1861, %v1862
        %v1864 = vrot.slane %v1863, 1
        %v1865 = vmax.f32 %v1863, %v1864
        %v1866 = vrot.slane %v1466, 4
        %v1867 = vmax.f32 %v1466, %v1866
        %v1868 = vrot.slane %v1867, 2
        %v1869 = vmax.f32 %v1867, %v1868
        %v1870 = vrot.slane %v1869, 1
        %v1871 = vmax.f32 %v1869, %v1870
        %v1872 = vrot.slane %v1469, 4
        %v1873 = vmax.f32 %v1469, %v1872
        %v1874 = vrot.slane %v1873, 2
        %v1875 = vmax.f32 %v1873, %v1874
        %v1876 = vrot.slane %v1875, 1
        %v1877 = vmax.f32 %v1875, %v1876
        %v1878 = vrot.slane %v1472, 4
        %v1879 = vmax.f32 %v1472, %v1878
        %v1880 = vrot.slane %v1879, 2
        %v1881 = vmax.f32 %v1879, %v1880
        %v1882 = vrot.slane %v1881, 1
        %v1883 = vmax.f32 %v1881, %v1882
        %v1884 = vrot.slane %v1475, 4
        %v1885 = vmax.f32 %v1475, %v1884
        %v1886 = vrot.slane %v1885, 2
        %v1887 = vmax.f32 %v1885, %v1886
        %v1888 = vrot.slane %v1887, 1
        %v1889 = vmax.f32 %v1887, %v1888
        %v1890 = vrot.slane %v1478, 4
        %v1891 = vmax.f32 %v1478, %v1890
        %v1892 = vrot.slane %v1891, 2
        %v1893 = vmax.f32 %v1891, %v1892
        %v1894 = vrot.slane %v1893, 1
        %v1895 = vmax.f32 %v1893, %v1894
        %v1896 = vrot.slane %v1481, 4
        %v1897 = vmax.f32 %v1481, %v1896
        %v1898 = vrot.slane %v1897, 2
        %v1899 = vmax.f32 %v1897, %v1898
        %v1900 = vrot.slane %v1899, 1
        %v1901 = vmax.f32 %v1899, %v1900
        %v1902 = vrot.slane %v1484, 4
        %v1903 = vmax.f32 %v1484, %v1902
        %v1904 = vrot.slane %v1903, 2
        %v1905 = vmax.f32 %v1903, %v1904
        %v1906 = vrot.slane %v1905, 1
        %v1907 = vmax.f32 %v1905, %v1906
        %v1908 = vrot.slane %v1487, 4
        %v1909 = vmax.f32 %v1487, %v1908
        %v1910 = vrot.slane %v1909, 2
        %v1911 = vmax.f32 %v1909, %v1910
        %v1912 = vrot.slane %v1911, 1
        %v1913 = vmax.f32 %v1911, %v1912
        %v1914 = vrot.slane %v1490, 4
        %v1915 = vmax.f32 %v1490, %v1914
        %v1916 = vrot.slane %v1915, 2
        %v1917 = vmax.f32 %v1915, %v1916
        %v1918 = vrot.slane %v1917, 1
        %v1919 = vmax.f32 %v1917, %v1918
        %v1920 = vrot.slane %v1493, 4
        %v1921 = vmax.f32 %v1493, %v1920
        %v1922 = vrot.slane %v1921, 2
        %v1923 = vmax.f32 %v1921, %v1922
        %v1924 = vrot.slane %v1923, 1
        %v1925 = vmax.f32 %v1923, %v1924
        %v1926 = vrot.slane %v1496, 4
        %v1927 = vmax.f32 %v1496, %v1926
        %v1928 = vrot.slane %v1927, 2
        %v1929 = vmax.f32 %v1927, %v1928
        %v1930 = vrot.slane %v1929, 1
        %v1931 = vmax.f32 %v1929, %v1930
        %v1932 = vrot.slane %v1499, 4
        %v1933 = vmax.f32 %v1499, %v1932
        %v1934 = vrot.slane %v1933, 2
        %v1935 = vmax.f32 %v1933, %v1934
        %v1936 = vrot.slane %v1935, 1
        %v1937 = vmax.f32 %v1935, %v1936
        %v1938 = vrot.slane %v1502, 4
        %v1939 = vmax.f32 %v1502, %v1938
        %v1940 = vrot.slane %v1939, 2
        %v1941 = vmax.f32 %v1939, %v1940
        %v1942 = vrot.slane %v1941, 1
        %v1943 = vmax.f32 %v1941, %v1942
        %v1944 = vrot.slane %v1505, 4
        %v1945 = vmax.f32 %v1505, %v1944
        %v1946 = vrot.slane %v1945, 2
        %v1947 = vmax.f32 %v1945, %v1946
        %v1948 = vrot.slane %v1947, 1
        %v1949 = vmax.f32 %v1947, %v1948
        %v1950 = vrot.slane %v1508, 4
        %v1951 = vmax.f32 %v1508, %v1950
        %v1952 = vrot.slane %v1951, 2
        %v1953 = vmax.f32 %v1951, %v1952
        %v1954 = vrot.slane %v1953, 1
        %v1955 = vmax.f32 %v1953, %v1954
        %v1956 = vrot.slane %v1511, 4
        %v1957 = vmax.f32 %v1511, %v1956
        %v1958 = vrot.slane %v1957, 2
        %v1959 = vmax.f32 %v1957, %v1958
        %v1960 = vrot.slane %v1959, 1
        %v1961 = vmax.f32 %v1959, %v1960
        %v1962 = vrot.slane %v1514, 4
        %v1963 = vmax.f32 %v1514, %v1962
        %v1964 = vrot.slane %v1963, 2
        %v1965 = vmax.f32 %v1963, %v1964
        %v1966 = vrot.slane %v1965, 1
        %v1967 = vmax.f32 %v1965, %v1966
        %v1968 = vrot.slane %v1517, 4
        %v1969 = vmax.f32 %v1517, %v1968
        %v1970 = vrot.slane %v1969, 2
        %v1971 = vmax.f32 %v1969, %v1970
        %v1972 = vrot.slane %v1971, 1
        %v1973 = vmax.f32 %v1971, %v1972
        %v1974 = vrot.slane %v1520, 4
        %v1975 = vmax.f32 %v1520, %v1974
        %v1976 = vrot.slane %v1975, 2
        %v1977 = vmax.f32 %v1975, %v1976
        %v1978 = vrot.slane %v1977, 1
        %v1979 = vmax.f32 %v1977, %v1978
        %v1980 = vrot.slane %v1523, 4
        %v1981 = vmax.f32 %v1523, %v1980
        %v1982 = vrot.slane %v1981, 2
        %v1983 = vmax.f32 %v1981, %v1982
        %v1984 = vrot.slane %v1983, 1
        %v1985 = vmax.f32 %v1983, %v1984
        %v1986 = vrot.slane %v1526, 4
        %v1987 = vmax.f32 %v1526, %v1986
        %v1988 = vrot.slane %v1987, 2
        %v1989 = vmax.f32 %v1987, %v1988
        %v1990 = vrot.slane %v1989, 1
        %v1991 = vmax.f32 %v1989, %v1990
        %v1992 = vrot.slane %v1529, 4
        %v1993 = vmax.f32 %v1529, %v1992
        %v1994 = vrot.slane %v1993, 2
        %v1995 = vmax.f32 %v1993, %v1994
        %v1996 = vrot.slane %v1995, 1
        %v1997 = vmax.f32 %v1995, %v1996
        %v1998 = vrot.slane %v1532, 4
        %v1999 = vmax.f32 %v1532, %v1998
        %v2000 = vrot.slane %v1999, 2
        %v2001 = vmax.f32 %v1999, %v2000
        %v2002 = vrot.slane %v2001, 1
        %v2003 = vmax.f32 %v2001, %v2002
        %v2004 = vrot.slane %v1535, 4
        %v2005 = vmax.f32 %v1535, %v2004
        %v2006 = vrot.slane %v2005, 2
        %v2007 = vmax.f32 %v2005, %v2006
        %v2008 = vrot.slane %v2007, 1
        %v2009 = vmax.f32 %v2007, %v2008
        %v2010 = vrot.slane %v1538, 4
        %v2011 = vmax.f32 %v1538, %v2010
        %v2012 = vrot.slane %v2011, 2
        %v2013 = vmax.f32 %v2011, %v2012
        %v2014 = vrot.slane %v2013, 1
        %v2015 = vmax.f32 %v2013, %v2014
        %v2016 = vrot.slane %v1541, 4
        %v2017 = vmax.f32 %v1541, %v2016
        %v2018 = vrot.slane %v2017, 2
        %v2019 = vmax.f32 %v2017, %v2018
        %v2020 = vrot.slane %v2019, 1
        %v2021 = vmax.f32 %v2019, %v2020
        %v2022 = vrot.slane %v1544, 4
        %v2023 = vmax.f32 %v1544, %v2022
        %v2024 = vrot.slane %v2023, 2
        %v2025 = vmax.f32 %v2023, %v2024
        %v2026 = vrot.slane %v2025, 1
        %v2027 = vmax.f32 %v2025, %v2026
        %v2028 = vrot.slane %v1547, 4
        %v2029 = vmax.f32 %v1547, %v2028
        %v2030 = vrot.slane %v2029, 2
        %v2031 = vmax.f32 %v2029, %v2030
        %v2032 = vrot.slane %v2031, 1
        %v2033 = vmax.f32 %v2031, %v2032
        %v2034 = vrot.slane %v1550, 4
        %v2035 = vmax.f32 %v1550, %v2034
        %v2036 = vrot.slane %v2035, 2
        %v2037 = vmax.f32 %v2035, %v2036
        %v2038 = vrot.slane %v2037, 1
        %v2039 = vmax.f32 %v2037, %v2038
        %v2040 = vrot.slane %v1553, 4
        %v2041 = vmax.f32 %v1553, %v2040
        %v2042 = vrot.slane %v2041, 2
        %v2043 = vmax.f32 %v2041, %v2042
        %v2044 = vrot.slane %v2043, 1
        %v2045 = vmax.f32 %v2043, %v2044
        %v2046 = vrot.slane %v1556, 4
        %v2047 = vmax.f32 %v1556, %v2046
        %v2048 = vrot.slane %v2047, 2
        %v2049 = vmax.f32 %v2047, %v2048
        %v2050 = vrot.slane %v2049, 1
        %v2051 = vmax.f32 %v2049, %v2050
        %v2052 = vrot.slane %v1559, 4
        %v2053 = vmax.f32 %v1559, %v2052
        %v2054 = vrot.slane %v2053, 2
        %v2055 = vmax.f32 %v2053, %v2054
        %v2056 = vrot.slane %v2055, 1
        %v2057 = vmax.f32 %v2055, %v2056
        %v2058 = vrot.slane %v1562, 4
        %v2059 = vmax.f32 %v1562, %v2058
        %v2060 = vrot.slane %v2059, 2
        %v2061 = vmax.f32 %v2059, %v2060
        %v2062 = vrot.slane %v2061, 1
        %v2063 = vmax.f32 %v2061, %v2062
        %v2064 = vrot.slane %v1565, 4
        %v2065 = vmax.f32 %v1565, %v2064
        %v2066 = vrot.slane %v2065, 2
        %v2067 = vmax.f32 %v2065, %v2066
        %v2068 = vrot.slane %v2067, 1
        %v2069 = vmax.f32 %v2067, %v2068
        %v2070 = vrot.slane %v1568, 4
        %v2071 = vmax.f32 %v1568, %v2070
        %v2072 = vrot.slane %v2071, 2
        %v2073 = vmax.f32 %v2071, %v2072
        %v2074 = vrot.slane %v2073, 1
        %v2075 = vmax.f32 %v2073, %v2074
        %v2076 = vrot.slane %v1571, 4
        %v2077 = vmax.f32 %v1571, %v2076
        %v2078 = vrot.slane %v2077, 2
        %v2079 = vmax.f32 %v2077, %v2078
        %v2080 = vrot.slane %v2079, 1
        %v2081 = vmax.f32 %v2079, %v2080
        %v2082 = vrot.slane %v1574, 4
        %v2083 = vmax.f32 %v1574, %v2082
        %v2084 = vrot.slane %v2083, 2
        %v2085 = vmax.f32 %v2083, %v2084
        %v2086 = vrot.slane %v2085, 1
        %v2087 = vmax.f32 %v2085, %v2086
        %v2088 = vrot.slane %v1577, 4
        %v2089 = vmax.f32 %v1577, %v2088
        %v2090 = vrot.slane %v2089, 2
        %v2091 = vmax.f32 %v2089, %v2090
        %v2092 = vrot.slane %v2091, 1
        %v2093 = vmax.f32 %v2091, %v2092
        %v2094 = vrot.slane %v1580, 4
        %v2095 = vmax.f32 %v1580, %v2094
        %v2096 = vrot.slane %v2095, 2
        %v2097 = vmax.f32 %v2095, %v2096
        %v2098 = vrot.slane %v2097, 1
        %v2099 = vmax.f32 %v2097, %v2098
        %v2100 = vrot.slane %v1583, 4
        %v2101 = vmax.f32 %v1583, %v2100
        %v2102 = vrot.slane %v2101, 2
        %v2103 = vmax.f32 %v2101, %v2102
        %v2104 = vrot.slane %v2103, 1
        %v2105 = vmax.f32 %v2103, %v2104
        %v2106 = vrot.slane %v1586, 4
        %v2107 = vmax.f32 %v1586, %v2106
        %v2108 = vrot.slane %v2107, 2
        %v2109 = vmax.f32 %v2107, %v2108
        %v2110 = vrot.slane %v2109, 1
        %v2111 = vmax.f32 %v2109, %v2110
        %v2112 = vrot.slane %v1589, 4
        %v2113 = vmax.f32 %v1589, %v2112
        %v2114 = vrot.slane %v2113, 2
        %v2115 = vmax.f32 %v2113, %v2114
        %v2116 = vrot.slane %v2115, 1
        %v2117 = vmax.f32 %v2115, %v2116
        %v2118 = vrot.slane %v1592, 4
        %v2119 = vmax.f32 %v1592, %v2118
        %v2120 = vrot.slane %v2119, 2
        %v2121 = vmax.f32 %v2119, %v2120
        %v2122 = vrot.slane %v2121, 1
        %v2123 = vmax.f32 %v2121, %v2122
        %v2124 = vrot.slane %v1595, 4
        %v2125 = vmax.f32 %v1595, %v2124
        %v2126 = vrot.slane %v2125, 2
        %v2127 = vmax.f32 %v2125, %v2126
        %v2128 = vrot.slane %v2127, 1
        %v2129 = vmax.f32 %v2127, %v2128
        %v2130 = vrot.slane %v1598, 4
        %v2131 = vmax.f32 %v1598, %v2130
        %v2132 = vrot.slane %v2131, 2
        %v2133 = vmax.f32 %v2131, %v2132
        %v2134 = vrot.slane %v2133, 1
        %v2135 = vmax.f32 %v2133, %v2134
        %v2136 = vrot.slane %v1601, 4
        %v2137 = vmax.f32 %v1601, %v2136
        %v2138 = vrot.slane %v2137, 2
        %v2139 = vmax.f32 %v2137, %v2138
        %v2140 = vrot.slane %v2139, 1
        %v2141 = vmax.f32 %v2139, %v2140
        %v2142 = vrot.slane %v1604, 4
        %v2143 = vmax.f32 %v1604, %v2142
        %v2144 = vrot.slane %v2143, 2
        %v2145 = vmax.f32 %v2143, %v2144
        %v2146 = vrot.slane %v2145, 1
        %v2147 = vmax.f32 %v2145, %v2146
        %v2148 = vrot.slane %v1607, 4
        %v2149 = vmax.f32 %v1607, %v2148
        %v2150 = vrot.slane %v2149, 2
        %v2151 = vmax.f32 %v2149, %v2150
        %v2152 = vrot.slane %v2151, 1
        %v2153 = vmax.f32 %v2151, %v2152
        %v2154 = vrot.slane %v1610, 4
        %v2155 = vmax.f32 %v1610, %v2154
        %v2156 = vrot.slane %v2155, 2
        %v2157 = vmax.f32 %v2155, %v2156
        %v2158 = vrot.slane %v2157, 1
        %v2159 = vmax.f32 %v2157, %v2158
        %v2160 = vrot.slane %v1613, 4
        %v2161 = vmax.f32 %v1613, %v2160
        %v2162 = vrot.slane %v2161, 2
        %v2163 = vmax.f32 %v2161, %v2162
        %v2164 = vrot.slane %v2163, 1
        %v2165 = vmax.f32 %v2163, %v2164
        %v2166 = vrot.slane %v1616, 4
        %v2167 = vmax.f32 %v1616, %v2166
        %v2168 = vrot.slane %v2167, 2
        %v2169 = vmax.f32 %v2167, %v2168
        %v2170 = vrot.slane %v2169, 1
        %v2171 = vmax.f32 %v2169, %v2170
        %v2172 = vrot.slane %v1619, 4
        %v2173 = vmax.f32 %v1619, %v2172
        %v2174 = vrot.slane %v2173, 2
        %v2175 = vmax.f32 %v2173, %v2174
        %v2176 = vrot.slane %v2175, 1
        %v2177 = vmax.f32 %v2175, %v2176
        %v2178 = vrot.slane %v1622, 4
        %v2179 = vmax.f32 %v1622, %v2178
        %v2180 = vrot.slane %v2179, 2
        %v2181 = vmax.f32 %v2179, %v2180
        %v2182 = vrot.slane %v2181, 1
        %v2183 = vmax.f32 %v2181, %v2182
        %v2184 = vrot.slane %v1625, 4
        %v2185 = vmax.f32 %v1625, %v2184
        %v2186 = vrot.slane %v2185, 2
        %v2187 = vmax.f32 %v2185, %v2186
        %v2188 = vrot.slane %v2187, 1
        %v2189 = vmax.f32 %v2187, %v2188
        %v2190 = vrot.slane %v1628, 4
        %v2191 = vmax.f32 %v1628, %v2190
        %v2192 = vrot.slane %v2191, 2
        %v2193 = vmax.f32 %v2191, %v2192
        %v2194 = vrot.slane %v2193, 1
        %v2195 = vmax.f32 %v2193, %v2194
        %v2196 = vrot.slane %v1631, 4
        %v2197 = vmax.f32 %v1631, %v2196
        %v2198 = vrot.slane %v2197, 2
        %v2199 = vmax.f32 %v2197, %v2198
        %v2200 = vrot.slane %v2199, 1
        %v2201 = vmax.f32 %v2199, %v2200
        %v2202 = vrot.slane %v1634, 4
        %v2203 = vmax.f32 %v1634, %v2202
        %v2204 = vrot.slane %v2203, 2
        %v2205 = vmax.f32 %v2203, %v2204
        %v2206 = vrot.slane %v2205, 1
        %v2207 = vmax.f32 %v2205, %v2206
        %v2208 = vrot.slane %v1637, 4
        %v2209 = vmax.f32 %v1637, %v2208
        %v2210 = vrot.slane %v2209, 2
        %v2211 = vmax.f32 %v2209, %v2210
        %v2212 = vrot.slane %v2211, 1
        %v2213 = vmax.f32 %v2211, %v2212
        %v2214 = vrot.slane %v1640, 4
        %v2215 = vmax.f32 %v1640, %v2214
        %v2216 = vrot.slane %v2215, 2
        %v2217 = vmax.f32 %v2215, %v2216
        %v2218 = vrot.slane %v2217, 1
        %v2219 = vmax.f32 %v2217, %v2218
        %v2220 = vrot.slane %v1643, 4
        %v2221 = vmax.f32 %v1643, %v2220
        %v2222 = vrot.slane %v2221, 2
        %v2223 = vmax.f32 %v2221, %v2222
        %v2224 = vrot.slane %v2223, 1
        %v2225 = vmax.f32 %v2223, %v2224
        %v2226 = vrot.slane %v1646, 4
        %v2227 = vmax.f32 %v1646, %v2226
        %v2228 = vrot.slane %v2227, 2
        %v2229 = vmax.f32 %v2227, %v2228
        %v2230 = vrot.slane %v2229, 1
        %v2231 = vmax.f32 %v2229, %v2230
        %v2232 = vrot.slane %v1649, 4
        %v2233 = vmax.f32 %v1649, %v2232
        %v2234 = vrot.slane %v2233, 2
        %v2235 = vmax.f32 %v2233, %v2234
        %v2236 = vrot.slane %v2235, 1
        %v2237 = vmax.f32 %v2235, %v2236
        %v2238 = vrot.slane %v1652, 4
        %v2239 = vmax.f32 %v1652, %v2238
        %v2240 = vrot.slane %v2239, 2
        %v2241 = vmax.f32 %v2239, %v2240
        %v2242 = vrot.slane %v2241, 1
        %v2243 = vmax.f32 %v2241, %v2242
        %v2244 = vrot.slane %v1655, 4
        %v2245 = vmax.f32 %v1655, %v2244
        %v2246 = vrot.slane %v2245, 2
        %v2247 = vmax.f32 %v2245, %v2246
        %v2248 = vrot.slane %v2247, 1
        %v2249 = vmax.f32 %v2247, %v2248
        %v2250 = vrot.slane %v1658, 4
        %v2251 = vmax.f32 %v1658, %v2250
        %v2252 = vrot.slane %v2251, 2
        %v2253 = vmax.f32 %v2251, %v2252
        %v2254 = vrot.slane %v2253, 1
        %v2255 = vmax.f32 %v2253, %v2254
        %v2256 = vrot.slane %v1661, 4
        %v2257 = vmax.f32 %v1661, %v2256
        %v2258 = vrot.slane %v2257, 2
        %v2259 = vmax.f32 %v2257, %v2258
        %v2260 = vrot.slane %v2259, 1
        %v2261 = vmax.f32 %v2259, %v2260
        %v2262 = vrot.slane %v1664, 4
        %v2263 = vmax.f32 %v1664, %v2262
        %v2264 = vrot.slane %v2263, 2
        %v2265 = vmax.f32 %v2263, %v2264
        %v2266 = vrot.slane %v2265, 1
        %v2267 = vmax.f32 %v2265, %v2266
        %v2268 = vrot.slane %v1667, 4
        %v2269 = vmax.f32 %v1667, %v2268
        %v2270 = vrot.slane %v2269, 2
        %v2271 = vmax.f32 %v2269, %v2270
        %v2272 = vrot.slane %v2271, 1
        %v2273 = vmax.f32 %v2271, %v2272
        %v2274 = vrot.slane %v1670, 4
        %v2275 = vmax.f32 %v1670, %v2274
        %v2276 = vrot.slane %v2275, 2
        %v2277 = vmax.f32 %v2275, %v2276
        %v2278 = vrot.slane %v2277, 1
        %v2279 = vmax.f32 %v2277, %v2278
        %v2280 = vrot.slane %v1673, 4
        %v2281 = vmax.f32 %v1673, %v2280
        %v2282 = vrot.slane %v2281, 2
        %v2283 = vmax.f32 %v2281, %v2282
        %v2284 = vrot.slane %v2283, 1
        %v2285 = vmax.f32 %v2283, %v2284
        %v2286 = vrot.slane %v1676, 4
        %v2287 = vmax.f32 %v1676, %v2286
        %v2288 = vrot.slane %v2287, 2
        %v2289 = vmax.f32 %v2287, %v2288
        %v2290 = vrot.slane %v2289, 1
        %v2291 = vmax.f32 %v2289, %v2290
        %v2292 = vrot.slane %v1679, 4
        %v2293 = vmax.f32 %v1679, %v2292
        %v2294 = vrot.slane %v2293, 2
        %v2295 = vmax.f32 %v2293, %v2294
        %v2296 = vrot.slane %v2295, 1
        %v2297 = vmax.f32 %v2295, %v2296
        %v2298 = vrot.slane %v1682, 4
        %v2299 = vmax.f32 %v1682, %v2298
        %v2300 = vrot.slane %v2299, 2
        %v2301 = vmax.f32 %v2299, %v2300
        %v2302 = vrot.slane %v2301, 1
        %v2303 = vmax.f32 %v2301, %v2302
        %v2304 = vrot.slane %v1685, 4
        %v2305 = vmax.f32 %v1685, %v2304
        %v2306 = vrot.slane %v2305, 2
        %v2307 = vmax.f32 %v2305, %v2306
        %v2308 = vrot.slane %v2307, 1
        %v2309 = vmax.f32 %v2307, %v2308
        %v2310 = vrot.slane %v1688, 4
        %v2311 = vmax.f32 %v1688, %v2310
        %v2312 = vrot.slane %v2311, 2
        %v2313 = vmax.f32 %v2311, %v2312
        %v2314 = vrot.slane %v2313, 1
        %v2315 = vmax.f32 %v2313, %v2314
        %v2316 = vrot.slane %v1691, 4
        %v2317 = vmax.f32 %v1691, %v2316
        %v2318 = vrot.slane %v2317, 2
        %v2319 = vmax.f32 %v2317, %v2318
        %v2320 = vrot.slane %v2319, 1
        %v2321 = vmax.f32 %v2319, %v2320
        %v2322 = vrot.slane %v1694, 4
        %v2323 = vmax.f32 %v1694, %v2322
        %v2324 = vrot.slane %v2323, 2
        %v2325 = vmax.f32 %v2323, %v2324
        %v2326 = vrot.slane %v2325, 1
        %v2327 = vmax.f32 %v2325, %v2326
        %v2328 = vrot.slane %v1697, 4
        %v2329 = vmax.f32 %v1697, %v2328
        %v2330 = vrot.slane %v2329, 2
        %v2331 = vmax.f32 %v2329, %v2330
        %v2332 = vrot.slane %v2331, 1
        %v2333 = vmax.f32 %v2331, %v2332
        %v2334 = vrot.slane %v1700, 4
        %v2335 = vmax.f32 %v1700, %v2334
        %v2336 = vrot.slane %v2335, 2
        %v2337 = vmax.f32 %v2335, %v2336
        %v2338 = vrot.slane %v2337, 1
        %v2339 = vmax.f32 %v2337, %v2338
        %v2340 = vrot.slane %v1703, 4
        %v2341 = vmax.f32 %v1703, %v2340
        %v2342 = vrot.slane %v2341, 2
        %v2343 = vmax.f32 %v2341, %v2342
        %v2344 = vrot.slane %v2343, 1
        %v2345 = vmax.f32 %v2343, %v2344
        %v2346 = vrot.slane %v1706, 4
        %v2347 = vmax.f32 %v1706, %v2346
        %v2348 = vrot.slane %v2347, 2
        %v2349 = vmax.f32 %v2347, %v2348
        %v2350 = vrot.slane %v2349, 1
        %v2351 = vmax.f32 %v2349, %v2350
        %v2352 = vrot.slane %v1709, 4
        %v2353 = vmax.f32 %v1709, %v2352
        %v2354 = vrot.slane %v2353, 2
        %v2355 = vmax.f32 %v2353, %v2354
        %v2356 = vrot.slane %v2355, 1
        %v2357 = vmax.f32 %v2355, %v2356
        %v2358 = vrot.slane %v1712, 4
        %v2359 = vmax.f32 %v1712, %v2358
        %v2360 = vrot.slane %v2359, 2
        %v2361 = vmax.f32 %v2359, %v2360
        %v2362 = vrot.slane %v2361, 1
        %v2363 = vmax.f32 %v2361, %v2362
        %v2364 = vrot.slane %v1715, 4
        %v2365 = vmax.f32 %v1715, %v2364
        %v2366 = vrot.slane %v2365, 2
        %v2367 = vmax.f32 %v2365, %v2366
        %v2368 = vrot.slane %v2367, 1
        %v2369 = vmax.f32 %v2367, %v2368
        %v2370 = vrot.slane %v1718, 4
        %v2371 = vmax.f32 %v1718, %v2370
        %v2372 = vrot.slane %v2371, 2
        %v2373 = vmax.f32 %v2371, %v2372
        %v2374 = vrot.slane %v2373, 1
        %v2375 = vmax.f32 %v2373, %v2374
        %v2376 = vrot.slane %v1721, 4
        %v2377 = vmax.f32 %v1721, %v2376
        %v2378 = vrot.slane %v2377, 2
        %v2379 = vmax.f32 %v2377, %v2378
        %v2380 = vrot.slane %v2379, 1
        %v2381 = vmax.f32 %v2379, %v2380
        %v2382 = vrot.slane %v1724, 4
        %v2383 = vmax.f32 %v1724, %v2382
        %v2384 = vrot.slane %v2383, 2
        %v2385 = vmax.f32 %v2383, %v2384
        %v2386 = vrot.slane %v2385, 1
        %v2387 = vmax.f32 %v2385, %v2386
        %v2388 = vrot.slane %v1727, 4
        %v2389 = vmax.f32 %v1727, %v2388
        %v2390 = vrot.slane %v2389, 2
        %v2391 = vmax.f32 %v2389, %v2390
        %v2392 = vrot.slane %v2391, 1
        %v2393 = vmax.f32 %v2391, %v2392
        %v2394 = vrot.slane %v1730, 4
        %v2395 = vmax.f32 %v1730, %v2394
        %v2396 = vrot.slane %v2395, 2
        %v2397 = vmax.f32 %v2395, %v2396
        %v2398 = vrot.slane %v2397, 1
        %v2399 = vmax.f32 %v2397, %v2398
        %v2400 = vrot.slane %v1733, 4
        %v2401 = vmax.f32 %v1733, %v2400
        %v2402 = vrot.slane %v2401, 2
        %v2403 = vmax.f32 %v2401, %v2402
        %v2404 = vrot.slane %v2403, 1
        %v2405 = vmax.f32 %v2403, %v2404
        %v2406 = vrot.slane %v1736, 4
        %v2407 = vmax.f32 %v1736, %v2406
        %v2408 = vrot.slane %v2407, 2
        %v2409 = vmax.f32 %v2407, %v2408
        %v2410 = vrot.slane %v2409, 1
        %v2411 = vmax.f32 %v2409, %v2410
        %v2412 = vrot.slane %v1739, 4
        %v2413 = vmax.f32 %v1739, %v2412
        %v2414 = vrot.slane %v2413, 2
        %v2415 = vmax.f32 %v2413, %v2414
        %v2416 = vrot.slane %v2415, 1
        %v2417 = vmax.f32 %v2415, %v2416
        %v2418 = vrot.slane %v1742, 4
        %v2419 = vmax.f32 %v1742, %v2418
        %v2420 = vrot.slane %v2419, 2
        %v2421 = vmax.f32 %v2419, %v2420
        %v2422 = vrot.slane %v2421, 1
        %v2423 = vmax.f32 %v2421, %v2422
        %v2424 = vrot.slane %v1745, 4
        %v2425 = vmax.f32 %v1745, %v2424
        %v2426 = vrot.slane %v2425, 2
        %v2427 = vmax.f32 %v2425, %v2426
        %v2428 = vrot.slane %v2427, 1
        %v2429 = vmax.f32 %v2427, %v2428
        %v2430 = vrot.slane %v1748, 4
        %v2431 = vmax.f32 %v1748, %v2430
        %v2432 = vrot.slane %v2431, 2
        %v2433 = vmax.f32 %v2431, %v2432
        %v2434 = vrot.slane %v2433, 1
        %v2435 = vmax.f32 %v2433, %v2434
        %v2436 = vrot.slane %v1751, 4
        %v2437 = vmax.f32 %v1751, %v2436
        %v2438 = vrot.slane %v2437, 2
        %v2439 = vmax.f32 %v2437, %v2438
        %v2440 = vrot.slane %v2439, 1
        %v2441 = vmax.f32 %v2439, %v2440
        %v2442 = vrot.slane %v1754, 4
        %v2443 = vmax.f32 %v1754, %v2442
        %v2444 = vrot.slane %v2443, 2
        %v2445 = vmax.f32 %v2443, %v2444
        %v2446 = vrot.slane %v2445, 1
        %v2447 = vmax.f32 %v2445, %v2446
        %v2448 = vrot.slane %v1757, 4
        %v2449 = vmax.f32 %v1757, %v2448
        %v2450 = vrot.slane %v2449, 2
        %v2451 = vmax.f32 %v2449, %v2450
        %v2452 = vrot.slane %v2451, 1
        %v2453 = vmax.f32 %v2451, %v2452
        %v2454 = vrot.slane %v1760, 4
        %v2455 = vmax.f32 %v1760, %v2454
        %v2456 = vrot.slane %v2455, 2
        %v2457 = vmax.f32 %v2455, %v2456
        %v2458 = vrot.slane %v2457, 1
        %v2459 = vmax.f32 %v2457, %v2458
        %v2460 = vrot.slane %v1763, 4
        %v2461 = vmax.f32 %v1763, %v2460
        %v2462 = vrot.slane %v2461, 2
        %v2463 = vmax.f32 %v2461, %v2462
        %v2464 = vrot.slane %v2463, 1
        %v2465 = vmax.f32 %v2463, %v2464
        %v2466 = vrot.slane %v1766, 4
        %v2467 = vmax.f32 %v1766, %v2466
        %v2468 = vrot.slane %v2467, 2
        %v2469 = vmax.f32 %v2467, %v2468
        %v2470 = vrot.slane %v2469, 1
        %v2471 = vmax.f32 %v2469, %v2470
        %v2472 = vrot.slane %v1769, 4
        %v2473 = vmax.f32 %v1769, %v2472
        %v2474 = vrot.slane %v2473, 2
        %v2475 = vmax.f32 %v2473, %v2474
        %v2476 = vrot.slane %v2475, 1
        %v2477 = vmax.f32 %v2475, %v2476
        %v2478 = vrot.slane %v1772, 4
        %v2479 = vmax.f32 %v1772, %v2478
        %v2480 = vrot.slane %v2479, 2
        %v2481 = vmax.f32 %v2479, %v2480
        %v2482 = vrot.slane %v2481, 1
        %v2483 = vmax.f32 %v2481, %v2482
        %v2484 = vrot.slane %v1775, 4
        %v2485 = vmax.f32 %v1775, %v2484
        %v2486 = vrot.slane %v2485, 2
        %v2487 = vmax.f32 %v2485, %v2486
        %v2488 = vrot.slane %v2487, 1
        %v2489 = vmax.f32 %v2487, %v2488
        %v2490 = vrot.slane %v1778, 4
        %v2491 = vmax.f32 %v1778, %v2490
        %v2492 = vrot.slane %v2491, 2
        %v2493 = vmax.f32 %v2491, %v2492
        %v2494 = vrot.slane %v2493, 1
        %v2495 = vmax.f32 %v2493, %v2494
        %v2496 = vrot.slane %v1781, 4
        %v2497 = vmax.f32 %v1781, %v2496
        %v2498 = vrot.slane %v2497, 2
        %v2499 = vmax.f32 %v2497, %v2498
        %v2500 = vrot.slane %v2499, 1
        %v2501 = vmax.f32 %v2499, %v2500
        %v2502 = vrot.slane %v1784, 4
        %v2503 = vmax.f32 %v1784, %v2502
        %v2504 = vrot.slane %v2503, 2
        %v2505 = vmax.f32 %v2503, %v2504
        %v2506 = vrot.slane %v2505, 1
        %v2507 = vmax.f32 %v2505, %v2506
        %v2508 = vrot.slane %v1787, 4
        %v2509 = vmax.f32 %v1787, %v2508
        %v2510 = vrot.slane %v2509, 2
        %v2511 = vmax.f32 %v2509, %v2510
        %v2512 = vrot.slane %v2511, 1
        %v2513 = vmax.f32 %v2511, %v2512
        %v2514 = vrot.slane %v1790, 4
        %v2515 = vmax.f32 %v1790, %v2514
        %v2516 = vrot.slane %v2515, 2
        %v2517 = vmax.f32 %v2515, %v2516
        %v2518 = vrot.slane %v2517, 1
        %v2519 = vmax.f32 %v2517, %v2518
        %v2520 = vrot.slane %v1793, 4
        %v2521 = vmax.f32 %v1793, %v2520
        %v2522 = vrot.slane %v2521, 2
        %v2523 = vmax.f32 %v2521, %v2522
        %v2524 = vrot.slane %v2523, 1
        %v2525 = vmax.f32 %v2523, %v2524
        %v2526 = vrot.slane %v1796, 4
        %v2527 = vmax.f32 %v1796, %v2526
        %v2528 = vrot.slane %v2527, 2
        %v2529 = vmax.f32 %v2527, %v2528
        %v2530 = vrot.slane %v2529, 1
        %v2531 = vmax.f32 %v2529, %v2530
        %v2532 = vrot.slane %v1799, 4
        %v2533 = vmax.f32 %v1799, %v2532
        %v2534 = vrot.slane %v2533, 2
        %v2535 = vmax.f32 %v2533, %v2534
        %v2536 = vrot.slane %v2535, 1
        %v2537 = vmax.f32 %v2535, %v2536
        %v2538 = vrot.slane %v1802, 4
        %v2539 = vmax.f32 %v1802, %v2538
        %v2540 = vrot.slane %v2539, 2
        %v2541 = vmax.f32 %v2539, %v2540
        %v2542 = vrot.slane %v2541, 1
        %v2543 = vmax.f32 %v2541, %v2542
        %v2544 = vrot.slane %v1805, 4
        %v2545 = vmax.f32 %v1805, %v2544
        %v2546 = vrot.slane %v2545, 2
        %v2547 = vmax.f32 %v2545, %v2546
        %v2548 = vrot.slane %v2547, 1
        %v2549 = vmax.f32 %v2547, %v2548
        %v2550 = vrot.slane %v1808, 4
        %v2551 = vmax.f32 %v1808, %v2550
        %v2552 = vrot.slane %v2551, 2
        %v2553 = vmax.f32 %v2551, %v2552
        %v2554 = vrot.slane %v2553, 1
        %v2555 = vmax.f32 %v2553, %v2554
        %v2556 = vrot.slane %v1811, 4
        %v2557 = vmax.f32 %v1811, %v2556
        %v2558 = vrot.slane %v2557, 2
        %v2559 = vmax.f32 %v2557, %v2558
        %v2560 = vrot.slane %v2559, 1
        %v2561 = vmax.f32 %v2559, %v2560
        %v2562 = vrot.slane %v1814, 4
        %v2563 = vmax.f32 %v1814, %v2562
        %v2564 = vrot.slane %v2563, 2
        %v2565 = vmax.f32 %v2563, %v2564
        %v2566 = vrot.slane %v2565, 1
        %v2567 = vmax.f32 %v2565, %v2566
        %v2568 = vrot.slane %v1817, 4
        %v2569 = vmax.f32 %v1817, %v2568
        %v2570 = vrot.slane %v2569, 2
        %v2571 = vmax.f32 %v2569, %v2570
        %v2572 = vrot.slane %v2571, 1
        %v2573 = vmax.f32 %v2571, %v2572
        %v2574 = vrot.slane %v1820, 4
        %v2575 = vmax.f32 %v1820, %v2574
        %v2576 = vrot.slane %v2575, 2
        %v2577 = vmax.f32 %v2575, %v2576
        %v2578 = vrot.slane %v2577, 1
        %v2579 = vmax.f32 %v2577, %v2578
        %v2580 = vrot.slane %v1823, 4
        %v2581 = vmax.f32 %v1823, %v2580
        %v2582 = vrot.slane %v2581, 2
        %v2583 = vmax.f32 %v2581, %v2582
        %v2584 = vrot.slane %v2583, 1
        %v2585 = vmax.f32 %v2583, %v2584
        %v2586 = vrot.slane %v1826, 4
        %v2587 = vmax.f32 %v1826, %v2586
        %v2588 = vrot.slane %v2587, 2
        %v2589 = vmax.f32 %v2587, %v2588
        %v2590 = vrot.slane %v2589, 1
        %v2591 = vmax.f32 %v2589, %v2590
        %v2592 = vrot.slane %v1829, 4
        %v2593 = vmax.f32 %v1829, %v2592
        %v2594 = vrot.slane %v2593, 2
        %v2595 = vmax.f32 %v2593, %v2594
        %v2596 = vrot.slane %v2595, 1
        %v2597 = vmax.f32 %v2595, %v2596
        %v2598 = vsub.f32 %v1448, %v1835
        %v2599 = vsub.f32 %v1451, %v1841
        %v2600 = vsub.f32 %v1454, %v1847
        %v2601 = vsub.f32 %v1457, %v1853
        %v2602 = vsub.f32 %v1460, %v1859
        %v2603 = vsub.f32 %v1463, %v1865
        %v2604 = vsub.f32 %v1466, %v1871
        %v2605 = vsub.f32 %v1469, %v1877
        %v2606 = vsub.f32 %v1472, %v1883
        %v2607 = vsub.f32 %v1475, %v1889
        %v2608 = vsub.f32 %v1478, %v1895
        %v2609 = vsub.f32 %v1481, %v1901
        %v2610 = vsub.f32 %v1484, %v1907
        %v2611 = vsub.f32 %v1487, %v1913
        %v2612 = vsub.f32 %v1490, %v1919
        %v2613 = vsub.f32 %v1493, %v1925
        %v2614 = vsub.f32 %v1496, %v1931
        %v2615 = vsub.f32 %v1499, %v1937
        %v2616 = vsub.f32 %v1502, %v1943
        %v2617 = vsub.f32 %v1505, %v1949
        %v2618 = vsub.f32 %v1508, %v1955
        %v2619 = vsub.f32 %v1511, %v1961
        %v2620 = vsub.f32 %v1514, %v1967
        %v2621 = vsub.f32 %v1517, %v1973
        %v2622 = vsub.f32 %v1520, %v1979
        %v2623 = vsub.f32 %v1523, %v1985
        %v2624 = vsub.f32 %v1526, %v1991
        %v2625 = vsub.f32 %v1529, %v1997
        %v2626 = vsub.f32 %v1532, %v2003
        %v2627 = vsub.f32 %v1535, %v2009
        %v2628 = vsub.f32 %v1538, %v2015
        %v2629 = vsub.f32 %v1541, %v2021
        %v2630 = vsub.f32 %v1544, %v2027
        %v2631 = vsub.f32 %v1547, %v2033
        %v2632 = vsub.f32 %v1550, %v2039
        %v2633 = vsub.f32 %v1553, %v2045
        %v2634 = vsub.f32 %v1556, %v2051
        %v2635 = vsub.f32 %v1559, %v2057
        %v2636 = vsub.f32 %v1562, %v2063
        %v2637 = vsub.f32 %v1565, %v2069
        %v2638 = vsub.f32 %v1568, %v2075
        %v2639 = vsub.f32 %v1571, %v2081
        %v2640 = vsub.f32 %v1574, %v2087
        %v2641 = vsub.f32 %v1577, %v2093
        %v2642 = vsub.f32 %v1580, %v2099
        %v2643 = vsub.f32 %v1583, %v2105
        %v2644 = vsub.f32 %v1586, %v2111
        %v2645 = vsub.f32 %v1589, %v2117
        %v2646 = vsub.f32 %v1592, %v2123
        %v2647 = vsub.f32 %v1595, %v2129
        %v2648 = vsub.f32 %v1598, %v2135
        %v2649 = vsub.f32 %v1601, %v2141
        %v2650 = vsub.f32 %v1604, %v2147
        %v2651 = vsub.f32 %v1607, %v2153
        %v2652 = vsub.f32 %v1610, %v2159
        %v2653 = vsub.f32 %v1613, %v2165
        %v2654 = vsub.f32 %v1616, %v2171
        %v2655 = vsub.f32 %v1619, %v2177
        %v2656 = vsub.f32 %v1622, %v2183
        %v2657 = vsub.f32 %v1625, %v2189
        %v2658 = vsub.f32 %v1628, %v2195
        %v2659 = vsub.f32 %v1631, %v2201
        %v2660 = vsub.f32 %v1634, %v2207
        %v2661 = vsub.f32 %v1637, %v2213
        %v2662 = vsub.f32 %v1640, %v2219
        %v2663 = vsub.f32 %v1643, %v2225
        %v2664 = vsub.f32 %v1646, %v2231
        %v2665 = vsub.f32 %v1649, %v2237
        %v2666 = vsub.f32 %v1652, %v2243
        %v2667 = vsub.f32 %v1655, %v2249
        %v2668 = vsub.f32 %v1658, %v2255
        %v2669 = vsub.f32 %v1661, %v2261
        %v2670 = vsub.f32 %v1664, %v2267
        %v2671 = vsub.f32 %v1667, %v2273
        %v2672 = vsub.f32 %v1670, %v2279
        %v2673 = vsub.f32 %v1673, %v2285
        %v2674 = vsub.f32 %v1676, %v2291
        %v2675 = vsub.f32 %v1679, %v2297
        %v2676 = vsub.f32 %v1682, %v2303
        %v2677 = vsub.f32 %v1685, %v2309
        %v2678 = vsub.f32 %v1688, %v2315
        %v2679 = vsub.f32 %v1691, %v2321
        %v2680 = vsub.f32 %v1694, %v2327
        %v2681 = vsub.f32 %v1697, %v2333
        %v2682 = vsub.f32 %v1700, %v2339
        %v2683 = vsub.f32 %v1703, %v2345
        %v2684 = vsub.f32 %v1706, %v2351
        %v2685 = vsub.f32 %v1709, %v2357
        %v2686 = vsub.f32 %v1712, %v2363
        %v2687 = vsub.f32 %v1715, %v2369
        %v2688 = vsub.f32 %v1718, %v2375
        %v2689 = vsub.f32 %v1721, %v2381
        %v2690 = vsub.f32 %v1724, %v2387
        %v2691 = vsub.f32 %v1727, %v2393
        %v2692 = vsub.f32 %v1730, %v2399
        %v2693 = vsub.f32 %v1733, %v2405
        %v2694 = vsub.f32 %v1736, %v2411
        %v2695 = vsub.f32 %v1739, %v2417
        %v2696 = vsub.f32 %v1742, %v2423
        %v2697 = vsub.f32 %v1745, %v2429
        %v2698 = vsub.f32 %v1748, %v2435
        %v2699 = vsub.f32 %v1751, %v2441
        %v2700 = vsub.f32 %v1754, %v2447
        %v2701 = vsub.f32 %v1757, %v2453
        %v2702 = vsub.f32 %v1760, %v2459
        %v2703 = vsub.f32 %v1763, %v2465
        %v2704 = vsub.f32 %v1766, %v2471
        %v2705 = vsub.f32 %v1769, %v2477
        %v2706 = vsub.f32 %v1772, %v2483
        %v2707 = vsub.f32 %v1775, %v2489
        %v2708 = vsub.f32 %v1778, %v2495
        %v2709 = vsub.f32 %v1781, %v2501
        %v2710 = vsub.f32 %v1784, %v2507
        %v2711 = vsub.f32 %v1787, %v2513
        %v2712 = vsub.f32 %v1790, %v2519
        %v2713 = vsub.f32 %v1793, %v2525
        %v2714 = vsub.f32 %v1796, %v2531
        %v2715 = vsub.f32 %v1799, %v2537
        %v2716 = vsub.f32 %v1802, %v2543
        %v2717 = vsub.f32 %v1805, %v2549
        %v2718 = vsub.f32 %v1808, %v2555
        %v2719 = vsub.f32 %v1811, %v2561
        %v2720 = vsub.f32 %v1814, %v2567
        %v2721 = vsub.f32 %v1817, %v2573
        %v2722 = vsub.f32 %v1820, %v2579
        %v2723 = vsub.f32 %v1823, %v2585
        %v2724 = vsub.f32 %v1826, %v2591
        %v2725 = vsub.f32 %v1829, %v2597
        %v2726 = vmul.f32 %v2598, 1.442695
        %v2727 = vpow.pop %v2726
        %v2728 = vmul.f32 %v2599, 1.442695
        %v2729 = vpow.pop %v2728
        %v2730 = vmul.f32 %v2600, 1.442695
        %v2731 = vpow.pop %v2730
        %v2732 = vmul.f32 %v2601, 1.442695
        %v2733 = vpow.pop %v2732
        %v2734 = vmul.f32 %v2602, 1.442695
        %v2735 = vpow.pop %v2734
        %v2736 = vmul.f32 %v2603, 1.442695
        %v2737 = vpow.pop %v2736
        %v2738 = vmul.f32 %v2604, 1.442695
        %v2739 = vpow.pop %v2738
        %v2740 = vmul.f32 %v2605, 1.442695
        %v2741 = vpow.pop %v2740
        %v2742 = vmul.f32 %v2606, 1.442695
        %v2743 = vpow.pop %v2742
        %v2744 = vmul.f32 %v2607, 1.442695
        %v2745 = vpow.pop %v2744
        %v2746 = vmul.f32 %v2608, 1.442695
        %v2747 = vpow.pop %v2746
        %v2748 = vmul.f32 %v2609, 1.442695
        %v2749 = vpow.pop %v2748
        %v2750 = vmul.f32 %v2610, 1.442695
        %v2751 = vpow.pop %v2750
        %v2752 = vmul.f32 %v2611, 1.442695
        %v2753 = vpow.pop %v2752
        %v2754 = vmul.f32 %v2612, 1.442695
        %v2755 = vpow.pop %v2754
        %v2756 = vmul.f32 %v2613, 1.442695
        %v2757 = vpow.pop %v2756
        %v2758 = vmul.f32 %v2614, 1.442695
        %v2759 = vpow.pop %v2758
        %v2760 = vmul.f32 %v2615, 1.442695
        %v2761 = vpow.pop %v2760
        %v2762 = vmul.f32 %v2616, 1.442695
        %v2763 = vpow.pop %v2762
        %v2764 = vmul.f32 %v2617, 1.442695
        %v2765 = vpow.pop %v2764
        %v2766 = vmul.f32 %v2618, 1.442695
        %v2767 = vpow.pop %v2766
        %v2768 = vmul.f32 %v2619, 1.442695
        %v2769 = vpow.pop %v2768
        %v2770 = vmul.f32 %v2620, 1.442695
        %v2771 = vpow.pop %v2770
        %v2772 = vmul.f32 %v2621, 1.442695
        %v2773 = vpow.pop %v2772
        %v2774 = vmul.f32 %v2622, 1.442695
        %v2775 = vpow.pop %v2774
        %v2776 = vmul.f32 %v2623, 1.442695
        %v2777 = vpow.pop %v2776
        %v2778 = vmul.f32 %v2624, 1.442695
        %v2779 = vpow.pop %v2778
        %v2780 = vmul.f32 %v2625, 1.442695
        %v2781 = vpow.pop %v2780
        %v2782 = vmul.f32 %v2626, 1.442695
        %v2783 = vpow.pop %v2782
        %v2784 = vmul.f32 %v2627, 1.442695
        %v2785 = vpow.pop %v2784
        %v2786 = vmul.f32 %v2628, 1.442695
        %v2787 = vpow.pop %v2786
        %v2788 = vmul.f32 %v2629, 1.442695
        %v2789 = vpow.pop %v2788
        %v2790 = vmul.f32 %v2630, 1.442695
        %v2791 = vpow.pop %v2790
        %v2792 = vmul.f32 %v2631, 1.442695
        %v2793 = vpow.pop %v2792
        %v2794 = vmul.f32 %v2632, 1.442695
        %v2795 = vpow.pop %v2794
        %v2796 = vmul.f32 %v2633, 1.442695
        %v2797 = vpow.pop %v2796
        %v2798 = vmul.f32 %v2634, 1.442695
        %v2799 = vpow.pop %v2798
        %v2800 = vmul.f32 %v2635, 1.442695
        %v2801 = vpow.pop %v2800
        %v2802 = vmul.f32 %v2636, 1.442695
        %v2803 = vpow.pop %v2802
        %v2804 = vmul.f32 %v2637, 1.442695
        %v2805 = vpow.pop %v2804
        %v2806 = vmul.f32 %v2638, 1.442695
        %v2807 = vpow.pop %v2806
        %v2808 = vmul.f32 %v2639, 1.442695
        %v2809 = vpow.pop %v2808
        %v2810 = vmul.f32 %v2640, 1.442695
        %v2811 = vpow.pop %v2810
        %v2812 = vmul.f32 %v2641, 1.442695
        %v2813 = vpow.pop %v2812
        %v2814 = vmul.f32 %v2642, 1.442695
        %v2815 = vpow.pop %v2814
        %v2816 = vmul.f32 %v2643, 1.442695
        %v2817 = vpow.pop %v2816
        %v2818 = vmul.f32 %v2644, 1.442695
        %v2819 = vpow.pop %v2818
        %v2820 = vmul.f32 %v2645, 1.442695
        %v2821 = vpow.pop %v2820
        %v2822 = vmul.f32 %v2646, 1.442695
        %v2823 = vpow.pop %v2822
        %v2824 = vmul.f32 %v2647, 1.442695
        %v2825 = vpow.pop %v2824
        %v2826 = vmul.f32 %v2648, 1.442695
        %v2827 = vpow.pop %v2826
        %v2828 = vmul.f32 %v2649, 1.442695
        %v2829 = vpow.pop %v2828
        %v2830 = vmul.f32 %v2650, 1.442695
        %v2831 = vpow.pop %v2830
        %v2832 = vmul.f32 %v2651, 1.442695
        %v2833 = vpow.pop %v2832
        %v2834 = vmul.f32 %v2652, 1.442695
        %v2835 = vpow.pop %v2834
        %v2836 = vmul.f32 %v2653, 1.442695
        %v2837 = vpow.pop %v2836
        %v2838 = vmul.f32 %v2654, 1.442695
        %v2839 = vpow.pop %v2838
        %v2840 = vmul.f32 %v2655, 1.442695
        %v2841 = vpow.pop %v2840
        %v2842 = vmul.f32 %v2656, 1.442695
        %v2843 = vpow.pop %v2842
        %v2844 = vmul.f32 %v2657, 1.442695
        %v2845 = vpow.pop %v2844
        %v2846 = vmul.f32 %v2658, 1.442695
        %v2847 = vpow.pop %v2846
        %v2848 = vmul.f32 %v2659, 1.442695
        %v2849 = vpow.pop %v2848
        %v2850 = vmul.f32 %v2660, 1.442695
        %v2851 = vpow.pop %v2850
        %v2852 = vmul.f32 %v2661, 1.442695
        %v2853 = vpow.pop %v2852
        %v2854 = vmul.f32 %v2662, 1.442695
        %v2855 = vpow.pop %v2854
        %v2856 = vmul.f32 %v2663, 1.442695
        %v2857 = vpow.pop %v2856
        %v2858 = vmul.f32 %v2664, 1.442695
        %v2859 = vpow.pop %v2858
        %v2860 = vmul.f32 %v2665, 1.442695
        %v2861 = vpow.pop %v2860
        %v2862 = vmul.f32 %v2666, 1.442695
        %v2863 = vpow.pop %v2862
        %v2864 = vmul.f32 %v2667, 1.442695
        %v2865 = vpow.pop %v2864
        %v2866 = vmul.f32 %v2668, 1.442695
        %v2867 = vpow.pop %v2866
        %v2868 = vmul.f32 %v2669, 1.442695
        %v2869 = vpow.pop %v2868
        %v2870 = vmul.f32 %v2670, 1.442695
        %v2871 = vpow.pop %v2870
        %v2872 = vmul.f32 %v2671, 1.442695
        %v2873 = vpow.pop %v2872
        %v2874 = vmul.f32 %v2672, 1.442695
        %v2875 = vpow.pop %v2874
        %v2876 = vmul.f32 %v2673, 1.442695
        %v2877 = vpow.pop %v2876
        %v2878 = vmul.f32 %v2674, 1.442695
        %v2879 = vpow.pop %v2878
        %v2880 = vmul.f32 %v2675, 1.442695
        %v2881 = vpow.pop %v2880
        %v2882 = vmul.f32 %v2676, 1.442695
        %v2883 = vpow.pop %v2882
        %v2884 = vmul.f32 %v2677, 1.442695
        %v2885 = vpow.pop %v2884
        %v2886 = vmul.f32 %v2678, 1.442695
        %v2887 = vpow.pop %v2886
        %v2888 = vmul.f32 %v2679, 1.442695
        %v2889 = vpow.pop %v2888
        %v2890 = vmul.f32 %v2680, 1.442695
        %v2891 = vpow.pop %v2890
        %v2892 = vmul.f32 %v2681, 1.442695
        %v2893 = vpow.pop %v2892
        %v2894 = vmul.f32 %v2682, 1.442695
        %v2895 = vpow.pop %v2894
        %v2896 = vmul.f32 %v2683, 1.442695
        %v2897 = vpow.pop %v2896
        %v2898 = vmul.f32 %v2684, 1.442695
        %v2899 = vpow.pop %v2898
        %v2900 = vmul.f32 %v2685, 1.442695
        %v2901 = vpow.pop %v2900
        %v2902 = vmul.f32 %v2686, 1.442695
        %v2903 = vpow.pop %v2902
        %v2904 = vmul.f32 %v2687, 1.442695
        %v2905 = vpow.pop %v2904
        %v2906 = vmul.f32 %v2688, 1.442695
        %v2907 = vpow.pop %v2906
        %v2908 = vmul.f32 %v2689, 1.442695
        %v2909 = vpow.pop %v2908
        %v2910 = vmul.f32 %v2690, 1.442695
        %v2911 = vpow.pop %v2910
        %v2912 = vmul.f32 %v2691, 1.442695
        %v2913 = vpow.pop %v2912
        %v2914 = vmul.f32 %v2692, 1.442695
        %v2915 = vpow.pop %v2914
        %v2916 = vmul.f32 %v2693, 1.442695
        %v2917 = vpow.pop %v2916
        %v2918 = vmul.f32 %v2694, 1.442695
        %v2919 = vpow.pop %v2918
        %v2920 = vmul.f32 %v2695, 1.442695
        %v2921 = vpow.pop %v2920
        %v2922 = vmul.f32 %v2696, 1.442695
        %v2923 = vpow.pop %v2922
        %v2924 = vmul.f32 %v2697, 1.442695
        %v2925 = vpow.pop %v2924
        %v2926 = vmul.f32 %v2698, 1.442695
        %v2927 = vpow.pop %v2926
        %v2928 = vmul.f32 %v2699, 1.442695
        %v2929 = vpow.pop %v2928
        %v2930 = vmul.f32 %v2700, 1.442695
        %v2931 = vpow.pop %v2930
        %v2932 = vmul.f32 %v2701, 1.442695
        %v2933 = vpow.pop %v2932
        %v2934 = vmul.f32 %v2702, 1.442695
        %v2935 = vpow.pop %v2934
        %v2936 = vmul.f32 %v2703, 1.442695
        %v2937 = vpow.pop %v2936
        %v2938 = vmul.f32 %v2704, 1.442695
        %v2939 = vpow.pop %v2938
        %v2940 = vmul.f32 %v2705, 1.442695
        %v2941 = vpow.pop %v2940
        %v2942 = vmul.f32 %v2706, 1.442695
        %v2943 = vpow.pop %v2942
        %v2944 = vmul.f32 %v2707, 1.442695
        %v2945 = vpow.pop %v2944
        %v2946 = vmul.f32 %v2708, 1.442695
        %v2947 = vpow.pop %v2946
        %v2948 = vmul.f32 %v2709, 1.442695
        %v2949 = vpow.pop %v2948
        %v2950 = vmul.f32 %v2710, 1.442695
        %v2951 = vpow.pop %v2950
        %v2952 = vmul.f32 %v2711, 1.442695
        %v2953 = vpow.pop %v2952
        %v2954 = vmul.f32 %v2712, 1.442695
        %v2955 = vpow.pop %v2954
        %v2956 = vmul.f32 %v2713, 1.442695
        %v2957 = vpow.pop %v2956
        %v2958 = vmul.f32 %v2714, 1.442695
        %v2959 = vpow.pop %v2958
        %v2960 = vmul.f32 %v2715, 1.442695
        %v2961 = vpow.pop %v2960
        %v2962 = vmul.f32 %v2716, 1.442695
        %v2963 = vpow.pop %v2962
        %v2964 = vmul.f32 %v2717, 1.442695
        %v2965 = vpow.pop %v2964
        %v2966 = vmul.f32 %v2718, 1.442695
        %v2967 = vpow.pop %v2966
        %v2968 = vmul.f32 %v2719, 1.442695
        %v2969 = vpow.pop %v2968
        %v2970 = vmul.f32 %v2720, 1.442695
        %v2971 = vpow.pop %v2970
        %v2972 = vmul.f32 %v2721, 1.442695
        %v2973 = vpow.pop %v2972
        %v2974 = vmul.f32 %v2722, 1.442695
        %v2975 = vpow.pop %v2974
        %v2976 = vmul.f32 %v2723, 1.442695
        %v2977 = vpow.pop %v2976
        %v2978 = vmul.f32 %v2724, 1.442695
        %v2979 = vpow.pop %v2978
        %v2980 = vmul.f32 %v2725, 1.442695
        %v2981 = vpow.pop %v2980
        %v2982 = vrot.slane %v2727, 4
        %v2983 = vadd.f32 %v2727, %v2982
        %v2984 = vrot.slane %v2983, 2
        %v2985 = vadd.f32 %v2983, %v2984
        %v2986 = vrot.slane %v2985, 1
        %v2987 = vadd.f32 %v2985, %v2986
        %v2988 = vrot.slane %v2729, 4
        %v2989 = vadd.f32 %v2729, %v2988
        %v2990 = vrot.slane %v2989, 2
        %v2991 = vadd.f32 %v2989, %v2990
        %v2992 = vrot.slane %v2991, 1
        %v2993 = vadd.f32 %v2991, %v2992
        %v2994 = vrot.slane %v2731, 4
        %v2995 = vadd.f32 %v2731, %v2994
        %v2996 = vrot.slane %v2995, 2
        %v2997 = vadd.f32 %v2995, %v2996
        %v2998 = vrot.slane %v2997, 1
        %v2999 = vadd.f32 %v2997, %v2998
        %v3000 = vrot.slane %v2733, 4
        %v3001 = vadd.f32 %v2733, %v3000
        %v3002 = vrot.slane %v3001, 2
        %v3003 = vadd.f32 %v3001, %v3002
        %v3004 = vrot.slane %v3003, 1
        %v3005 = vadd.f32 %v3003, %v3004
        %v3006 = vrot.slane %v2735, 4
        %v3007 = vadd.f32 %v2735, %v3006
        %v3008 = vrot.slane %v3007, 2
        %v3009 = vadd.f32 %v3007, %v3008
        %v3010 = vrot.slane %v3009, 1
        %v3011 = vadd.f32 %v3009, %v3010
        %v3012 = vrot.slane %v2737, 4
        %v3013 = vadd.f32 %v2737, %v3012
        %v3014 = vrot.slane %v3013, 2
        %v3015 = vadd.f32 %v3013, %v3014
        %v3016 = vrot.slane %v3015, 1
        %v3017 = vadd.f32 %v3015, %v3016
        %v3018 = vrot.slane %v2739, 4
        %v3019 = vadd.f32 %v2739, %v3018
        %v3020 = vrot.slane %v3019, 2
        %v3021 = vadd.f32 %v3019, %v3020
        %v3022 = vrot.slane %v3021, 1
        %v3023 = vadd.f32 %v3021, %v3022
        %v3024 = vrot.slane %v2741, 4
        %v3025 = vadd.f32 %v2741, %v3024
        %v3026 = vrot.slane %v3025, 2
        %v3027 = vadd.f32 %v3025, %v3026
        %v3028 = vrot.slane %v3027, 1
        %v3029 = vadd.f32 %v3027, %v3028
        %v3030 = vrot.slane %v2743, 4
        %v3031 = vadd.f32 %v2743, %v3030
        %v3032 = vrot.slane %v3031, 2
        %v3033 = vadd.f32 %v3031, %v3032
        %v3034 = vrot.slane %v3033, 1
        %v3035 = vadd.f32 %v3033, %v3034
        %v3036 = vrot.slane %v2745, 4
        %v3037 = vadd.f32 %v2745, %v3036
        %v3038 = vrot.slane %v3037, 2
        %v3039 = vadd.f32 %v3037, %v3038
        %v3040 = vrot.slane %v3039, 1
        %v3041 = vadd.f32 %v3039, %v3040
        %v3042 = vrot.slane %v2747, 4
        %v3043 = vadd.f32 %v2747, %v3042
        %v3044 = vrot.slane %v3043, 2
        %v3045 = vadd.f32 %v3043, %v3044
        %v3046 = vrot.slane %v3045, 1
        %v3047 = vadd.f32 %v3045, %v3046
        %v3048 = vrot.slane %v2749, 4
        %v3049 = vadd.f32 %v2749, %v3048
        %v3050 = vrot.slane %v3049, 2
        %v3051 = vadd.f32 %v3049, %v3050
        %v3052 = vrot.slane %v3051, 1
        %v3053 = vadd.f32 %v3051, %v3052
        %v3054 = vrot.slane %v2751, 4
        %v3055 = vadd.f32 %v2751, %v3054
        %v3056 = vrot.slane %v3055, 2
        %v3057 = vadd.f32 %v3055, %v3056
        %v3058 = vrot.slane %v3057, 1
        %v3059 = vadd.f32 %v3057, %v3058
        %v3060 = vrot.slane %v2753, 4
        %v3061 = vadd.f32 %v2753, %v3060
        %v3062 = vrot.slane %v3061, 2
        %v3063 = vadd.f32 %v3061, %v3062
        %v3064 = vrot.slane %v3063, 1
        %v3065 = vadd.f32 %v3063, %v3064
        %v3066 = vrot.slane %v2755, 4
        %v3067 = vadd.f32 %v2755, %v3066
        %v3068 = vrot.slane %v3067, 2
        %v3069 = vadd.f32 %v3067, %v3068
        %v3070 = vrot.slane %v3069, 1
        %v3071 = vadd.f32 %v3069, %v3070
        %v3072 = vrot.slane %v2757, 4
        %v3073 = vadd.f32 %v2757, %v3072
        %v3074 = vrot.slane %v3073, 2
        %v3075 = vadd.f32 %v3073, %v3074
        %v3076 = vrot.slane %v3075, 1
        %v3077 = vadd.f32 %v3075, %v3076
        %v3078 = vrot.slane %v2759, 4
        %v3079 = vadd.f32 %v2759, %v3078
        %v3080 = vrot.slane %v3079, 2
        %v3081 = vadd.f32 %v3079, %v3080
        %v3082 = vrot.slane %v3081, 1
        %v3083 = vadd.f32 %v3081, %v3082
        %v3084 = vrot.slane %v2761, 4
        %v3085 = vadd.f32 %v2761, %v3084
        %v3086 = vrot.slane %v3085, 2
        %v3087 = vadd.f32 %v3085, %v3086
        %v3088 = vrot.slane %v3087, 1
        %v3089 = vadd.f32 %v3087, %v3088
        %v3090 = vrot.slane %v2763, 4
        %v3091 = vadd.f32 %v2763, %v3090
        %v3092 = vrot.slane %v3091, 2
        %v3093 = vadd.f32 %v3091, %v3092
        %v3094 = vrot.slane %v3093, 1
        %v3095 = vadd.f32 %v3093, %v3094
        %v3096 = vrot.slane %v2765, 4
        %v3097 = vadd.f32 %v2765, %v3096
        %v3098 = vrot.slane %v3097, 2
        %v3099 = vadd.f32 %v3097, %v3098
        %v3100 = vrot.slane %v3099, 1
        %v3101 = vadd.f32 %v3099, %v3100
        %v3102 = vrot.slane %v2767, 4
        %v3103 = vadd.f32 %v2767, %v3102
        %v3104 = vrot.slane %v3103, 2
        %v3105 = vadd.f32 %v3103, %v3104
        %v3106 = vrot.slane %v3105, 1
        %v3107 = vadd.f32 %v3105, %v3106
        %v3108 = vrot.slane %v2769, 4
        %v3109 = vadd.f32 %v2769, %v3108
        %v3110 = vrot.slane %v3109, 2
        %v3111 = vadd.f32 %v3109, %v3110
        %v3112 = vrot.slane %v3111, 1
        %v3113 = vadd.f32 %v3111, %v3112
        %v3114 = vrot.slane %v2771, 4
        %v3115 = vadd.f32 %v2771, %v3114
        %v3116 = vrot.slane %v3115, 2
        %v3117 = vadd.f32 %v3115, %v3116
        %v3118 = vrot.slane %v3117, 1
        %v3119 = vadd.f32 %v3117, %v3118
        %v3120 = vrot.slane %v2773, 4
        %v3121 = vadd.f32 %v2773, %v3120
        %v3122 = vrot.slane %v3121, 2
        %v3123 = vadd.f32 %v3121, %v3122
        %v3124 = vrot.slane %v3123, 1
        %v3125 = vadd.f32 %v3123, %v3124
        %v3126 = vrot.slane %v2775, 4
        %v3127 = vadd.f32 %v2775, %v3126
        %v3128 = vrot.slane %v3127, 2
        %v3129 = vadd.f32 %v3127, %v3128
        %v3130 = vrot.slane %v3129, 1
        %v3131 = vadd.f32 %v3129, %v3130
        %v3132 = vrot.slane %v2777, 4
        %v3133 = vadd.f32 %v2777, %v3132
        %v3134 = vrot.slane %v3133, 2
        %v3135 = vadd.f32 %v3133, %v3134
        %v3136 = vrot.slane %v3135, 1
        %v3137 = vadd.f32 %v3135, %v3136
        %v3138 = vrot.slane %v2779, 4
        %v3139 = vadd.f32 %v2779, %v3138
        %v3140 = vrot.slane %v3139, 2
        %v3141 = vadd.f32 %v3139, %v3140
        %v3142 = vrot.slane %v3141, 1
        %v3143 = vadd.f32 %v3141, %v3142
        %v3144 = vrot.slane %v2781, 4
        %v3145 = vadd.f32 %v2781, %v3144
        %v3146 = vrot.slane %v3145, 2
        %v3147 = vadd.f32 %v3145, %v3146
        %v3148 = vrot.slane %v3147, 1
        %v3149 = vadd.f32 %v3147, %v3148
        %v3150 = vrot.slane %v2783, 4
        %v3151 = vadd.f32 %v2783, %v3150
        %v3152 = vrot.slane %v3151, 2
        %v3153 = vadd.f32 %v3151, %v3152
        %v3154 = vrot.slane %v3153, 1
        %v3155 = vadd.f32 %v3153, %v3154
        %v3156 = vrot.slane %v2785, 4
        %v3157 = vadd.f32 %v2785, %v3156
        %v3158 = vrot.slane %v3157, 2
        %v3159 = vadd.f32 %v3157, %v3158
        %v3160 = vrot.slane %v3159, 1
        %v3161 = vadd.f32 %v3159, %v3160
        %v3162 = vrot.slane %v2787, 4
        %v3163 = vadd.f32 %v2787, %v3162
        %v3164 = vrot.slane %v3163, 2
        %v3165 = vadd.f32 %v3163, %v3164
        %v3166 = vrot.slane %v3165, 1
        %v3167 = vadd.f32 %v3165, %v3166
        %v3168 = vrot.slane %v2789, 4
        %v3169 = vadd.f32 %v2789, %v3168
        %v3170 = vrot.slane %v3169, 2
        %v3171 = vadd.f32 %v3169, %v3170
        %v3172 = vrot.slane %v3171, 1
        %v3173 = vadd.f32 %v3171, %v3172
        %v3174 = vrot.slane %v2791, 4
        %v3175 = vadd.f32 %v2791, %v3174
        %v3176 = vrot.slane %v3175, 2
        %v3177 = vadd.f32 %v3175, %v3176
        %v3178 = vrot.slane %v3177, 1
        %v3179 = vadd.f32 %v3177, %v3178
        %v3180 = vrot.slane %v2793, 4
        %v3181 = vadd.f32 %v2793, %v3180
        %v3182 = vrot.slane %v3181, 2
        %v3183 = vadd.f32 %v3181, %v3182
        %v3184 = vrot.slane %v3183, 1
        %v3185 = vadd.f32 %v3183, %v3184
        %v3186 = vrot.slane %v2795, 4
        %v3187 = vadd.f32 %v2795, %v3186
        %v3188 = vrot.slane %v3187, 2
        %v3189 = vadd.f32 %v3187, %v3188
        %v3190 = vrot.slane %v3189, 1
        %v3191 = vadd.f32 %v3189, %v3190
        %v3192 = vrot.slane %v2797, 4
        %v3193 = vadd.f32 %v2797, %v3192
        %v3194 = vrot.slane %v3193, 2
        %v3195 = vadd.f32 %v3193, %v3194
        %v3196 = vrot.slane %v3195, 1
        %v3197 = vadd.f32 %v3195, %v3196
        %v3198 = vrot.slane %v2799, 4
        %v3199 = vadd.f32 %v2799, %v3198
        %v3200 = vrot.slane %v3199, 2
        %v3201 = vadd.f32 %v3199, %v3200
        %v3202 = vrot.slane %v3201, 1
        %v3203 = vadd.f32 %v3201, %v3202
        %v3204 = vrot.slane %v2801, 4
        %v3205 = vadd.f32 %v2801, %v3204
        %v3206 = vrot.slane %v3205, 2
        %v3207 = vadd.f32 %v3205, %v3206
        %v3208 = vrot.slane %v3207, 1
        %v3209 = vadd.f32 %v3207, %v3208
        %v3210 = vrot.slane %v2803, 4
        %v3211 = vadd.f32 %v2803, %v3210
        %v3212 = vrot.slane %v3211, 2
        %v3213 = vadd.f32 %v3211, %v3212
        %v3214 = vrot.slane %v3213, 1
        %v3215 = vadd.f32 %v3213, %v3214
        %v3216 = vrot.slane %v2805, 4
        %v3217 = vadd.f32 %v2805, %v3216
        %v3218 = vrot.slane %v3217, 2
        %v3219 = vadd.f32 %v3217, %v3218
        %v3220 = vrot.slane %v3219, 1
        %v3221 = vadd.f32 %v3219, %v3220
        %v3222 = vrot.slane %v2807, 4
        %v3223 = vadd.f32 %v2807, %v3222
        %v3224 = vrot.slane %v3223, 2
        %v3225 = vadd.f32 %v3223, %v3224
        %v3226 = vrot.slane %v3225, 1
        %v3227 = vadd.f32 %v3225, %v3226
        %v3228 = vrot.slane %v2809, 4
        %v3229 = vadd.f32 %v2809, %v3228
        %v3230 = vrot.slane %v3229, 2
        %v3231 = vadd.f32 %v3229, %v3230
        %v3232 = vrot.slane %v3231, 1
        %v3233 = vadd.f32 %v3231, %v3232
        %v3234 = vrot.slane %v2811, 4
        %v3235 = vadd.f32 %v2811, %v3234
        %v3236 = vrot.slane %v3235, 2
        %v3237 = vadd.f32 %v3235, %v3236
        %v3238 = vrot.slane %v3237, 1
        %v3239 = vadd.f32 %v3237, %v3238
        %v3240 = vrot.slane %v2813, 4
        %v3241 = vadd.f32 %v2813, %v3240
        %v3242 = vrot.slane %v3241, 2
        %v3243 = vadd.f32 %v3241, %v3242
        %v3244 = vrot.slane %v3243, 1
        %v3245 = vadd.f32 %v3243, %v3244
        %v3246 = vrot.slane %v2815, 4
        %v3247 = vadd.f32 %v2815, %v3246
        %v3248 = vrot.slane %v3247, 2
        %v3249 = vadd.f32 %v3247, %v3248
        %v3250 = vrot.slane %v3249, 1
        %v3251 = vadd.f32 %v3249, %v3250
        %v3252 = vrot.slane %v2817, 4
        %v3253 = vadd.f32 %v2817, %v3252
        %v3254 = vrot.slane %v3253, 2
        %v3255 = vadd.f32 %v3253, %v3254
        %v3256 = vrot.slane %v3255, 1
        %v3257 = vadd.f32 %v3255, %v3256
        %v3258 = vrot.slane %v2819, 4
        %v3259 = vadd.f32 %v2819, %v3258
        %v3260 = vrot.slane %v3259, 2
        %v3261 = vadd.f32 %v3259, %v3260
        %v3262 = vrot.slane %v3261, 1
        %v3263 = vadd.f32 %v3261, %v3262
        %v3264 = vrot.slane %v2821, 4
        %v3265 = vadd.f32 %v2821, %v3264
        %v3266 = vrot.slane %v3265, 2
        %v3267 = vadd.f32 %v3265, %v3266
        %v3268 = vrot.slane %v3267, 1
        %v3269 = vadd.f32 %v3267, %v3268
        %v3270 = vrot.slane %v2823, 4
        %v3271 = vadd.f32 %v2823, %v3270
        %v3272 = vrot.slane %v3271, 2
        %v3273 = vadd.f32 %v3271, %v3272
        %v3274 = vrot.slane %v3273, 1
        %v3275 = vadd.f32 %v3273, %v3274
        %v3276 = vrot.slane %v2825, 4
        %v3277 = vadd.f32 %v2825, %v3276
        %v3278 = vrot.slane %v3277, 2
        %v3279 = vadd.f32 %v3277, %v3278
        %v3280 = vrot.slane %v3279, 1
        %v3281 = vadd.f32 %v3279, %v3280
        %v3282 = vrot.slane %v2827, 4
        %v3283 = vadd.f32 %v2827, %v3282
        %v3284 = vrot.slane %v3283, 2
        %v3285 = vadd.f32 %v3283, %v3284
        %v3286 = vrot.slane %v3285, 1
        %v3287 = vadd.f32 %v3285, %v3286
        %v3288 = vrot.slane %v2829, 4
        %v3289 = vadd.f32 %v2829, %v3288
        %v3290 = vrot.slane %v3289, 2
        %v3291 = vadd.f32 %v3289, %v3290
        %v3292 = vrot.slane %v3291, 1
        %v3293 = vadd.f32 %v3291, %v3292
        %v3294 = vrot.slane %v2831, 4
        %v3295 = vadd.f32 %v2831, %v3294
        %v3296 = vrot.slane %v3295, 2
        %v3297 = vadd.f32 %v3295, %v3296
        %v3298 = vrot.slane %v3297, 1
        %v3299 = vadd.f32 %v3297, %v3298
        %v3300 = vrot.slane %v2833, 4
        %v3301 = vadd.f32 %v2833, %v3300
        %v3302 = vrot.slane %v3301, 2
        %v3303 = vadd.f32 %v3301, %v3302
        %v3304 = vrot.slane %v3303, 1
        %v3305 = vadd.f32 %v3303, %v3304
        %v3306 = vrot.slane %v2835, 4
        %v3307 = vadd.f32 %v2835, %v3306
        %v3308 = vrot.slane %v3307, 2
        %v3309 = vadd.f32 %v3307, %v3308
        %v3310 = vrot.slane %v3309, 1
        %v3311 = vadd.f32 %v3309, %v3310
        %v3312 = vrot.slane %v2837, 4
        %v3313 = vadd.f32 %v2837, %v3312
        %v3314 = vrot.slane %v3313, 2
        %v3315 = vadd.f32 %v3313, %v3314
        %v3316 = vrot.slane %v3315, 1
        %v3317 = vadd.f32 %v3315, %v3316
        %v3318 = vrot.slane %v2839, 4
        %v3319 = vadd.f32 %v2839, %v3318
        %v3320 = vrot.slane %v3319, 2
        %v3321 = vadd.f32 %v3319, %v3320
        %v3322 = vrot.slane %v3321, 1
        %v3323 = vadd.f32 %v3321, %v3322
        %v3324 = vrot.slane %v2841, 4
        %v3325 = vadd.f32 %v2841, %v3324
        %v3326 = vrot.slane %v3325, 2
        %v3327 = vadd.f32 %v3325, %v3326
        %v3328 = vrot.slane %v3327, 1
        %v3329 = vadd.f32 %v3327, %v3328
        %v3330 = vrot.slane %v2843, 4
        %v3331 = vadd.f32 %v2843, %v3330
        %v3332 = vrot.slane %v3331, 2
        %v3333 = vadd.f32 %v3331, %v3332
        %v3334 = vrot.slane %v3333, 1
        %v3335 = vadd.f32 %v3333, %v3334
        %v3336 = vrot.slane %v2845, 4
        %v3337 = vadd.f32 %v2845, %v3336
        %v3338 = vrot.slane %v3337, 2
        %v3339 = vadd.f32 %v3337, %v3338
        %v3340 = vrot.slane %v3339, 1
        %v3341 = vadd.f32 %v3339, %v3340
        %v3342 = vrot.slane %v2847, 4
        %v3343 = vadd.f32 %v2847, %v3342
        %v3344 = vrot.slane %v3343, 2
        %v3345 = vadd.f32 %v3343, %v3344
        %v3346 = vrot.slane %v3345, 1
        %v3347 = vadd.f32 %v3345, %v3346
        %v3348 = vrot.slane %v2849, 4
        %v3349 = vadd.f32 %v2849, %v3348
        %v3350 = vrot.slane %v3349, 2
        %v3351 = vadd.f32 %v3349, %v3350
        %v3352 = vrot.slane %v3351, 1
        %v3353 = vadd.f32 %v3351, %v3352
        %v3354 = vrot.slane %v2851, 4
        %v3355 = vadd.f32 %v2851, %v3354
        %v3356 = vrot.slane %v3355, 2
        %v3357 = vadd.f32 %v3355, %v3356
        %v3358 = vrot.slane %v3357, 1
        %v3359 = vadd.f32 %v3357, %v3358
        %v3360 = vrot.slane %v2853, 4
        %v3361 = vadd.f32 %v2853, %v3360
        %v3362 = vrot.slane %v3361, 2
        %v3363 = vadd.f32 %v3361, %v3362
        %v3364 = vrot.slane %v3363, 1
        %v3365 = vadd.f32 %v3363, %v3364
        %v3366 = vrot.slane %v2855, 4
        %v3367 = vadd.f32 %v2855, %v3366
        %v3368 = vrot.slane %v3367, 2
        %v3369 = vadd.f32 %v3367, %v3368
        %v3370 = vrot.slane %v3369, 1
        %v3371 = vadd.f32 %v3369, %v3370
        %v3372 = vrot.slane %v2857, 4
        %v3373 = vadd.f32 %v2857, %v3372
        %v3374 = vrot.slane %v3373, 2
        %v3375 = vadd.f32 %v3373, %v3374
        %v3376 = vrot.slane %v3375, 1
        %v3377 = vadd.f32 %v3375, %v3376
        %v3378 = vrot.slane %v2859, 4
        %v3379 = vadd.f32 %v2859, %v3378
        %v3380 = vrot.slane %v3379, 2
        %v3381 = vadd.f32 %v3379, %v3380
        %v3382 = vrot.slane %v3381, 1
        %v3383 = vadd.f32 %v3381, %v3382
        %v3384 = vrot.slane %v2861, 4
        %v3385 = vadd.f32 %v2861, %v3384
        %v3386 = vrot.slane %v3385, 2
        %v3387 = vadd.f32 %v3385, %v3386
        %v3388 = vrot.slane %v3387, 1
        %v3389 = vadd.f32 %v3387, %v3388
        %v3390 = vrot.slane %v2863, 4
        %v3391 = vadd.f32 %v2863, %v3390
        %v3392 = vrot.slane %v3391, 2
        %v3393 = vadd.f32 %v3391, %v3392
        %v3394 = vrot.slane %v3393, 1
        %v3395 = vadd.f32 %v3393, %v3394
        %v3396 = vrot.slane %v2865, 4
        %v3397 = vadd.f32 %v2865, %v3396
        %v3398 = vrot.slane %v3397, 2
        %v3399 = vadd.f32 %v3397, %v3398
        %v3400 = vrot.slane %v3399, 1
        %v3401 = vadd.f32 %v3399, %v3400
        %v3402 = vrot.slane %v2867, 4
        %v3403 = vadd.f32 %v2867, %v3402
        %v3404 = vrot.slane %v3403, 2
        %v3405 = vadd.f32 %v3403, %v3404
        %v3406 = vrot.slane %v3405, 1
        %v3407 = vadd.f32 %v3405, %v3406
        %v3408 = vrot.slane %v2869, 4
        %v3409 = vadd.f32 %v2869, %v3408
        %v3410 = vrot.slane %v3409, 2
        %v3411 = vadd.f32 %v3409, %v3410
        %v3412 = vrot.slane %v3411, 1
        %v3413 = vadd.f32 %v3411, %v3412
        %v3414 = vrot.slane %v2871, 4
        %v3415 = vadd.f32 %v2871, %v3414
        %v3416 = vrot.slane %v3415, 2
        %v3417 = vadd.f32 %v3415, %v3416
        %v3418 = vrot.slane %v3417, 1
        %v3419 = vadd.f32 %v3417, %v3418
        %v3420 = vrot.slane %v2873, 4
        %v3421 = vadd.f32 %v2873, %v3420
        %v3422 = vrot.slane %v3421, 2
        %v3423 = vadd.f32 %v3421, %v3422
        %v3424 = vrot.slane %v3423, 1
        %v3425 = vadd.f32 %v3423, %v3424
        %v3426 = vrot.slane %v2875, 4
        %v3427 = vadd.f32 %v2875, %v3426
        %v3428 = vrot.slane %v3427, 2
        %v3429 = vadd.f32 %v3427, %v3428
        %v3430 = vrot.slane %v3429, 1
        %v3431 = vadd.f32 %v3429, %v3430
        %v3432 = vrot.slane %v2877, 4
        %v3433 = vadd.f32 %v2877, %v3432
        %v3434 = vrot.slane %v3433, 2
        %v3435 = vadd.f32 %v3433, %v3434
        %v3436 = vrot.slane %v3435, 1
        %v3437 = vadd.f32 %v3435, %v3436
        %v3438 = vrot.slane %v2879, 4
        %v3439 = vadd.f32 %v2879, %v3438
        %v3440 = vrot.slane %v3439, 2
        %v3441 = vadd.f32 %v3439, %v3440
        %v3442 = vrot.slane %v3441, 1
        %v3443 = vadd.f32 %v3441, %v3442
        %v3444 = vrot.slane %v2881, 4
        %v3445 = vadd.f32 %v2881, %v3444
        %v3446 = vrot.slane %v3445, 2
        %v3447 = vadd.f32 %v3445, %v3446
        %v3448 = vrot.slane %v3447, 1
        %v3449 = vadd.f32 %v3447, %v3448
        %v3450 = vrot.slane %v2883, 4
        %v3451 = vadd.f32 %v2883, %v3450
        %v3452 = vrot.slane %v3451, 2
        %v3453 = vadd.f32 %v3451, %v3452
        %v3454 = vrot.slane %v3453, 1
        %v3455 = vadd.f32 %v3453, %v3454
        %v3456 = vrot.slane %v2885, 4
        %v3457 = vadd.f32 %v2885, %v3456
        %v3458 = vrot.slane %v3457, 2
        %v3459 = vadd.f32 %v3457, %v3458
        %v3460 = vrot.slane %v3459, 1
        %v3461 = vadd.f32 %v3459, %v3460
        %v3462 = vrot.slane %v2887, 4
        %v3463 = vadd.f32 %v2887, %v3462
        %v3464 = vrot.slane %v3463, 2
        %v3465 = vadd.f32 %v3463, %v3464
        %v3466 = vrot.slane %v3465, 1
        %v3467 = vadd.f32 %v3465, %v3466
        %v3468 = vrot.slane %v2889, 4
        %v3469 = vadd.f32 %v2889, %v3468
        %v3470 = vrot.slane %v3469, 2
        %v3471 = vadd.f32 %v3469, %v3470
        %v3472 = vrot.slane %v3471, 1
        %v3473 = vadd.f32 %v3471, %v3472
        %v3474 = vrot.slane %v2891, 4
        %v3475 = vadd.f32 %v2891, %v3474
        %v3476 = vrot.slane %v3475, 2
        %v3477 = vadd.f32 %v3475, %v3476
        %v3478 = vrot.slane %v3477, 1
        %v3479 = vadd.f32 %v3477, %v3478
        %v3480 = vrot.slane %v2893, 4
        %v3481 = vadd.f32 %v2893, %v3480
        %v3482 = vrot.slane %v3481, 2
        %v3483 = vadd.f32 %v3481, %v3482
        %v3484 = vrot.slane %v3483, 1
        %v3485 = vadd.f32 %v3483, %v3484
        %v3486 = vrot.slane %v2895, 4
        %v3487 = vadd.f32 %v2895, %v3486
        %v3488 = vrot.slane %v3487, 2
        %v3489 = vadd.f32 %v3487, %v3488
        %v3490 = vrot.slane %v3489, 1
        %v3491 = vadd.f32 %v3489, %v3490
        %v3492 = vrot.slane %v2897, 4
        %v3493 = vadd.f32 %v2897, %v3492
        %v3494 = vrot.slane %v3493, 2
        %v3495 = vadd.f32 %v3493, %v3494
        %v3496 = vrot.slane %v3495, 1
        %v3497 = vadd.f32 %v3495, %v3496
        %v3498 = vrot.slane %v2899, 4
        %v3499 = vadd.f32 %v2899, %v3498
        %v3500 = vrot.slane %v3499, 2
        %v3501 = vadd.f32 %v3499, %v3500
        %v3502 = vrot.slane %v3501, 1
        %v3503 = vadd.f32 %v3501, %v3502
        %v3504 = vrot.slane %v2901, 4
        %v3505 = vadd.f32 %v2901, %v3504
        %v3506 = vrot.slane %v3505, 2
        %v3507 = vadd.f32 %v3505, %v3506
        %v3508 = vrot.slane %v3507, 1
        %v3509 = vadd.f32 %v3507, %v3508
        %v3510 = vrot.slane %v2903, 4
        %v3511 = vadd.f32 %v2903, %v3510
        %v3512 = vrot.slane %v3511, 2
        %v3513 = vadd.f32 %v3511, %v3512
        %v3514 = vrot.slane %v3513, 1
        %v3515 = vadd.f32 %v3513, %v3514
        %v3516 = vrot.slane %v2905, 4
        %v3517 = vadd.f32 %v2905, %v3516
        %v3518 = vrot.slane %v3517, 2
        %v3519 = vadd.f32 %v3517, %v3518
        %v3520 = vrot.slane %v3519, 1
        %v3521 = vadd.f32 %v3519, %v3520
        %v3522 = vrot.slane %v2907, 4
        %v3523 = vadd.f32 %v2907, %v3522
        %v3524 = vrot.slane %v3523, 2
        %v3525 = vadd.f32 %v3523, %v3524
        %v3526 = vrot.slane %v3525, 1
        %v3527 = vadd.f32 %v3525, %v3526
        %v3528 = vrot.slane %v2909, 4
        %v3529 = vadd.f32 %v2909, %v3528
        %v3530 = vrot.slane %v3529, 2
        %v3531 = vadd.f32 %v3529, %v3530
        %v3532 = vrot.slane %v3531, 1
        %v3533 = vadd.f32 %v3531, %v3532
        %v3534 = vrot.slane %v2911, 4
        %v3535 = vadd.f32 %v2911, %v3534
        %v3536 = vrot.slane %v3535, 2
        %v3537 = vadd.f32 %v3535, %v3536
        %v3538 = vrot.slane %v3537, 1
        %v3539 = vadd.f32 %v3537, %v3538
        %v3540 = vrot.slane %v2913, 4
        %v3541 = vadd.f32 %v2913, %v3540
        %v3542 = vrot.slane %v3541, 2
        %v3543 = vadd.f32 %v3541, %v3542
        %v3544 = vrot.slane %v3543, 1
        %v3545 = vadd.f32 %v3543, %v3544
        %v3546 = vrot.slane %v2915, 4
        %v3547 = vadd.f32 %v2915, %v3546
        %v3548 = vrot.slane %v3547, 2
        %v3549 = vadd.f32 %v3547, %v3548
        %v3550 = vrot.slane %v3549, 1
        %v3551 = vadd.f32 %v3549, %v3550
        %v3552 = vrot.slane %v2917, 4
        %v3553 = vadd.f32 %v2917, %v3552
        %v3554 = vrot.slane %v3553, 2
        %v3555 = vadd.f32 %v3553, %v3554
        %v3556 = vrot.slane %v3555, 1
        %v3557 = vadd.f32 %v3555, %v3556
        %v3558 = vrot.slane %v2919, 4
        %v3559 = vadd.f32 %v2919, %v3558
        %v3560 = vrot.slane %v3559, 2
        %v3561 = vadd.f32 %v3559, %v3560
        %v3562 = vrot.slane %v3561, 1
        %v3563 = vadd.f32 %v3561, %v3562
        %v3564 = vrot.slane %v2921, 4
        %v3565 = vadd.f32 %v2921, %v3564
        %v3566 = vrot.slane %v3565, 2
        %v3567 = vadd.f32 %v3565, %v3566
        %v3568 = vrot.slane %v3567, 1
        %v3569 = vadd.f32 %v3567, %v3568
        %v3570 = vrot.slane %v2923, 4
        %v3571 = vadd.f32 %v2923, %v3570
        %v3572 = vrot.slane %v3571, 2
        %v3573 = vadd.f32 %v3571, %v3572
        %v3574 = vrot.slane %v3573, 1
        %v3575 = vadd.f32 %v3573, %v3574
        %v3576 = vrot.slane %v2925, 4
        %v3577 = vadd.f32 %v2925, %v3576
        %v3578 = vrot.slane %v3577, 2
        %v3579 = vadd.f32 %v3577, %v3578
        %v3580 = vrot.slane %v3579, 1
        %v3581 = vadd.f32 %v3579, %v3580
        %v3582 = vrot.slane %v2927, 4
        %v3583 = vadd.f32 %v2927, %v3582
        %v3584 = vrot.slane %v3583, 2
        %v3585 = vadd.f32 %v3583, %v3584
        %v3586 = vrot.slane %v3585, 1
        %v3587 = vadd.f32 %v3585, %v3586
        %v3588 = vrot.slane %v2929, 4
        %v3589 = vadd.f32 %v2929, %v3588
        %v3590 = vrot.slane %v3589, 2
        %v3591 = vadd.f32 %v3589, %v3590
        %v3592 = vrot.slane %v3591, 1
        %v3593 = vadd.f32 %v3591, %v3592
        %v3594 = vrot.slane %v2931, 4
        %v3595 = vadd.f32 %v2931, %v3594
        %v3596 = vrot.slane %v3595, 2
        %v3597 = vadd.f32 %v3595, %v3596
        %v3598 = vrot.slane %v3597, 1
        %v3599 = vadd.f32 %v3597, %v3598
        %v3600 = vrot.slane %v2933, 4
        %v3601 = vadd.f32 %v2933, %v3600
        %v3602 = vrot.slane %v3601, 2
        %v3603 = vadd.f32 %v3601, %v3602
        %v3604 = vrot.slane %v3603, 1
        %v3605 = vadd.f32 %v3603, %v3604
        %v3606 = vrot.slane %v2935, 4
        %v3607 = vadd.f32 %v2935, %v3606
        %v3608 = vrot.slane %v3607, 2
        %v3609 = vadd.f32 %v3607, %v3608
        %v3610 = vrot.slane %v3609, 1
        %v3611 = vadd.f32 %v3609, %v3610
        %v3612 = vrot.slane %v2937, 4
        %v3613 = vadd.f32 %v2937, %v3612
        %v3614 = vrot.slane %v3613, 2
        %v3615 = vadd.f32 %v3613, %v3614
        %v3616 = vrot.slane %v3615, 1
        %v3617 = vadd.f32 %v3615, %v3616
        %v3618 = vrot.slane %v2939, 4
        %v3619 = vadd.f32 %v2939, %v3618
        %v3620 = vrot.slane %v3619, 2
        %v3621 = vadd.f32 %v3619, %v3620
        %v3622 = vrot.slane %v3621, 1
        %v3623 = vadd.f32 %v3621, %v3622
        %v3624 = vrot.slane %v2941, 4
        %v3625 = vadd.f32 %v2941, %v3624
        %v3626 = vrot.slane %v3625, 2
        %v3627 = vadd.f32 %v3625, %v3626
        %v3628 = vrot.slane %v3627, 1
        %v3629 = vadd.f32 %v3627, %v3628
        %v3630 = vrot.slane %v2943, 4
        %v3631 = vadd.f32 %v2943, %v3630
        %v3632 = vrot.slane %v3631, 2
        %v3633 = vadd.f32 %v3631, %v3632
        %v3634 = vrot.slane %v3633, 1
        %v3635 = vadd.f32 %v3633, %v3634
        %v3636 = vrot.slane %v2945, 4
        %v3637 = vadd.f32 %v2945, %v3636
        %v3638 = vrot.slane %v3637, 2
        %v3639 = vadd.f32 %v3637, %v3638
        %v3640 = vrot.slane %v3639, 1
        %v3641 = vadd.f32 %v3639, %v3640
        %v3642 = vrot.slane %v2947, 4
        %v3643 = vadd.f32 %v2947, %v3642
        %v3644 = vrot.slane %v3643, 2
        %v3645 = vadd.f32 %v3643, %v3644
        %v3646 = vrot.slane %v3645, 1
        %v3647 = vadd.f32 %v3645, %v3646
        %v3648 = vrot.slane %v2949, 4
        %v3649 = vadd.f32 %v2949, %v3648
        %v3650 = vrot.slane %v3649, 2
        %v3651 = vadd.f32 %v3649, %v3650
        %v3652 = vrot.slane %v3651, 1
        %v3653 = vadd.f32 %v3651, %v3652
        %v3654 = vrot.slane %v2951, 4
        %v3655 = vadd.f32 %v2951, %v3654
        %v3656 = vrot.slane %v3655, 2
        %v3657 = vadd.f32 %v3655, %v3656
        %v3658 = vrot.slane %v3657, 1
        %v3659 = vadd.f32 %v3657, %v3658
        %v3660 = vrot.slane %v2953, 4
        %v3661 = vadd.f32 %v2953, %v3660
        %v3662 = vrot.slane %v3661, 2
        %v3663 = vadd.f32 %v3661, %v3662
        %v3664 = vrot.slane %v3663, 1
        %v3665 = vadd.f32 %v3663, %v3664
        %v3666 = vrot.slane %v2955, 4
        %v3667 = vadd.f32 %v2955, %v3666
        %v3668 = vrot.slane %v3667, 2
        %v3669 = vadd.f32 %v3667, %v3668
        %v3670 = vrot.slane %v3669, 1
        %v3671 = vadd.f32 %v3669, %v3670
        %v3672 = vrot.slane %v2957, 4
        %v3673 = vadd.f32 %v2957, %v3672
        %v3674 = vrot.slane %v3673, 2
        %v3675 = vadd.f32 %v3673, %v3674
        %v3676 = vrot.slane %v3675, 1
        %v3677 = vadd.f32 %v3675, %v3676
        %v3678 = vrot.slane %v2959, 4
        %v3679 = vadd.f32 %v2959, %v3678
        %v3680 = vrot.slane %v3679, 2
        %v3681 = vadd.f32 %v3679, %v3680
        %v3682 = vrot.slane %v3681, 1
        %v3683 = vadd.f32 %v3681, %v3682
        %v3684 = vrot.slane %v2961, 4
        %v3685 = vadd.f32 %v2961, %v3684
        %v3686 = vrot.slane %v3685, 2
        %v3687 = vadd.f32 %v3685, %v3686
        %v3688 = vrot.slane %v3687, 1
        %v3689 = vadd.f32 %v3687, %v3688
        %v3690 = vrot.slane %v2963, 4
        %v3691 = vadd.f32 %v2963, %v3690
        %v3692 = vrot.slane %v3691, 2
        %v3693 = vadd.f32 %v3691, %v3692
        %v3694 = vrot.slane %v3693, 1
        %v3695 = vadd.f32 %v3693, %v3694
        %v3696 = vrot.slane %v2965, 4
        %v3697 = vadd.f32 %v2965, %v3696
        %v3698 = vrot.slane %v3697, 2
        %v3699 = vadd.f32 %v3697, %v3698
        %v3700 = vrot.slane %v3699, 1
        %v3701 = vadd.f32 %v3699, %v3700
        %v3702 = vrot.slane %v2967, 4
        %v3703 = vadd.f32 %v2967, %v3702
        %v3704 = vrot.slane %v3703, 2
        %v3705 = vadd.f32 %v3703, %v3704
        %v3706 = vrot.slane %v3705, 1
        %v3707 = vadd.f32 %v3705, %v3706
        %v3708 = vrot.slane %v2969, 4
        %v3709 = vadd.f32 %v2969, %v3708
        %v3710 = vrot.slane %v3709, 2
        %v3711 = vadd.f32 %v3709, %v3710
        %v3712 = vrot.slane %v3711, 1
        %v3713 = vadd.f32 %v3711, %v3712
        %v3714 = vrot.slane %v2971, 4
        %v3715 = vadd.f32 %v2971, %v3714
        %v3716 = vrot.slane %v3715, 2
        %v3717 = vadd.f32 %v3715, %v3716
        %v3718 = vrot.slane %v3717, 1
        %v3719 = vadd.f32 %v3717, %v3718
        %v3720 = vrot.slane %v2973, 4
        %v3721 = vadd.f32 %v2973, %v3720
        %v3722 = vrot.slane %v3721, 2
        %v3723 = vadd.f32 %v3721, %v3722
        %v3724 = vrot.slane %v3723, 1
        %v3725 = vadd.f32 %v3723, %v3724
        %v3726 = vrot.slane %v2975, 4
        %v3727 = vadd.f32 %v2975, %v3726
        %v3728 = vrot.slane %v3727, 2
        %v3729 = vadd.f32 %v3727, %v3728
        %v3730 = vrot.slane %v3729, 1
        %v3731 = vadd.f32 %v3729, %v3730
        %v3732 = vrot.slane %v2977, 4
        %v3733 = vadd.f32 %v2977, %v3732
        %v3734 = vrot.slane %v3733, 2
        %v3735 = vadd.f32 %v3733, %v3734
        %v3736 = vrot.slane %v3735, 1
        %v3737 = vadd.f32 %v3735, %v3736
        %v3738 = vrot.slane %v2979, 4
        %v3739 = vadd.f32 %v2979, %v3738
        %v3740 = vrot.slane %v3739, 2
        %v3741 = vadd.f32 %v3739, %v3740
        %v3742 = vrot.slane %v3741, 1
        %v3743 = vadd.f32 %v3741, %v3742
        %v3744 = vrot.slane %v2981, 4
        %v3745 = vadd.f32 %v2981, %v3744
        %v3746 = vrot.slane %v3745, 2
        %v3747 = vadd.f32 %v3745, %v3746
        %v3748 = vrot.slane %v3747, 1
        %v3749 = vadd.f32 %v3747, %v3748
        %v3750 = vrcp.pop %v2987
        %v3751 = vrcp.pop %v2993
        %v3752 = vrcp.pop %v2999
        %v3753 = vrcp.pop %v3005
        %v3754 = vrcp.pop %v3011
        %v3755 = vrcp.pop %v3017
        %v3756 = vrcp.pop %v3023
        %v3757 = vrcp.pop %v3029
        %v3758 = vrcp.pop %v3035
        %v3759 = vrcp.pop %v3041
        %v3760 = vrcp.pop %v3047
        %v3761 = vrcp.pop %v3053
        %v3762 = vrcp.pop %v3059
        %v3763 = vrcp.pop %v3065
        %v3764 = vrcp.pop %v3071
        %v3765 = vrcp.pop %v3077
        %v3766 = vrcp.pop %v3083
        %v3767 = vrcp.pop %v3089
        %v3768 = vrcp.pop %v3095
        %v3769 = vrcp.pop %v3101
        %v3770 = vrcp.pop %v3107
        %v3771 = vrcp.pop %v3113
        %v3772 = vrcp.pop %v3119
        %v3773 = vrcp.pop %v3125
        %v3774 = vrcp.pop %v3131
        %v3775 = vrcp.pop %v3137
        %v3776 = vrcp.pop %v3143
        %v3777 = vrcp.pop %v3149
        %v3778 = vrcp.pop %v3155
        %v3779 = vrcp.pop %v3161
        %v3780 = vrcp.pop %v3167
        %v3781 = vrcp.pop %v3173
        %v3782 = vrcp.pop %v3179
        %v3783 = vrcp.pop %v3185
        %v3784 = vrcp.pop %v3191
        %v3785 = vrcp.pop %v3197
        %v3786 = vrcp.pop %v3203
        %v3787 = vrcp.pop %v3209
        %v3788 = vrcp.pop %v3215
        %v3789 = vrcp.pop %v3221
        %v3790 = vrcp.pop %v3227
        %v3791 = vrcp.pop %v3233
        %v3792 = vrcp.pop %v3239
        %v3793 = vrcp.pop %v3245
        %v3794 = vrcp.pop %v3251
        %v3795 = vrcp.pop %v3257
        %v3796 = vrcp.pop %v3263
        %v3797 = vrcp.pop %v3269
        %v3798 = vrcp.pop %v3275
        %v3799 = vrcp.pop %v3281
        %v3800 = vrcp.pop %v3287
        %v3801 = vrcp.pop %v3293
        %v3802 = vrcp.pop %v3299
        %v3803 = vrcp.pop %v3305
        %v3804 = vrcp.pop %v3311
        %v3805 = vrcp.pop %v3317
        %v3806 = vrcp.pop %v3323
        %v3807 = vrcp.pop %v3329
        %v3808 = vrcp.pop %v3335
        %v3809 = vrcp.pop %v3341
        %v3810 = vrcp.pop %v3347
        %v3811 = vrcp.pop %v3353
        %v3812 = vrcp.pop %v3359
        %v3813 = vrcp.pop %v3365
        %v3814 = vrcp.pop %v3371
        %v3815 = vrcp.pop %v3377
        %v3816 = vrcp.pop %v3383
        %v3817 = vrcp.pop %v3389
        %v3818 = vrcp.pop %v3395
        %v3819 = vrcp.pop %v3401
        %v3820 = vrcp.pop %v3407
        %v3821 = vrcp.pop %v3413
        %v3822 = vrcp.pop %v3419
        %v3823 = vrcp.pop %v3425
        %v3824 = vrcp.pop %v3431
        %v3825 = vrcp.pop %v3437
        %v3826 = vrcp.pop %v3443
        %v3827 = vrcp.pop %v3449
        %v3828 = vrcp.pop %v3455
        %v3829 = vrcp.pop %v3461
        %v3830 = vrcp.pop %v3467
        %v3831 = vrcp.pop %v3473
        %v3832 = vrcp.pop %v3479
        %v3833 = vrcp.pop %v3485
        %v3834 = vrcp.pop %v3491
        %v3835 = vrcp.pop %v3497
        %v3836 = vrcp.pop %v3503
        %v3837 = vrcp.pop %v3509
        %v3838 = vrcp.pop %v3515
        %v3839 = vrcp.pop %v3521
        %v3840 = vrcp.pop %v3527
        %v3841 = vrcp.pop %v3533
        %v3842 = vrcp.pop %v3539
        %v3843 = vrcp.pop %v3545
        %v3844 = vrcp.pop %v3551
        %v3845 = vrcp.pop %v3557
        %v3846 = vrcp.pop %v3563
        %v3847 = vrcp.pop %v3569
        %v3848 = vrcp.pop %v3575
        %v3849 = vrcp.pop %v3581
        %v3850 = vrcp.pop %v3587
        %v3851 = vrcp.pop %v3593
        %v3852 = vrcp.pop %v3599
        %v3853 = vrcp.pop %v3605
        %v3854 = vrcp.pop %v3611
        %v3855 = vrcp.pop %v3617
        %v3856 = vrcp.pop %v3623
        %v3857 = vrcp.pop %v3629
        %v3858 = vrcp.pop %v3635
        %v3859 = vrcp.pop %v3641
        %v3860 = vrcp.pop %v3647
        %v3861 = vrcp.pop %v3653
        %v3862 = vrcp.pop %v3659
        %v3863 = vrcp.pop %v3665
        %v3864 = vrcp.pop %v3671
        %v3865 = vrcp.pop %v3677
        %v3866 = vrcp.pop %v3683
        %v3867 = vrcp.pop %v3689
        %v3868 = vrcp.pop %v3695
        %v3869 = vrcp.pop %v3701
        %v3870 = vrcp.pop %v3707
        %v3871 = vrcp.pop %v3713
        %v3872 = vrcp.pop %v3719
        %v3873 = vrcp.pop %v3725
        %v3874 = vrcp.pop %v3731
        %v3875 = vrcp.pop %v3737
        %v3876 = vrcp.pop %v3743
        %v3877 = vrcp.pop %v3749
        %v3878 = vmul.f32 %v2727, %v3750
        %v3879 = vmul.f32 %v2729, %v3751
        %v3880 = vmul.f32 %v2731, %v3752
        %v3881 = vmul.f32 %v2733, %v3753
        %v3882 = vmul.f32 %v2735, %v3754
        %v3883 = vmul.f32 %v2737, %v3755
        %v3884 = vmul.f32 %v2739, %v3756
        %v3885 = vmul.f32 %v2741, %v3757
        %v3886 = vmul.f32 %v2743, %v3758
        %v3887 = vmul.f32 %v2745, %v3759
        %v3888 = vmul.f32 %v2747, %v3760
        %v3889 = vmul.f32 %v2749, %v3761
        %v3890 = vmul.f32 %v2751, %v3762
        %v3891 = vmul.f32 %v2753, %v3763
        %v3892 = vmul.f32 %v2755, %v3764
        %v3893 = vmul.f32 %v2757, %v3765
        %v3894 = vmul.f32 %v2759, %v3766
        %v3895 = vmul.f32 %v2761, %v3767
        %v3896 = vmul.f32 %v2763, %v3768
        %v3897 = vmul.f32 %v2765, %v3769
        %v3898 = vmul.f32 %v2767, %v3770
        %v3899 = vmul.f32 %v2769, %v3771
        %v3900 = vmul.f32 %v2771, %v3772
        %v3901 = vmul.f32 %v2773, %v3773
        %v3902 = vmul.f32 %v2775, %v3774
        %v3903 = vmul.f32 %v2777, %v3775
        %v3904 = vmul.f32 %v2779, %v3776
        %v3905 = vmul.f32 %v2781, %v3777
        %v3906 = vmul.f32 %v2783, %v3778
        %v3907 = vmul.f32 %v2785, %v3779
        %v3908 = vmul.f32 %v2787, %v3780
        %v3909 = vmul.f32 %v2789, %v3781
        %v3910 = vmul.f32 %v2791, %v3782
        %v3911 = vmul.f32 %v2793, %v3783
        %v3912 = vmul.f32 %v2795, %v3784
        %v3913 = vmul.f32 %v2797, %v3785
        %v3914 = vmul.f32 %v2799, %v3786
        %v3915 = vmul.f32 %v2801, %v3787
        %v3916 = vmul.f32 %v2803, %v3788
        %v3917 = vmul.f32 %v2805, %v3789
        %v3918 = vmul.f32 %v2807, %v3790
        %v3919 = vmul.f32 %v2809, %v3791
        %v3920 = vmul.f32 %v2811, %v3792
        %v3921 = vmul.f32 %v2813, %v3793
        %v3922 = vmul.f32 %v2815, %v3794
        %v3923 = vmul.f32 %v2817, %v3795
        %v3924 = vmul.f32 %v2819, %v3796
        %v3925 = vmul.f32 %v2821, %v3797
        %v3926 = vmul.f32 %v2823, %v3798
        %v3927 = vmul.f32 %v2825, %v3799
        %v3928 = vmul.f32 %v2827, %v3800
        %v3929 = vmul.f32 %v2829, %v3801
        %v3930 = vmul.f32 %v2831, %v3802
        %v3931 = vmul.f32 %v2833, %v3803
        %v3932 = vmul.f32 %v2835, %v3804
        %v3933 = vmul.f32 %v2837, %v3805
        %v3934 = vmul.f32 %v2839, %v3806
        %v3935 = vmul.f32 %v2841, %v3807
        %v3936 = vmul.f32 %v2843, %v3808
        %v3937 = vmul.f32 %v2845, %v3809
        %v3938 = vmul.f32 %v2847, %v3810
        %v3939 = vmul.f32 %v2849, %v3811
        %v3940 = vmul.f32 %v2851, %v3812
        %v3941 = vmul.f32 %v2853, %v3813
        %v3942 = vmul.f32 %v2855, %v3814
        %v3943 = vmul.f32 %v2857, %v3815
        %v3944 = vmul.f32 %v2859, %v3816
        %v3945 = vmul.f32 %v2861, %v3817
        %v3946 = vmul.f32 %v2863, %v3818
        %v3947 = vmul.f32 %v2865, %v3819
        %v3948 = vmul.f32 %v2867, %v3820
        %v3949 = vmul.f32 %v2869, %v3821
        %v3950 = vmul.f32 %v2871, %v3822
        %v3951 = vmul.f32 %v2873, %v3823
        %v3952 = vmul.f32 %v2875, %v3824
        %v3953 = vmul.f32 %v2877, %v3825
        %v3954 = vmul.f32 %v2879, %v3826
        %v3955 = vmul.f32 %v2881, %v3827
        %v3956 = vmul.f32 %v2883, %v3828
        %v3957 = vmul.f32 %v2885, %v3829
        %v3958 = vmul.f32 %v2887, %v3830
        %v3959 = vmul.f32 %v2889, %v3831
        %v3960 = vmul.f32 %v2891, %v3832
        %v3961 = vmul.f32 %v2893, %v3833
        %v3962 = vmul.f32 %v2895, %v3834
        %v3963 = vmul.f32 %v2897, %v3835
        %v3964 = vmul.f32 %v2899, %v3836
        %v3965 = vmul.f32 %v2901, %v3837
        %v3966 = vmul.f32 %v2903, %v3838
        %v3967 = vmul.f32 %v2905, %v3839
        %v3968 = vmul.f32 %v2907, %v3840
        %v3969 = vmul.f32 %v2909, %v3841
        %v3970 = vmul.f32 %v2911, %v3842
        %v3971 = vmul.f32 %v2913, %v3843
        %v3972 = vmul.f32 %v2915, %v3844
        %v3973 = vmul.f32 %v2917, %v3845
        %v3974 = vmul.f32 %v2919, %v3846
        %v3975 = vmul.f32 %v2921, %v3847
        %v3976 = vmul.f32 %v2923, %v3848
        %v3977 = vmul.f32 %v2925, %v3849
        %v3978 = vmul.f32 %v2927, %v3850
        %v3979 = vmul.f32 %v2929, %v3851
        %v3980 = vmul.f32 %v2931, %v3852
        %v3981 = vmul.f32 %v2933, %v3853
        %v3982 = vmul.f32 %v2935, %v3854
        %v3983 = vmul.f32 %v2937, %v3855
        %v3984 = vmul.f32 %v2939, %v3856
        %v3985 = vmul.f32 %v2941, %v3857
        %v3986 = vmul.f32 %v2943, %v3858
        %v3987 = vmul.f32 %v2945, %v3859
        %v3988 = vmul.f32 %v2947, %v3860
        %v3989 = vmul.f32 %v2949, %v3861
        %v3990 = vmul.f32 %v2951, %v3862
        %v3991 = vmul.f32 %v2953, %v3863
        %v3992 = vmul.f32 %v2955, %v3864
        %v3993 = vmul.f32 %v2957, %v3865
        %v3994 = vmul.f32 %v2959, %v3866
        %v3995 = vmul.f32 %v2961, %v3867
        %v3996 = vmul.f32 %v2963, %v3868
        %v3997 = vmul.f32 %v2965, %v3869
        %v3998 = vmul.f32 %v2967, %v3870
        %v3999 = vmul.f32 %v2969, %v3871
        %v4000 = vmul.f32 %v2971, %v3872
        %v4001 = vmul.f32 %v2973, %v3873
        %v4002 = vmul.f32 %v2975, %v3874
        %v4003 = vmul.f32 %v2977, %v3875
        %v4004 = vmul.f32 %v2979, %v3876
        %v4005 = vmul.f32 %v2981, %v3877
        %v4006 = vmul.f32 %v3878, %v326
        %v4007 = vmul.f32 %v3879, %v327
        %v4008 = vmul.f32 %v3880, %v328
        %v4009 = vmul.f32 %v3881, %v329
        %v4010 = vmul.f32 %v3882, %v330
        %v4011 = vmul.f32 %v3883, %v331
        %v4012 = vmul.f32 %v3884, %v332
        %v4013 = vmul.f32 %v3885, %v333
        %v4014 = vmul.f32 %v3886, %v334
        %v4015 = vmul.f32 %v3887, %v335
        %v4016 = vmul.f32 %v3888, %v336
        %v4017 = vmul.f32 %v3889, %v337
        %v4018 = vmul.f32 %v3890, %v338
        %v4019 = vmul.f32 %v3891, %v339
        %v4020 = vmul.f32 %v3892, %v340
        %v4021 = vmul.f32 %v3893, %v341
        %v4022 = vmul.f32 %v3894, %v342
        %v4023 = vmul.f32 %v3895, %v343
        %v4024 = vmul.f32 %v3896, %v344
        %v4025 = vmul.f32 %v3897, %v345
        %v4026 = vmul.f32 %v3898, %v346
        %v4027 = vmul.f32 %v3899, %v347
        %v4028 = vmul.f32 %v3900, %v348
        %v4029 = vmul.f32 %v3901, %v349
        %v4030 = vmul.f32 %v3902, %v350
        %v4031 = vmul.f32 %v3903, %v351
        %v4032 = vmul.f32 %v3904, %v352
        %v4033 = vmul.f32 %v3905, %v353
        %v4034 = vmul.f32 %v3906, %v354
        %v4035 = vmul.f32 %v3907, %v355
        %v4036 = vmul.f32 %v3908, %v356
        %v4037 = vmul.f32 %v3909, %v357
        %v4038 = vmul.f32 %v3910, %v358
        %v4039 = vmul.f32 %v3911, %v359
        %v4040 = vmul.f32 %v3912, %v360
        %v4041 = vmul.f32 %v3913, %v361
        %v4042 = vmul.f32 %v3914, %v362
        %v4043 = vmul.f32 %v3915, %v363
        %v4044 = vmul.f32 %v3916, %v364
        %v4045 = vmul.f32 %v3917, %v365
        %v4046 = vmul.f32 %v3918, %v366
        %v4047 = vmul.f32 %v3919, %v367
        %v4048 = vmul.f32 %v3920, %v368
        %v4049 = vmul.f32 %v3921, %v369
        %v4050 = vmul.f32 %v3922, %v370
        %v4051 = vmul.f32 %v3923, %v371
        %v4052 = vmul.f32 %v3924, %v372
        %v4053 = vmul.f32 %v3925, %v373
        %v4054 = vmul.f32 %v3926, %v374
        %v4055 = vmul.f32 %v3927, %v375
        %v4056 = vmul.f32 %v3928, %v376
        %v4057 = vmul.f32 %v3929, %v377
        %v4058 = vmul.f32 %v3930, %v378
        %v4059 = vmul.f32 %v3931, %v379
        %v4060 = vmul.f32 %v3932, %v380
        %v4061 = vmul.f32 %v3933, %v381
        %v4062 = vmul.f32 %v3934, %v382
        %v4063 = vmul.f32 %v3935, %v383
        %v4064 = vmul.f32 %v3936, %v384
        %v4065 = vmul.f32 %v3937, %v385
        %v4066 = vmul.f32 %v3938, %v386
        %v4067 = vmul.f32 %v3939, %v387
        %v4068 = vmul.f32 %v3940, %v388
        %v4069 = vmul.f32 %v3941, %v389
        %v4070 = vmul.f32 %v3942, %v390
        %v4071 = vmul.f32 %v3943, %v391
        %v4072 = vmul.f32 %v3944, %v392
        %v4073 = vmul.f32 %v3945, %v393
        %v4074 = vmul.f32 %v3946, %v394
        %v4075 = vmul.f32 %v3947, %v395
        %v4076 = vmul.f32 %v3948, %v396
        %v4077 = vmul.f32 %v3949, %v397
        %v4078 = vmul.f32 %v3950, %v398
        %v4079 = vmul.f32 %v3951, %v399
        %v4080 = vmul.f32 %v3952, %v400
        %v4081 = vmul.f32 %v3953, %v401
        %v4082 = vmul.f32 %v3954, %v402
        %v4083 = vmul.f32 %v3955, %v403
        %v4084 = vmul.f32 %v3956, %v404
        %v4085 = vmul.f32 %v3957, %v405
        %v4086 = vmul.f32 %v3958, %v406
        %v4087 = vmul.f32 %v3959, %v407
        %v4088 = vmul.f32 %v3960, %v408
        %v4089 = vmul.f32 %v3961, %v409
        %v4090 = vmul.f32 %v3962, %v410
        %v4091 = vmul.f32 %v3963, %v411
        %v4092 = vmul.f32 %v3964, %v412
        %v4093 = vmul.f32 %v3965, %v413
        %v4094 = vmul.f32 %v3966, %v414
        %v4095 = vmul.f32 %v3967, %v415
        %v4096 = vmul.f32 %v3968, %v416
        %v4097 = vmul.f32 %v3969, %v417
        %v4098 = vmul.f32 %v3970, %v418
        %v4099 = vmul.f32 %v3971, %v419
        %v4100 = vmul.f32 %v3972, %v420
        %v4101 = vmul.f32 %v3973, %v421
        %v4102 = vmul.f32 %v3974, %v422
        %v4103 = vmul.f32 %v3975, %v423
        %v4104 = vmul.f32 %v3976, %v424
        %v4105 = vmul.f32 %v3977, %v425
        %v4106 = vmul.f32 %v3978, %v426
        %v4107 = vmul.f32 %v3979, %v427
        %v4108 = vmul.f32 %v3980, %v428
        %v4109 = vmul.f32 %v3981, %v429
        %v4110 = vmul.f32 %v3982, %v430
        %v4111 = vmul.f32 %v3983, %v431
        %v4112 = vmul.f32 %v3984, %v432
        %v4113 = vmul.f32 %v3985, %v433
        %v4114 = vmul.f32 %v3986, %v434
        %v4115 = vmul.f32 %v3987, %v435
        %v4116 = vmul.f32 %v3988, %v436
        %v4117 = vmul.f32 %v3989, %v437
        %v4118 = vmul.f32 %v3990, %v438
        %v4119 = vmul.f32 %v3991, %v439
        %v4120 = vmul.f32 %v3992, %v440
        %v4121 = vmul.f32 %v3993, %v441
        %v4122 = vmul.f32 %v3994, %v442
        %v4123 = vmul.f32 %v3995, %v443
        %v4124 = vmul.f32 %v3996, %v444
        %v4125 = vmul.f32 %v3997, %v445
        %v4126 = vmul.f32 %v3998, %v446
        %v4127 = vmul.f32 %v3999, %v447
        %v4128 = vmul.f32 %v4000, %v448
        %v4129 = vmul.f32 %v4001, %v449
        %v4130 = vmul.f32 %v4002, %v450
        %v4131 = vmul.f32 %v4003, %v451
        %v4132 = vmul.f32 %v4004, %v452
        %v4133 = vmul.f32 %v4005, %v453
        %v4134 = vrot.slane %v4006, 4
        %v4135 = vadd.f32 %v4006, %v4134
        %v4136 = vrot.slane %v4135, 2
        %v4137 = vadd.f32 %v4135, %v4136
        %v4138 = vrot.slane %v4137, 1
        %v4139 = vadd.f32 %v4137, %v4138
        %v4140 = vrot.slane %v4007, 4
        %v4141 = vadd.f32 %v4007, %v4140
        %v4142 = vrot.slane %v4141, 2
        %v4143 = vadd.f32 %v4141, %v4142
        %v4144 = vrot.slane %v4143, 1
        %v4145 = vadd.f32 %v4143, %v4144
        %v4146 = vrot.slane %v4008, 4
        %v4147 = vadd.f32 %v4008, %v4146
        %v4148 = vrot.slane %v4147, 2
        %v4149 = vadd.f32 %v4147, %v4148
        %v4150 = vrot.slane %v4149, 1
        %v4151 = vadd.f32 %v4149, %v4150
        %v4152 = vrot.slane %v4009, 4
        %v4153 = vadd.f32 %v4009, %v4152
        %v4154 = vrot.slane %v4153, 2
        %v4155 = vadd.f32 %v4153, %v4154
        %v4156 = vrot.slane %v4155, 1
        %v4157 = vadd.f32 %v4155, %v4156
        %v4158 = vrot.slane %v4010, 4
        %v4159 = vadd.f32 %v4010, %v4158
        %v4160 = vrot.slane %v4159, 2
        %v4161 = vadd.f32 %v4159, %v4160
        %v4162 = vrot.slane %v4161, 1
        %v4163 = vadd.f32 %v4161, %v4162
        %v4164 = vrot.slane %v4011, 4
        %v4165 = vadd.f32 %v4011, %v4164
        %v4166 = vrot.slane %v4165, 2
        %v4167 = vadd.f32 %v4165, %v4166
        %v4168 = vrot.slane %v4167, 1
        %v4169 = vadd.f32 %v4167, %v4168
        %v4170 = vrot.slane %v4012, 4
        %v4171 = vadd.f32 %v4012, %v4170
        %v4172 = vrot.slane %v4171, 2
        %v4173 = vadd.f32 %v4171, %v4172
        %v4174 = vrot.slane %v4173, 1
        %v4175 = vadd.f32 %v4173, %v4174
        %v4176 = vrot.slane %v4013, 4
        %v4177 = vadd.f32 %v4013, %v4176
        %v4178 = vrot.slane %v4177, 2
        %v4179 = vadd.f32 %v4177, %v4178
        %v4180 = vrot.slane %v4179, 1
        %v4181 = vadd.f32 %v4179, %v4180
        %v4182 = vrot.slane %v4014, 4
        %v4183 = vadd.f32 %v4014, %v4182
        %v4184 = vrot.slane %v4183, 2
        %v4185 = vadd.f32 %v4183, %v4184
        %v4186 = vrot.slane %v4185, 1
        %v4187 = vadd.f32 %v4185, %v4186
        %v4188 = vrot.slane %v4015, 4
        %v4189 = vadd.f32 %v4015, %v4188
        %v4190 = vrot.slane %v4189, 2
        %v4191 = vadd.f32 %v4189, %v4190
        %v4192 = vrot.slane %v4191, 1
        %v4193 = vadd.f32 %v4191, %v4192
        %v4194 = vrot.slane %v4016, 4
        %v4195 = vadd.f32 %v4016, %v4194
        %v4196 = vrot.slane %v4195, 2
        %v4197 = vadd.f32 %v4195, %v4196
        %v4198 = vrot.slane %v4197, 1
        %v4199 = vadd.f32 %v4197, %v4198
        %v4200 = vrot.slane %v4017, 4
        %v4201 = vadd.f32 %v4017, %v4200
        %v4202 = vrot.slane %v4201, 2
        %v4203 = vadd.f32 %v4201, %v4202
        %v4204 = vrot.slane %v4203, 1
        %v4205 = vadd.f32 %v4203, %v4204
        %v4206 = vrot.slane %v4018, 4
        %v4207 = vadd.f32 %v4018, %v4206
        %v4208 = vrot.slane %v4207, 2
        %v4209 = vadd.f32 %v4207, %v4208
        %v4210 = vrot.slane %v4209, 1
        %v4211 = vadd.f32 %v4209, %v4210
        %v4212 = vrot.slane %v4019, 4
        %v4213 = vadd.f32 %v4019, %v4212
        %v4214 = vrot.slane %v4213, 2
        %v4215 = vadd.f32 %v4213, %v4214
        %v4216 = vrot.slane %v4215, 1
        %v4217 = vadd.f32 %v4215, %v4216
        %v4218 = vrot.slane %v4020, 4
        %v4219 = vadd.f32 %v4020, %v4218
        %v4220 = vrot.slane %v4219, 2
        %v4221 = vadd.f32 %v4219, %v4220
        %v4222 = vrot.slane %v4221, 1
        %v4223 = vadd.f32 %v4221, %v4222
        %v4224 = vrot.slane %v4021, 4
        %v4225 = vadd.f32 %v4021, %v4224
        %v4226 = vrot.slane %v4225, 2
        %v4227 = vadd.f32 %v4225, %v4226
        %v4228 = vrot.slane %v4227, 1
        %v4229 = vadd.f32 %v4227, %v4228
        %v4230 = vrot.slane %v4022, 4
        %v4231 = vadd.f32 %v4022, %v4230
        %v4232 = vrot.slane %v4231, 2
        %v4233 = vadd.f32 %v4231, %v4232
        %v4234 = vrot.slane %v4233, 1
        %v4235 = vadd.f32 %v4233, %v4234
        %v4236 = vrot.slane %v4023, 4
        %v4237 = vadd.f32 %v4023, %v4236
        %v4238 = vrot.slane %v4237, 2
        %v4239 = vadd.f32 %v4237, %v4238
        %v4240 = vrot.slane %v4239, 1
        %v4241 = vadd.f32 %v4239, %v4240
        %v4242 = vrot.slane %v4024, 4
        %v4243 = vadd.f32 %v4024, %v4242
        %v4244 = vrot.slane %v4243, 2
        %v4245 = vadd.f32 %v4243, %v4244
        %v4246 = vrot.slane %v4245, 1
        %v4247 = vadd.f32 %v4245, %v4246
        %v4248 = vrot.slane %v4025, 4
        %v4249 = vadd.f32 %v4025, %v4248
        %v4250 = vrot.slane %v4249, 2
        %v4251 = vadd.f32 %v4249, %v4250
        %v4252 = vrot.slane %v4251, 1
        %v4253 = vadd.f32 %v4251, %v4252
        %v4254 = vrot.slane %v4026, 4
        %v4255 = vadd.f32 %v4026, %v4254
        %v4256 = vrot.slane %v4255, 2
        %v4257 = vadd.f32 %v4255, %v4256
        %v4258 = vrot.slane %v4257, 1
        %v4259 = vadd.f32 %v4257, %v4258
        %v4260 = vrot.slane %v4027, 4
        %v4261 = vadd.f32 %v4027, %v4260
        %v4262 = vrot.slane %v4261, 2
        %v4263 = vadd.f32 %v4261, %v4262
        %v4264 = vrot.slane %v4263, 1
        %v4265 = vadd.f32 %v4263, %v4264
        %v4266 = vrot.slane %v4028, 4
        %v4267 = vadd.f32 %v4028, %v4266
        %v4268 = vrot.slane %v4267, 2
        %v4269 = vadd.f32 %v4267, %v4268
        %v4270 = vrot.slane %v4269, 1
        %v4271 = vadd.f32 %v4269, %v4270
        %v4272 = vrot.slane %v4029, 4
        %v4273 = vadd.f32 %v4029, %v4272
        %v4274 = vrot.slane %v4273, 2
        %v4275 = vadd.f32 %v4273, %v4274
        %v4276 = vrot.slane %v4275, 1
        %v4277 = vadd.f32 %v4275, %v4276
        %v4278 = vrot.slane %v4030, 4
        %v4279 = vadd.f32 %v4030, %v4278
        %v4280 = vrot.slane %v4279, 2
        %v4281 = vadd.f32 %v4279, %v4280
        %v4282 = vrot.slane %v4281, 1
        %v4283 = vadd.f32 %v4281, %v4282
        %v4284 = vrot.slane %v4031, 4
        %v4285 = vadd.f32 %v4031, %v4284
        %v4286 = vrot.slane %v4285, 2
        %v4287 = vadd.f32 %v4285, %v4286
        %v4288 = vrot.slane %v4287, 1
        %v4289 = vadd.f32 %v4287, %v4288
        %v4290 = vrot.slane %v4032, 4
        %v4291 = vadd.f32 %v4032, %v4290
        %v4292 = vrot.slane %v4291, 2
        %v4293 = vadd.f32 %v4291, %v4292
        %v4294 = vrot.slane %v4293, 1
        %v4295 = vadd.f32 %v4293, %v4294
        %v4296 = vrot.slane %v4033, 4
        %v4297 = vadd.f32 %v4033, %v4296
        %v4298 = vrot.slane %v4297, 2
        %v4299 = vadd.f32 %v4297, %v4298
        %v4300 = vrot.slane %v4299, 1
        %v4301 = vadd.f32 %v4299, %v4300
        %v4302 = vrot.slane %v4034, 4
        %v4303 = vadd.f32 %v4034, %v4302
        %v4304 = vrot.slane %v4303, 2
        %v4305 = vadd.f32 %v4303, %v4304
        %v4306 = vrot.slane %v4305, 1
        %v4307 = vadd.f32 %v4305, %v4306
        %v4308 = vrot.slane %v4035, 4
        %v4309 = vadd.f32 %v4035, %v4308
        %v4310 = vrot.slane %v4309, 2
        %v4311 = vadd.f32 %v4309, %v4310
        %v4312 = vrot.slane %v4311, 1
        %v4313 = vadd.f32 %v4311, %v4312
        %v4314 = vrot.slane %v4036, 4
        %v4315 = vadd.f32 %v4036, %v4314
        %v4316 = vrot.slane %v4315, 2
        %v4317 = vadd.f32 %v4315, %v4316
        %v4318 = vrot.slane %v4317, 1
        %v4319 = vadd.f32 %v4317, %v4318
        %v4320 = vrot.slane %v4037, 4
        %v4321 = vadd.f32 %v4037, %v4320
        %v4322 = vrot.slane %v4321, 2
        %v4323 = vadd.f32 %v4321, %v4322
        %v4324 = vrot.slane %v4323, 1
        %v4325 = vadd.f32 %v4323, %v4324
        %v4326 = vrot.slane %v4038, 4
        %v4327 = vadd.f32 %v4038, %v4326
        %v4328 = vrot.slane %v4327, 2
        %v4329 = vadd.f32 %v4327, %v4328
        %v4330 = vrot.slane %v4329, 1
        %v4331 = vadd.f32 %v4329, %v4330
        %v4332 = vrot.slane %v4039, 4
        %v4333 = vadd.f32 %v4039, %v4332
        %v4334 = vrot.slane %v4333, 2
        %v4335 = vadd.f32 %v4333, %v4334
        %v4336 = vrot.slane %v4335, 1
        %v4337 = vadd.f32 %v4335, %v4336
        %v4338 = vrot.slane %v4040, 4
        %v4339 = vadd.f32 %v4040, %v4338
        %v4340 = vrot.slane %v4339, 2
        %v4341 = vadd.f32 %v4339, %v4340
        %v4342 = vrot.slane %v4341, 1
        %v4343 = vadd.f32 %v4341, %v4342
        %v4344 = vrot.slane %v4041, 4
        %v4345 = vadd.f32 %v4041, %v4344
        %v4346 = vrot.slane %v4345, 2
        %v4347 = vadd.f32 %v4345, %v4346
        %v4348 = vrot.slane %v4347, 1
        %v4349 = vadd.f32 %v4347, %v4348
        %v4350 = vrot.slane %v4042, 4
        %v4351 = vadd.f32 %v4042, %v4350
        %v4352 = vrot.slane %v4351, 2
        %v4353 = vadd.f32 %v4351, %v4352
        %v4354 = vrot.slane %v4353, 1
        %v4355 = vadd.f32 %v4353, %v4354
        %v4356 = vrot.slane %v4043, 4
        %v4357 = vadd.f32 %v4043, %v4356
        %v4358 = vrot.slane %v4357, 2
        %v4359 = vadd.f32 %v4357, %v4358
        %v4360 = vrot.slane %v4359, 1
        %v4361 = vadd.f32 %v4359, %v4360
        %v4362 = vrot.slane %v4044, 4
        %v4363 = vadd.f32 %v4044, %v4362
        %v4364 = vrot.slane %v4363, 2
        %v4365 = vadd.f32 %v4363, %v4364
        %v4366 = vrot.slane %v4365, 1
        %v4367 = vadd.f32 %v4365, %v4366
        %v4368 = vrot.slane %v4045, 4
        %v4369 = vadd.f32 %v4045, %v4368
        %v4370 = vrot.slane %v4369, 2
        %v4371 = vadd.f32 %v4369, %v4370
        %v4372 = vrot.slane %v4371, 1
        %v4373 = vadd.f32 %v4371, %v4372
        %v4374 = vrot.slane %v4046, 4
        %v4375 = vadd.f32 %v4046, %v4374
        %v4376 = vrot.slane %v4375, 2
        %v4377 = vadd.f32 %v4375, %v4376
        %v4378 = vrot.slane %v4377, 1
        %v4379 = vadd.f32 %v4377, %v4378
        %v4380 = vrot.slane %v4047, 4
        %v4381 = vadd.f32 %v4047, %v4380
        %v4382 = vrot.slane %v4381, 2
        %v4383 = vadd.f32 %v4381, %v4382
        %v4384 = vrot.slane %v4383, 1
        %v4385 = vadd.f32 %v4383, %v4384
        %v4386 = vrot.slane %v4048, 4
        %v4387 = vadd.f32 %v4048, %v4386
        %v4388 = vrot.slane %v4387, 2
        %v4389 = vadd.f32 %v4387, %v4388
        %v4390 = vrot.slane %v4389, 1
        %v4391 = vadd.f32 %v4389, %v4390
        %v4392 = vrot.slane %v4049, 4
        %v4393 = vadd.f32 %v4049, %v4392
        %v4394 = vrot.slane %v4393, 2
        %v4395 = vadd.f32 %v4393, %v4394
        %v4396 = vrot.slane %v4395, 1
        %v4397 = vadd.f32 %v4395, %v4396
        %v4398 = vrot.slane %v4050, 4
        %v4399 = vadd.f32 %v4050, %v4398
        %v4400 = vrot.slane %v4399, 2
        %v4401 = vadd.f32 %v4399, %v4400
        %v4402 = vrot.slane %v4401, 1
        %v4403 = vadd.f32 %v4401, %v4402
        %v4404 = vrot.slane %v4051, 4
        %v4405 = vadd.f32 %v4051, %v4404
        %v4406 = vrot.slane %v4405, 2
        %v4407 = vadd.f32 %v4405, %v4406
        %v4408 = vrot.slane %v4407, 1
        %v4409 = vadd.f32 %v4407, %v4408
        %v4410 = vrot.slane %v4052, 4
        %v4411 = vadd.f32 %v4052, %v4410
        %v4412 = vrot.slane %v4411, 2
        %v4413 = vadd.f32 %v4411, %v4412
        %v4414 = vrot.slane %v4413, 1
        %v4415 = vadd.f32 %v4413, %v4414
        %v4416 = vrot.slane %v4053, 4
        %v4417 = vadd.f32 %v4053, %v4416
        %v4418 = vrot.slane %v4417, 2
        %v4419 = vadd.f32 %v4417, %v4418
        %v4420 = vrot.slane %v4419, 1
        %v4421 = vadd.f32 %v4419, %v4420
        %v4422 = vrot.slane %v4054, 4
        %v4423 = vadd.f32 %v4054, %v4422
        %v4424 = vrot.slane %v4423, 2
        %v4425 = vadd.f32 %v4423, %v4424
        %v4426 = vrot.slane %v4425, 1
        %v4427 = vadd.f32 %v4425, %v4426
        %v4428 = vrot.slane %v4055, 4
        %v4429 = vadd.f32 %v4055, %v4428
        %v4430 = vrot.slane %v4429, 2
        %v4431 = vadd.f32 %v4429, %v4430
        %v4432 = vrot.slane %v4431, 1
        %v4433 = vadd.f32 %v4431, %v4432
        %v4434 = vrot.slane %v4056, 4
        %v4435 = vadd.f32 %v4056, %v4434
        %v4436 = vrot.slane %v4435, 2
        %v4437 = vadd.f32 %v4435, %v4436
        %v4438 = vrot.slane %v4437, 1
        %v4439 = vadd.f32 %v4437, %v4438
        %v4440 = vrot.slane %v4057, 4
        %v4441 = vadd.f32 %v4057, %v4440
        %v4442 = vrot.slane %v4441, 2
        %v4443 = vadd.f32 %v4441, %v4442
        %v4444 = vrot.slane %v4443, 1
        %v4445 = vadd.f32 %v4443, %v4444
        %v4446 = vrot.slane %v4058, 4
        %v4447 = vadd.f32 %v4058, %v4446
        %v4448 = vrot.slane %v4447, 2
        %v4449 = vadd.f32 %v4447, %v4448
        %v4450 = vrot.slane %v4449, 1
        %v4451 = vadd.f32 %v4449, %v4450
        %v4452 = vrot.slane %v4059, 4
        %v4453 = vadd.f32 %v4059, %v4452
        %v4454 = vrot.slane %v4453, 2
        %v4455 = vadd.f32 %v4453, %v4454
        %v4456 = vrot.slane %v4455, 1
        %v4457 = vadd.f32 %v4455, %v4456
        %v4458 = vrot.slane %v4060, 4
        %v4459 = vadd.f32 %v4060, %v4458
        %v4460 = vrot.slane %v4459, 2
        %v4461 = vadd.f32 %v4459, %v4460
        %v4462 = vrot.slane %v4461, 1
        %v4463 = vadd.f32 %v4461, %v4462
        %v4464 = vrot.slane %v4061, 4
        %v4465 = vadd.f32 %v4061, %v4464
        %v4466 = vrot.slane %v4465, 2
        %v4467 = vadd.f32 %v4465, %v4466
        %v4468 = vrot.slane %v4467, 1
        %v4469 = vadd.f32 %v4467, %v4468
        %v4470 = vrot.slane %v4062, 4
        %v4471 = vadd.f32 %v4062, %v4470
        %v4472 = vrot.slane %v4471, 2
        %v4473 = vadd.f32 %v4471, %v4472
        %v4474 = vrot.slane %v4473, 1
        %v4475 = vadd.f32 %v4473, %v4474
        %v4476 = vrot.slane %v4063, 4
        %v4477 = vadd.f32 %v4063, %v4476
        %v4478 = vrot.slane %v4477, 2
        %v4479 = vadd.f32 %v4477, %v4478
        %v4480 = vrot.slane %v4479, 1
        %v4481 = vadd.f32 %v4479, %v4480
        %v4482 = vrot.slane %v4064, 4
        %v4483 = vadd.f32 %v4064, %v4482
        %v4484 = vrot.slane %v4483, 2
        %v4485 = vadd.f32 %v4483, %v4484
        %v4486 = vrot.slane %v4485, 1
        %v4487 = vadd.f32 %v4485, %v4486
        %v4488 = vrot.slane %v4065, 4
        %v4489 = vadd.f32 %v4065, %v4488
        %v4490 = vrot.slane %v4489, 2
        %v4491 = vadd.f32 %v4489, %v4490
        %v4492 = vrot.slane %v4491, 1
        %v4493 = vadd.f32 %v4491, %v4492
        %v4494 = vrot.slane %v4066, 4
        %v4495 = vadd.f32 %v4066, %v4494
        %v4496 = vrot.slane %v4495, 2
        %v4497 = vadd.f32 %v4495, %v4496
        %v4498 = vrot.slane %v4497, 1
        %v4499 = vadd.f32 %v4497, %v4498
        %v4500 = vrot.slane %v4067, 4
        %v4501 = vadd.f32 %v4067, %v4500
        %v4502 = vrot.slane %v4501, 2
        %v4503 = vadd.f32 %v4501, %v4502
        %v4504 = vrot.slane %v4503, 1
        %v4505 = vadd.f32 %v4503, %v4504
        %v4506 = vrot.slane %v4068, 4
        %v4507 = vadd.f32 %v4068, %v4506
        %v4508 = vrot.slane %v4507, 2
        %v4509 = vadd.f32 %v4507, %v4508
        %v4510 = vrot.slane %v4509, 1
        %v4511 = vadd.f32 %v4509, %v4510
        %v4512 = vrot.slane %v4069, 4
        %v4513 = vadd.f32 %v4069, %v4512
        %v4514 = vrot.slane %v4513, 2
        %v4515 = vadd.f32 %v4513, %v4514
        %v4516 = vrot.slane %v4515, 1
        %v4517 = vadd.f32 %v4515, %v4516
        %v4518 = vrot.slane %v4070, 4
        %v4519 = vadd.f32 %v4070, %v4518
        %v4520 = vrot.slane %v4519, 2
        %v4521 = vadd.f32 %v4519, %v4520
        %v4522 = vrot.slane %v4521, 1
        %v4523 = vadd.f32 %v4521, %v4522
        %v4524 = vrot.slane %v4071, 4
        %v4525 = vadd.f32 %v4071, %v4524
        %v4526 = vrot.slane %v4525, 2
        %v4527 = vadd.f32 %v4525, %v4526
        %v4528 = vrot.slane %v4527, 1
        %v4529 = vadd.f32 %v4527, %v4528
        %v4530 = vrot.slane %v4072, 4
        %v4531 = vadd.f32 %v4072, %v4530
        %v4532 = vrot.slane %v4531, 2
        %v4533 = vadd.f32 %v4531, %v4532
        %v4534 = vrot.slane %v4533, 1
        %v4535 = vadd.f32 %v4533, %v4534
        %v4536 = vrot.slane %v4073, 4
        %v4537 = vadd.f32 %v4073, %v4536
        %v4538 = vrot.slane %v4537, 2
        %v4539 = vadd.f32 %v4537, %v4538
        %v4540 = vrot.slane %v4539, 1
        %v4541 = vadd.f32 %v4539, %v4540
        %v4542 = vrot.slane %v4074, 4
        %v4543 = vadd.f32 %v4074, %v4542
        %v4544 = vrot.slane %v4543, 2
        %v4545 = vadd.f32 %v4543, %v4544
        %v4546 = vrot.slane %v4545, 1
        %v4547 = vadd.f32 %v4545, %v4546
        %v4548 = vrot.slane %v4075, 4
        %v4549 = vadd.f32 %v4075, %v4548
        %v4550 = vrot.slane %v4549, 2
        %v4551 = vadd.f32 %v4549, %v4550
        %v4552 = vrot.slane %v4551, 1
        %v4553 = vadd.f32 %v4551, %v4552
        %v4554 = vrot.slane %v4076, 4
        %v4555 = vadd.f32 %v4076, %v4554
        %v4556 = vrot.slane %v4555, 2
        %v4557 = vadd.f32 %v4555, %v4556
        %v4558 = vrot.slane %v4557, 1
        %v4559 = vadd.f32 %v4557, %v4558
        %v4560 = vrot.slane %v4077, 4
        %v4561 = vadd.f32 %v4077, %v4560
        %v4562 = vrot.slane %v4561, 2
        %v4563 = vadd.f32 %v4561, %v4562
        %v4564 = vrot.slane %v4563, 1
        %v4565 = vadd.f32 %v4563, %v4564
        %v4566 = vrot.slane %v4078, 4
        %v4567 = vadd.f32 %v4078, %v4566
        %v4568 = vrot.slane %v4567, 2
        %v4569 = vadd.f32 %v4567, %v4568
        %v4570 = vrot.slane %v4569, 1
        %v4571 = vadd.f32 %v4569, %v4570
        %v4572 = vrot.slane %v4079, 4
        %v4573 = vadd.f32 %v4079, %v4572
        %v4574 = vrot.slane %v4573, 2
        %v4575 = vadd.f32 %v4573, %v4574
        %v4576 = vrot.slane %v4575, 1
        %v4577 = vadd.f32 %v4575, %v4576
        %v4578 = vrot.slane %v4080, 4
        %v4579 = vadd.f32 %v4080, %v4578
        %v4580 = vrot.slane %v4579, 2
        %v4581 = vadd.f32 %v4579, %v4580
        %v4582 = vrot.slane %v4581, 1
        %v4583 = vadd.f32 %v4581, %v4582
        %v4584 = vrot.slane %v4081, 4
        %v4585 = vadd.f32 %v4081, %v4584
        %v4586 = vrot.slane %v4585, 2
        %v4587 = vadd.f32 %v4585, %v4586
        %v4588 = vrot.slane %v4587, 1
        %v4589 = vadd.f32 %v4587, %v4588
        %v4590 = vrot.slane %v4082, 4
        %v4591 = vadd.f32 %v4082, %v4590
        %v4592 = vrot.slane %v4591, 2
        %v4593 = vadd.f32 %v4591, %v4592
        %v4594 = vrot.slane %v4593, 1
        %v4595 = vadd.f32 %v4593, %v4594
        %v4596 = vrot.slane %v4083, 4
        %v4597 = vadd.f32 %v4083, %v4596
        %v4598 = vrot.slane %v4597, 2
        %v4599 = vadd.f32 %v4597, %v4598
        %v4600 = vrot.slane %v4599, 1
        %v4601 = vadd.f32 %v4599, %v4600
        %v4602 = vrot.slane %v4084, 4
        %v4603 = vadd.f32 %v4084, %v4602
        %v4604 = vrot.slane %v4603, 2
        %v4605 = vadd.f32 %v4603, %v4604
        %v4606 = vrot.slane %v4605, 1
        %v4607 = vadd.f32 %v4605, %v4606
        %v4608 = vrot.slane %v4085, 4
        %v4609 = vadd.f32 %v4085, %v4608
        %v4610 = vrot.slane %v4609, 2
        %v4611 = vadd.f32 %v4609, %v4610
        %v4612 = vrot.slane %v4611, 1
        %v4613 = vadd.f32 %v4611, %v4612
        %v4614 = vrot.slane %v4086, 4
        %v4615 = vadd.f32 %v4086, %v4614
        %v4616 = vrot.slane %v4615, 2
        %v4617 = vadd.f32 %v4615, %v4616
        %v4618 = vrot.slane %v4617, 1
        %v4619 = vadd.f32 %v4617, %v4618
        %v4620 = vrot.slane %v4087, 4
        %v4621 = vadd.f32 %v4087, %v4620
        %v4622 = vrot.slane %v4621, 2
        %v4623 = vadd.f32 %v4621, %v4622
        %v4624 = vrot.slane %v4623, 1
        %v4625 = vadd.f32 %v4623, %v4624
        %v4626 = vrot.slane %v4088, 4
        %v4627 = vadd.f32 %v4088, %v4626
        %v4628 = vrot.slane %v4627, 2
        %v4629 = vadd.f32 %v4627, %v4628
        %v4630 = vrot.slane %v4629, 1
        %v4631 = vadd.f32 %v4629, %v4630
        %v4632 = vrot.slane %v4089, 4
        %v4633 = vadd.f32 %v4089, %v4632
        %v4634 = vrot.slane %v4633, 2
        %v4635 = vadd.f32 %v4633, %v4634
        %v4636 = vrot.slane %v4635, 1
        %v4637 = vadd.f32 %v4635, %v4636
        %v4638 = vrot.slane %v4090, 4
        %v4639 = vadd.f32 %v4090, %v4638
        %v4640 = vrot.slane %v4639, 2
        %v4641 = vadd.f32 %v4639, %v4640
        %v4642 = vrot.slane %v4641, 1
        %v4643 = vadd.f32 %v4641, %v4642
        %v4644 = vrot.slane %v4091, 4
        %v4645 = vadd.f32 %v4091, %v4644
        %v4646 = vrot.slane %v4645, 2
        %v4647 = vadd.f32 %v4645, %v4646
        %v4648 = vrot.slane %v4647, 1
        %v4649 = vadd.f32 %v4647, %v4648
        %v4650 = vrot.slane %v4092, 4
        %v4651 = vadd.f32 %v4092, %v4650
        %v4652 = vrot.slane %v4651, 2
        %v4653 = vadd.f32 %v4651, %v4652
        %v4654 = vrot.slane %v4653, 1
        %v4655 = vadd.f32 %v4653, %v4654
        %v4656 = vrot.slane %v4093, 4
        %v4657 = vadd.f32 %v4093, %v4656
        %v4658 = vrot.slane %v4657, 2
        %v4659 = vadd.f32 %v4657, %v4658
        %v4660 = vrot.slane %v4659, 1
        %v4661 = vadd.f32 %v4659, %v4660
        %v4662 = vrot.slane %v4094, 4
        %v4663 = vadd.f32 %v4094, %v4662
        %v4664 = vrot.slane %v4663, 2
        %v4665 = vadd.f32 %v4663, %v4664
        %v4666 = vrot.slane %v4665, 1
        %v4667 = vadd.f32 %v4665, %v4666
        %v4668 = vrot.slane %v4095, 4
        %v4669 = vadd.f32 %v4095, %v4668
        %v4670 = vrot.slane %v4669, 2
        %v4671 = vadd.f32 %v4669, %v4670
        %v4672 = vrot.slane %v4671, 1
        %v4673 = vadd.f32 %v4671, %v4672
        %v4674 = vrot.slane %v4096, 4
        %v4675 = vadd.f32 %v4096, %v4674
        %v4676 = vrot.slane %v4675, 2
        %v4677 = vadd.f32 %v4675, %v4676
        %v4678 = vrot.slane %v4677, 1
        %v4679 = vadd.f32 %v4677, %v4678
        %v4680 = vrot.slane %v4097, 4
        %v4681 = vadd.f32 %v4097, %v4680
        %v4682 = vrot.slane %v4681, 2
        %v4683 = vadd.f32 %v4681, %v4682
        %v4684 = vrot.slane %v4683, 1
        %v4685 = vadd.f32 %v4683, %v4684
        %v4686 = vrot.slane %v4098, 4
        %v4687 = vadd.f32 %v4098, %v4686
        %v4688 = vrot.slane %v4687, 2
        %v4689 = vadd.f32 %v4687, %v4688
        %v4690 = vrot.slane %v4689, 1
        %v4691 = vadd.f32 %v4689, %v4690
        %v4692 = vrot.slane %v4099, 4
        %v4693 = vadd.f32 %v4099, %v4692
        %v4694 = vrot.slane %v4693, 2
        %v4695 = vadd.f32 %v4693, %v4694
        %v4696 = vrot.slane %v4695, 1
        %v4697 = vadd.f32 %v4695, %v4696
        %v4698 = vrot.slane %v4100, 4
        %v4699 = vadd.f32 %v4100, %v4698
        %v4700 = vrot.slane %v4699, 2
        %v4701 = vadd.f32 %v4699, %v4700
        %v4702 = vrot.slane %v4701, 1
        %v4703 = vadd.f32 %v4701, %v4702
        %v4704 = vrot.slane %v4101, 4
        %v4705 = vadd.f32 %v4101, %v4704
        %v4706 = vrot.slane %v4705, 2
        %v4707 = vadd.f32 %v4705, %v4706
        %v4708 = vrot.slane %v4707, 1
        %v4709 = vadd.f32 %v4707, %v4708
        %v4710 = vrot.slane %v4102, 4
        %v4711 = vadd.f32 %v4102, %v4710
        %v4712 = vrot.slane %v4711, 2
        %v4713 = vadd.f32 %v4711, %v4712
        %v4714 = vrot.slane %v4713, 1
        %v4715 = vadd.f32 %v4713, %v4714
        %v4716 = vrot.slane %v4103, 4
        %v4717 = vadd.f32 %v4103, %v4716
        %v4718 = vrot.slane %v4717, 2
        %v4719 = vadd.f32 %v4717, %v4718
        %v4720 = vrot.slane %v4719, 1
        %v4721 = vadd.f32 %v4719, %v4720
        %v4722 = vrot.slane %v4104, 4
        %v4723 = vadd.f32 %v4104, %v4722
        %v4724 = vrot.slane %v4723, 2
        %v4725 = vadd.f32 %v4723, %v4724
        %v4726 = vrot.slane %v4725, 1
        %v4727 = vadd.f32 %v4725, %v4726
        %v4728 = vrot.slane %v4105, 4
        %v4729 = vadd.f32 %v4105, %v4728
        %v4730 = vrot.slane %v4729, 2
        %v4731 = vadd.f32 %v4729, %v4730
        %v4732 = vrot.slane %v4731, 1
        %v4733 = vadd.f32 %v4731, %v4732
        %v4734 = vrot.slane %v4106, 4
        %v4735 = vadd.f32 %v4106, %v4734
        %v4736 = vrot.slane %v4735, 2
        %v4737 = vadd.f32 %v4735, %v4736
        %v4738 = vrot.slane %v4737, 1
        %v4739 = vadd.f32 %v4737, %v4738
        %v4740 = vrot.slane %v4107, 4
        %v4741 = vadd.f32 %v4107, %v4740
        %v4742 = vrot.slane %v4741, 2
        %v4743 = vadd.f32 %v4741, %v4742
        %v4744 = vrot.slane %v4743, 1
        %v4745 = vadd.f32 %v4743, %v4744
        %v4746 = vrot.slane %v4108, 4
        %v4747 = vadd.f32 %v4108, %v4746
        %v4748 = vrot.slane %v4747, 2
        %v4749 = vadd.f32 %v4747, %v4748
        %v4750 = vrot.slane %v4749, 1
        %v4751 = vadd.f32 %v4749, %v4750
        %v4752 = vrot.slane %v4109, 4
        %v4753 = vadd.f32 %v4109, %v4752
        %v4754 = vrot.slane %v4753, 2
        %v4755 = vadd.f32 %v4753, %v4754
        %v4756 = vrot.slane %v4755, 1
        %v4757 = vadd.f32 %v4755, %v4756
        %v4758 = vrot.slane %v4110, 4
        %v4759 = vadd.f32 %v4110, %v4758
        %v4760 = vrot.slane %v4759, 2
        %v4761 = vadd.f32 %v4759, %v4760
        %v4762 = vrot.slane %v4761, 1
        %v4763 = vadd.f32 %v4761, %v4762
        %v4764 = vrot.slane %v4111, 4
        %v4765 = vadd.f32 %v4111, %v4764
        %v4766 = vrot.slane %v4765, 2
        %v4767 = vadd.f32 %v4765, %v4766
        %v4768 = vrot.slane %v4767, 1
        %v4769 = vadd.f32 %v4767, %v4768
        %v4770 = vrot.slane %v4112, 4
        %v4771 = vadd.f32 %v4112, %v4770
        %v4772 = vrot.slane %v4771, 2
        %v4773 = vadd.f32 %v4771, %v4772
        %v4774 = vrot.slane %v4773, 1
        %v4775 = vadd.f32 %v4773, %v4774
        %v4776 = vrot.slane %v4113, 4
        %v4777 = vadd.f32 %v4113, %v4776
        %v4778 = vrot.slane %v4777, 2
        %v4779 = vadd.f32 %v4777, %v4778
        %v4780 = vrot.slane %v4779, 1
        %v4781 = vadd.f32 %v4779, %v4780
        %v4782 = vrot.slane %v4114, 4
        %v4783 = vadd.f32 %v4114, %v4782
        %v4784 = vrot.slane %v4783, 2
        %v4785 = vadd.f32 %v4783, %v4784
        %v4786 = vrot.slane %v4785, 1
        %v4787 = vadd.f32 %v4785, %v4786
        %v4788 = vrot.slane %v4115, 4
        %v4789 = vadd.f32 %v4115, %v4788
        %v4790 = vrot.slane %v4789, 2
        %v4791 = vadd.f32 %v4789, %v4790
        %v4792 = vrot.slane %v4791, 1
        %v4793 = vadd.f32 %v4791, %v4792
        %v4794 = vrot.slane %v4116, 4
        %v4795 = vadd.f32 %v4116, %v4794
        %v4796 = vrot.slane %v4795, 2
        %v4797 = vadd.f32 %v4795, %v4796
        %v4798 = vrot.slane %v4797, 1
        %v4799 = vadd.f32 %v4797, %v4798
        %v4800 = vrot.slane %v4117, 4
        %v4801 = vadd.f32 %v4117, %v4800
        %v4802 = vrot.slane %v4801, 2
        %v4803 = vadd.f32 %v4801, %v4802
        %v4804 = vrot.slane %v4803, 1
        %v4805 = vadd.f32 %v4803, %v4804
        %v4806 = vrot.slane %v4118, 4
        %v4807 = vadd.f32 %v4118, %v4806
        %v4808 = vrot.slane %v4807, 2
        %v4809 = vadd.f32 %v4807, %v4808
        %v4810 = vrot.slane %v4809, 1
        %v4811 = vadd.f32 %v4809, %v4810
        %v4812 = vrot.slane %v4119, 4
        %v4813 = vadd.f32 %v4119, %v4812
        %v4814 = vrot.slane %v4813, 2
        %v4815 = vadd.f32 %v4813, %v4814
        %v4816 = vrot.slane %v4815, 1
        %v4817 = vadd.f32 %v4815, %v4816
        %v4818 = vrot.slane %v4120, 4
        %v4819 = vadd.f32 %v4120, %v4818
        %v4820 = vrot.slane %v4819, 2
        %v4821 = vadd.f32 %v4819, %v4820
        %v4822 = vrot.slane %v4821, 1
        %v4823 = vadd.f32 %v4821, %v4822
        %v4824 = vrot.slane %v4121, 4
        %v4825 = vadd.f32 %v4121, %v4824
        %v4826 = vrot.slane %v4825, 2
        %v4827 = vadd.f32 %v4825, %v4826
        %v4828 = vrot.slane %v4827, 1
        %v4829 = vadd.f32 %v4827, %v4828
        %v4830 = vrot.slane %v4122, 4
        %v4831 = vadd.f32 %v4122, %v4830
        %v4832 = vrot.slane %v4831, 2
        %v4833 = vadd.f32 %v4831, %v4832
        %v4834 = vrot.slane %v4833, 1
        %v4835 = vadd.f32 %v4833, %v4834
        %v4836 = vrot.slane %v4123, 4
        %v4837 = vadd.f32 %v4123, %v4836
        %v4838 = vrot.slane %v4837, 2
        %v4839 = vadd.f32 %v4837, %v4838
        %v4840 = vrot.slane %v4839, 1
        %v4841 = vadd.f32 %v4839, %v4840
        %v4842 = vrot.slane %v4124, 4
        %v4843 = vadd.f32 %v4124, %v4842
        %v4844 = vrot.slane %v4843, 2
        %v4845 = vadd.f32 %v4843, %v4844
        %v4846 = vrot.slane %v4845, 1
        %v4847 = vadd.f32 %v4845, %v4846
        %v4848 = vrot.slane %v4125, 4
        %v4849 = vadd.f32 %v4125, %v4848
        %v4850 = vrot.slane %v4849, 2
        %v4851 = vadd.f32 %v4849, %v4850
        %v4852 = vrot.slane %v4851, 1
        %v4853 = vadd.f32 %v4851, %v4852
        %v4854 = vrot.slane %v4126, 4
        %v4855 = vadd.f32 %v4126, %v4854
        %v4856 = vrot.slane %v4855, 2
        %v4857 = vadd.f32 %v4855, %v4856
        %v4858 = vrot.slane %v4857, 1
        %v4859 = vadd.f32 %v4857, %v4858
        %v4860 = vrot.slane %v4127, 4
        %v4861 = vadd.f32 %v4127, %v4860
        %v4862 = vrot.slane %v4861, 2
        %v4863 = vadd.f32 %v4861, %v4862
        %v4864 = vrot.slane %v4863, 1
        %v4865 = vadd.f32 %v4863, %v4864
        %v4866 = vrot.slane %v4128, 4
        %v4867 = vadd.f32 %v4128, %v4866
        %v4868 = vrot.slane %v4867, 2
        %v4869 = vadd.f32 %v4867, %v4868
        %v4870 = vrot.slane %v4869, 1
        %v4871 = vadd.f32 %v4869, %v4870
        %v4872 = vrot.slane %v4129, 4
        %v4873 = vadd.f32 %v4129, %v4872
        %v4874 = vrot.slane %v4873, 2
        %v4875 = vadd.f32 %v4873, %v4874
        %v4876 = vrot.slane %v4875, 1
        %v4877 = vadd.f32 %v4875, %v4876
        %v4878 = vrot.slane %v4130, 4
        %v4879 = vadd.f32 %v4130, %v4878
        %v4880 = vrot.slane %v4879, 2
        %v4881 = vadd.f32 %v4879, %v4880
        %v4882 = vrot.slane %v4881, 1
        %v4883 = vadd.f32 %v4881, %v4882
        %v4884 = vrot.slane %v4131, 4
        %v4885 = vadd.f32 %v4131, %v4884
        %v4886 = vrot.slane %v4885, 2
        %v4887 = vadd.f32 %v4885, %v4886
        %v4888 = vrot.slane %v4887, 1
        %v4889 = vadd.f32 %v4887, %v4888
        %v4890 = vrot.slane %v4132, 4
        %v4891 = vadd.f32 %v4132, %v4890
        %v4892 = vrot.slane %v4891, 2
        %v4893 = vadd.f32 %v4891, %v4892
        %v4894 = vrot.slane %v4893, 1
        %v4895 = vadd.f32 %v4893, %v4894
        %v4896 = vrot.slane %v4133, 4
        %v4897 = vadd.f32 %v4133, %v4896
        %v4898 = vrot.slane %v4897, 2
        %v4899 = vadd.f32 %v4897, %v4898
        %v4900 = vrot.slane %v4899, 1
        %v4901 = vadd.f32 %v4899, %v4900
        %v4902 = vld [vmem:[%s4] sm:$0xff]
        %v4903 = vld [vmem:[%s4 + $0x8] sm:$0xff]
        %v4904 = vld [vmem:[%s4 + $0x10] sm:$0xff]
        %v4905 = vld [vmem:[%s4 + $0x18] sm:$0xff]
        %v4906 = vld [vmem:[%s4 + $0x20] sm:$0xff]
        %v4907 = vld [vmem:[%s4 + $0x28] sm:$0xff]
        %v4908 = vld [vmem:[%s4 + $0x30] sm:$0xff]
        %v4909 = vld [vmem:[%s4 + $0x38] sm:$0xff]
        %v4910 = vld [vmem:[%s4 + $0x40] sm:$0xff]
        %v4911 = vld [vmem:[%s4 + $0x48] sm:$0xff]
        %v4912 = vld [vmem:[%s4 + $0x50] sm:$0xff]
        %v4913 = vld [vmem:[%s4 + $0x58] sm:$0xff]
        %v4914 = vld [vmem:[%s4 + $0x60] sm:$0xff]
        %v4915 = vld [vmem:[%s4 + $0x68] sm:$0xff]
        %v4916 = vld [vmem:[%s4 + $0x70] sm:$0xff]
        %v4917 = vld [vmem:[%s4 + $0x78] sm:$0xff]
        %v4918 = vld [vmem:[%s5] sm:$0x1]
        %v4920 = vlaneseq
        %v4921 = vshrl.u32 %v4920, 7
        %v4922 = vsub.s32 0, %v4921
        %v4923 = vrot.slane %v4918, %v4922
        %vm5053 = vcmask 1041409
        %v5054 = vsel %vm5053, %v4145, %v4139
        %vm5055 = vcmask 1042434
        %v5056 = vsel %vm5055, %v4151, %v5054
        %vm5057 = vcmask 1043459
        %v5058 = vsel %vm5057, %v4157, %v5056
        %vm5059 = vcmask 1044484
        %v5060 = vsel %vm5059, %v4163, %v5058
        %vm5061 = vcmask 1045509
        %v5062 = vsel %vm5061, %v4169, %v5060
        %vm5063 = vcmask 1046534
        %v5064 = vsel %vm5063, %v4175, %v5062
        %vm5065 = vcmask 1047559
        %v5066 = vsel %vm5065, %v4181, %v5064
        %v5067 = vsel %vm5053, %v4193, %v4187
        %v5068 = vsel %vm5055, %v4199, %v5067
        %v5069 = vsel %vm5057, %v4205, %v5068
        %v5070 = vsel %vm5059, %v4211, %v5069
        %v5071 = vsel %vm5061, %v4217, %v5070
        %v5072 = vsel %vm5063, %v4223, %v5071
        %v5073 = vsel %vm5065, %v4229, %v5072
        %v5074 = vsel %vm5053, %v4241, %v4235
        %v5075 = vsel %vm5055, %v4247, %v5074
        %v5076 = vsel %vm5057, %v4253, %v5075
        %v5077 = vsel %vm5059, %v4259, %v5076
        %v5078 = vsel %vm5061, %v4265, %v5077
        %v5079 = vsel %vm5063, %v4271, %v5078
        %v5080 = vsel %vm5065, %v4277, %v5079
        %v5081 = vsel %vm5053, %v4289, %v4283
        %v5082 = vsel %vm5055, %v4295, %v5081
        %v5083 = vsel %vm5057, %v4301, %v5082
        %v5084 = vsel %vm5059, %v4307, %v5083
        %v5085 = vsel %vm5061, %v4313, %v5084
        %v5086 = vsel %vm5063, %v4319, %v5085
        %v5087 = vsel %vm5065, %v4325, %v5086
        %v5088 = vsel %vm5053, %v4337, %v4331
        %v5089 = vsel %vm5055, %v4343, %v5088
        %v5090 = vsel %vm5057, %v4349, %v5089
        %v5091 = vsel %vm5059, %v4355, %v5090
        %v5092 = vsel %vm5061, %v4361, %v5091
        %v5093 = vsel %vm5063, %v4367, %v5092
        %v5094 = vsel %vm5065, %v4373, %v5093
        %v5095 = vsel %vm5053, %v4385, %v4379
        %v5096 = vsel %vm5055, %v4391, %v5095
        %v5097 = vsel %vm5057, %v4397, %v5096
        %v5098 = vsel %vm5059, %v4403, %v5097
        %v5099 = vsel %vm5061, %v4409, %v5098
        %v5100 = vsel %vm5063, %v4415, %v5099
        %v5101 = vsel %vm5065, %v4421, %v5100
        %v5102 = vsel %vm5053, %v4433, %v4427
        %v5103 = vsel %vm5055, %v4439, %v5102
        %v5104 = vsel %vm5057, %v4445, %v5103
        %v5105 = vsel %vm5059, %v4451, %v5104
        %v5106 = vsel %vm5061, %v4457, %v5105
        %v5107 = vsel %vm5063, %v4463, %v5106
        %v5108 = vsel %vm5065, %v4469, %v5107
        %v5109 = vsel %vm5053, %v4481, %v4475
        %v5110 = vsel %vm5055, %v4487, %v5109
        %v5111 = vsel %vm5057, %v4493, %v5110
        %v5112 = vsel %vm5059, %v4499, %v5111
        %v5113 = vsel %vm5061, %v4505, %v5112
        %v5114 = vsel %vm5063, %v4511, %v5113
        %v5115 = vsel %vm5065, %v4517, %v5114
        %v5116 = vsel %vm5053, %v4529, %v4523
        %v5117 = vsel %vm5055, %v4535, %v5116
        %v5118 = vsel %vm5057, %v4541, %v5117
        %v5119 = vsel %vm5059, %v4547, %v5118
        %v5120 = vsel %vm5061, %v4553, %v5119
        %v5121 = vsel %vm5063, %v4559, %v5120
        %v5122 = vsel %vm5065, %v4565, %v5121
        %v5123 = vsel %vm5053, %v4577, %v4571
        %v5124 = vsel %vm5055, %v4583, %v5123
        %v5125 = vsel %vm5057, %v4589, %v5124
        %v5126 = vsel %vm5059, %v4595, %v5125
        %v5127 = vsel %vm5061, %v4601, %v5126
        %v5128 = vsel %vm5063, %v4607, %v5127
        %v5129 = vsel %vm5065, %v4613, %v5128
        %v5130 = vsel %vm5053, %v4625, %v4619
        %v5131 = vsel %vm5055, %v4631, %v5130
        %v5132 = vsel %vm5057, %v4637, %v5131
        %v5133 = vsel %vm5059, %v4643, %v5132
        %v5134 = vsel %vm5061, %v4649, %v5133
        %v5135 = vsel %vm5063, %v4655, %v5134
        %v5136 = vsel %vm5065, %v4661, %v5135
        %v5137 = vsel %vm5053, %v4673, %v4667
        %v5138 = vsel %vm5055, %v4679, %v5137
        %v5139 = vsel %vm5057, %v4685, %v5138
        %v5140 = vsel %vm5059, %v4691, %v5139
        %v5141 = vsel %vm5061, %v4697, %v5140
        %v5142 = vsel %vm5063, %v4703, %v5141
        %v5143 = vsel %vm5065, %v4709, %v5142
        %v5144 = vsel %vm5053, %v4721, %v4715
        %v5145 = vsel %vm5055, %v4727, %v5144
        %v5146 = vsel %vm5057, %v4733, %v5145
        %v5147 = vsel %vm5059, %v4739, %v5146
        %v5148 = vsel %vm5061, %v4745, %v5147
        %v5149 = vsel %vm5063, %v4751, %v5148
        %v5150 = vsel %vm5065, %v4757, %v5149
        %v5151 = vsel %vm5053, %v4769, %v4763
        %v5152 = vsel %vm5055, %v4775, %v5151
        %v5153 = vsel %vm5057, %v4781, %v5152
        %v5154 = vsel %vm5059, %v4787, %v5153
        %v5155 = vsel %vm5061, %v4793, %v5154
        %v5156 = vsel %vm5063, %v4799, %v5155
        %v5157 = vsel %vm5065, %v4805, %v5156
        %v5158 = vsel %vm5053, %v4817, %v4811
        %v5159 = vsel %vm5055, %v4823, %v5158
        %v5160 = vsel %vm5057, %v4829, %v5159
        %v5161 = vsel %vm5059, %v4835, %v5160
        %v5162 = vsel %vm5061, %v4841, %v5161
        %v5163 = vsel %vm5063, %v4847, %v5162
        %v5164 = vsel %vm5065, %v4853, %v5163
        %v5165 = vsel %vm5053, %v4865, %v4859
        %v5166 = vsel %vm5055, %v4871, %v5165
        %v5167 = vsel %vm5057, %v4877, %v5166
        %v5168 = vsel %vm5059, %v4883, %v5167
        %v5169 = vsel %vm5061, %v4889, %v5168
        %v5170 = vsel %vm5063, %v4895, %v5169
        %v5171 = vsel %vm5065, %v4901, %v5170
        %5188 = vmatprep.subr.mxu0 0.0
        %5189 = vmatpush1.msra.mxu0 %v4917
        %5190 = vmatprep.subr.mxu0 0.0
        %5191 = vmatpush1.msra.mxu0 %v4916
        %5192 = vmatprep.subr.mxu0 0.0
        %5193 = vmatpush1.msra.mxu0 %v4915
        %5194 = vmatprep.subr.mxu0 0.0
        %5195 = vmatpush1.msra.mxu0 %v4914
        %5196 = vmatprep.subr.mxu0 0.0
        %5197 = vmatpush1.msra.mxu0 %v4913
        %5198 = vmatprep.subr.mxu0 0.0
        %5199 = vmatpush1.msra.mxu0 %v4912
        %5200 = vmatprep.subr.mxu0 0.0
        %5201 = vmatpush1.msra.mxu0 %v4911
        %5202 = vmatprep.subr.mxu0 0.0
        %5203 = vmatpush1.msra.mxu0 %v4910
        %5204 = vmatprep.subr.mxu0 0.0
        %5205 = vmatpush1.msra.mxu0 %v4909
        %5206 = vmatprep.subr.mxu0 0.0
        %5207 = vmatpush1.msra.mxu0 %v4908
        %5208 = vmatprep.subr.mxu0 0.0
        %5209 = vmatpush1.msra.mxu0 %v4907
        %5210 = vmatprep.subr.mxu0 0.0
        %5211 = vmatpush1.msra.mxu0 %v4906
        %5212 = vmatprep.subr.mxu0 0.0
        %5213 = vmatpush1.msra.mxu0 %v4905
        %5214 = vmatprep.subr.mxu0 0.0
        %5215 = vmatpush1.msra.mxu0 %v4904
        %5216 = vmatprep.subr.mxu0 0.0
        %5217 = vmatpush1.msra.mxu0 %v4903
        %5218 = vmatprep.subr.mxu0 0.0
        %5219 = vmatpush1.msra.mxu0 %v4902
        %5220 = vmatprep.subr.mxu0 0.0
        %5221 = vmatpush2.msra.mxu0 0.0
        %5222 = vmatprep.subr.mxu0 0.0
        %5223 = vmatpush2.msra.mxu0 0.0
        %5224 = vmatprep.subr.mxu0 0.0
        %5225 = vmatpush2.msra.mxu0 0.0
        %5226 = vmatprep.subr.mxu0 0.0
        %5227 = vmatpush2.msra.mxu0 0.0
        %5228 = vmatprep.subr.mxu0 0.0
        %5229 = vmatpush2.msra.mxu0 0.0
        %5230 = vmatprep.subr.mxu0 0.0
        %5231 = vmatpush2.msra.mxu0 0.0
        %5232 = vmatprep.subr.mxu0 0.0
        %5233 = vmatpush2.msra.mxu0 0.0
        %5234 = vmatprep.subr.mxu0 0.0
        %5235 = vmatpush2.msra.mxu0 0.0
        %5236 = vmatprep.subr.mxu0 0.0
        %5237 = vmatpush2.msra.mxu0 0.0
        %5238 = vmatprep.subr.mxu0 0.0
        %5239 = vmatpush2.msra.mxu0 0.0
        %5240 = vmatprep.subr.mxu0 0.0
        %5241 = vmatpush2.msra.mxu0 0.0
        %5242 = vmatprep.subr.mxu0 0.0
        %5243 = vmatpush2.msra.mxu0 0.0
        %5244 = vmatprep.subr.mxu0 0.0
        %5245 = vmatpush2.msra.mxu0 0.0
        %5246 = vmatprep.subr.mxu0 0.0
        %5247 = vmatpush2.msra.mxu0 0.0
        %5248 = vmatprep.subr.mxu0 0.0
        %5249 = vmatpush2.msra.mxu0 0.0
        %5250 = vmatprep.subr.mxu0 0.0
        %5251 = vmatpush2.msra.mxu0 0.0
        %5252 = vmatprep.mubr.f32.mxu0 0.0
        %5253 = vmatmul.mubr.f32.gmra.mxu0 %v5066
        %v5254 = vpop.f32.mrf.mxu0
        %v5255 = vadd.f32 %v4923, %v5254
        %v5256 = vpop.f32.mrf.mxu0
        %5257 = vmatprep.mubr.f32.mxu0 0.0
        %5258 = vmatmul.mubr.f32.gmra.mxu0 %v5073
        %v5259 = vpop.f32.mrf.mxu0
        %v5260 = vadd.f32 %v4923, %v5259
        %v5261 = vpop.f32.mrf.mxu0
        %5262 = vmatprep.mubr.f32.mxu0 0.0
        %5263 = vmatmul.mubr.f32.gmra.mxu0 %v5080
        %v5264 = vpop.f32.mrf.mxu0
        %v5265 = vadd.f32 %v4923, %v5264
        %v5266 = vpop.f32.mrf.mxu0
        %5267 = vmatprep.mubr.f32.mxu0 0.0
        %5268 = vmatmul.mubr.f32.gmra.mxu0 %v5087
        %v5269 = vpop.f32.mrf.mxu0
        %v5270 = vadd.f32 %v4923, %v5269
        %v5271 = vpop.f32.mrf.mxu0
        %5272 = vmatprep.mubr.f32.mxu0 0.0
        %5273 = vmatmul.mubr.f32.gmra.mxu0 %v5094
        %v5274 = vpop.f32.mrf.mxu0
        %v5275 = vadd.f32 %v4923, %v5274
        %v5276 = vpop.f32.mrf.mxu0
        %5277 = vmatprep.mubr.f32.mxu0 0.0
        %5278 = vmatmul.mubr.f32.gmra.mxu0 %v5101
        %v5279 = vpop.f32.mrf.mxu0
        %v5280 = vadd.f32 %v4923, %v5279
        %v5281 = vpop.f32.mrf.mxu0
        %5282 = vmatprep.mubr.f32.mxu0 0.0
        %5283 = vmatmul.mubr.f32.gmra.mxu0 %v5108
        %v5284 = vpop.f32.mrf.mxu0
        %v5285 = vadd.f32 %v4923, %v5284
        %v5286 = vpop.f32.mrf.mxu0
        %5287 = vmatprep.mubr.f32.mxu0 0.0
        %5288 = vmatmul.mubr.f32.gmra.mxu0 %v5115
        %v5289 = vpop.f32.mrf.mxu0
        %v5290 = vadd.f32 %v4923, %v5289
        %v5291 = vpop.f32.mrf.mxu0
        %5292 = vmatprep.mubr.f32.mxu0 0.0
        %5293 = vmatmul.mubr.f32.gmra.mxu0 %v5122
        %v5294 = vpop.f32.mrf.mxu0
        %v5295 = vadd.f32 %v4923, %v5294
        %v5296 = vpop.f32.mrf.mxu0
        %5297 = vmatprep.mubr.f32.mxu0 0.0
        %5298 = vmatmul.mubr.f32.gmra.mxu0 %v5129
        %v5299 = vpop.f32.mrf.mxu0
        %v5300 = vadd.f32 %v4923, %v5299
        %v5301 = vpop.f32.mrf.mxu0
        %5302 = vmatprep.mubr.f32.mxu0 0.0
        %5303 = vmatmul.mubr.f32.gmra.mxu0 %v5136
        %v5304 = vpop.f32.mrf.mxu0
        %v5305 = vadd.f32 %v4923, %v5304
        %v5306 = vpop.f32.mrf.mxu0
        %5307 = vmatprep.mubr.f32.mxu0 0.0
        %5308 = vmatmul.mubr.f32.gmra.mxu0 %v5143
        %v5309 = vpop.f32.mrf.mxu0
        %v5310 = vadd.f32 %v4923, %v5309
        %v5311 = vpop.f32.mrf.mxu0
        %5312 = vmatprep.mubr.f32.mxu0 0.0
        %5313 = vmatmul.mubr.f32.gmra.mxu0 %v5150
        %v5314 = vpop.f32.mrf.mxu0
        %v5315 = vadd.f32 %v4923, %v5314
        %v5316 = vpop.f32.mrf.mxu0
        %5317 = vmatprep.mubr.f32.mxu0 0.0
        %5318 = vmatmul.mubr.f32.gmra.mxu0 %v5157
        %v5319 = vpop.f32.mrf.mxu0
        %v5320 = vadd.f32 %v4923, %v5319
        %v5321 = vpop.f32.mrf.mxu0
        %5322 = vmatprep.mubr.f32.mxu0 0.0
        %5323 = vmatmul.mubr.f32.gmra.mxu0 %v5164
        %v5324 = vpop.f32.mrf.mxu0
        %v5325 = vadd.f32 %v4923, %v5324
        %v5326 = vpop.f32.mrf.mxu0
        %5327 = vmatprep.mubr.f32.mxu0 0.0
        %5328 = vmatmul.mubr.f32.gmra.mxu0 %v5171
        %v5329 = vpop.f32.mrf.mxu0
        %v5330 = vadd.f32 %v4923, %v5329
        %v5331 = vpop.f32.mrf.mxu0
        %5332 = vdwg.mxu0
        %v5333 = vmax.f32 %v5255, 0.0
        %v5334 = vmax.f32 %v5260, 0.0
        %v5335 = vmax.f32 %v5265, 0.0
        %v5336 = vmax.f32 %v5270, 0.0
        %v5337 = vmax.f32 %v5275, 0.0
        %v5338 = vmax.f32 %v5280, 0.0
        %v5339 = vmax.f32 %v5285, 0.0
        %v5340 = vmax.f32 %v5290, 0.0
        %v5341 = vmax.f32 %v5295, 0.0
        %v5342 = vmax.f32 %v5300, 0.0
        %v5343 = vmax.f32 %v5305, 0.0
        %v5344 = vmax.f32 %v5310, 0.0
        %v5345 = vmax.f32 %v5315, 0.0
        %v5346 = vmax.f32 %v5320, 0.0
        %v5347 = vmax.f32 %v5325, 0.0
        %v5348 = vmax.f32 %v5330, 0.0
        %v5349 = vld [vmem:[%s6] sm:$0xff]
        %v5350 = vld [vmem:[%s6 + $0x8] sm:$0xff]
        %v5351 = vld [vmem:[%s7] sm:$0x1]
        %v5353 = vlaneseq
        %v5354 = vshrl.u32 %v5353, 7
        %v5355 = vsub.s32 0, %v5354
        %v5356 = vrot.slane %v5351, %v5355
        %vm5358 = vcmask 130048
        %v5360 = vsel %vm5358, %v5333, 0
        %v5363 = vsel %vm5358, %v5334, 0
        %v5366 = vsel %vm5358, %v5335, 0
        %v5369 = vsel %vm5358, %v5336, 0
        %v5372 = vsel %vm5358, %v5337, 0
        %v5375 = vsel %vm5358, %v5338, 0
        %v5378 = vsel %vm5358, %v5339, 0
        %v5381 = vsel %vm5358, %v5340, 0
        %v5384 = vsel %vm5358, %v5341, 0
        %v5387 = vsel %vm5358, %v5342, 0
        %v5390 = vsel %vm5358, %v5343, 0
        %v5393 = vsel %vm5358, %v5344, 0
        %v5396 = vsel %vm5358, %v5345, 0
        %v5399 = vsel %vm5358, %v5346, 0
        %v5402 = vsel %vm5358, %v5347, 0
        %v5405 = vsel %vm5358, %v5348, 0
        %5407 = vmatprep.subr.mxu0 0.0
        %5408 = vmatpush1.msra.mxu0 0.0
        %5409 = vmatprep.subr.mxu0 0.0
        %5410 = vmatpush1.msra.mxu0 0.0
        %5411 = vmatprep.subr.mxu0 0.0
        %5412 = vmatpush1.msra.mxu0 0.0
        %5413 = vmatprep.subr.mxu0 0.0
        %5414 = vmatpush1.msra.mxu0 0.0
        %5415 = vmatprep.subr.mxu0 0.0
        %5416 = vmatpush1.msra.mxu0 0.0
        %5417 = vmatprep.subr.mxu0 0.0
        %5418 = vmatpush1.msra.mxu0 0.0
        %5419 = vmatprep.subr.mxu0 0.0
        %5420 = vmatpush1.msra.mxu0 0.0
        %5421 = vmatprep.subr.mxu0 0.0
        %5422 = vmatpush1.msra.mxu0 0.0
        %5423 = vmatprep.subr.mxu0 0.0
        %5424 = vmatpush1.msra.mxu0 0.0
        %5425 = vmatprep.subr.mxu0 0.0
        %5426 = vmatpush1.msra.mxu0 0.0
        %5427 = vmatprep.subr.mxu0 0.0
        %5428 = vmatpush1.msra.mxu0 0.0
        %5429 = vmatprep.subr.mxu0 0.0
        %5430 = vmatpush1.msra.mxu0 0.0
        %5431 = vmatprep.subr.mxu0 0.0
        %5432 = vmatpush1.msra.mxu0 0.0
        %5433 = vmatprep.subr.mxu0 0.0
        %5434 = vmatpush1.msra.mxu0 0.0
        %5435 = vmatprep.subr.mxu0 0.0
        %5436 = vmatpush1.msra.mxu0 %v5350
        %5437 = vmatprep.subr.mxu0 0.0
        %5438 = vmatpush1.msra.mxu0 %v5349
        %5439 = vmatprep.subr.mxu0 0.0
        %5440 = vmatpush2.msra.mxu0 0.0
        %5441 = vmatprep.subr.mxu0 0.0
        %5442 = vmatpush2.msra.mxu0 0.0
        %5443 = vmatprep.subr.mxu0 0.0
        %5444 = vmatpush2.msra.mxu0 0.0
        %5445 = vmatprep.subr.mxu0 0.0
        %5446 = vmatpush2.msra.mxu0 0.0
        %5447 = vmatprep.subr.mxu0 0.0
        %5448 = vmatpush2.msra.mxu0 0.0
        %5449 = vmatprep.subr.mxu0 0.0
        %5450 = vmatpush2.msra.mxu0 0.0
        %5451 = vmatprep.subr.mxu0 0.0
        %5452 = vmatpush2.msra.mxu0 0.0
        %5453 = vmatprep.subr.mxu0 0.0
        %5454 = vmatpush2.msra.mxu0 0.0
        %5455 = vmatprep.subr.mxu0 0.0
        %5456 = vmatpush2.msra.mxu0 0.0
        %5457 = vmatprep.subr.mxu0 0.0
        %5458 = vmatpush2.msra.mxu0 0.0
        %5459 = vmatprep.subr.mxu0 0.0
        %5460 = vmatpush2.msra.mxu0 0.0
        %5461 = vmatprep.subr.mxu0 0.0
        %5462 = vmatpush2.msra.mxu0 0.0
        %5463 = vmatprep.subr.mxu0 0.0
        %5464 = vmatpush2.msra.mxu0 0.0
        %5465 = vmatprep.subr.mxu0 0.0
        %5466 = vmatpush2.msra.mxu0 0.0
        %5467 = vmatprep.subr.mxu0 0.0
        %5468 = vmatpush2.msra.mxu0 0.0
        %5469 = vmatprep.subr.mxu0 0.0
        %5470 = vmatpush2.msra.mxu0 0.0
        %5471 = vmatprep.mubr.f32.mxu0 0.0
        %5472 = vmatmul.mubr.f32.gmra.mxu0 %v5360
        %v5473 = vpop.f32.mrf.mxu0
        %v5474 = vadd.f32 %v5356, %v5473
        %v5475 = vpop.f32.mrf.mxu0
        %5476 = vmatprep.mubr.f32.mxu0 0.0
        %5477 = vmatmul.mubr.f32.gmra.mxu0 %v5363
        %v5478 = vpop.f32.mrf.mxu0
        %v5479 = vadd.f32 %v5356, %v5478
        %v5480 = vpop.f32.mrf.mxu0
        %5481 = vmatprep.mubr.f32.mxu0 0.0
        %5482 = vmatmul.mubr.f32.gmra.mxu0 %v5366
        %v5483 = vpop.f32.mrf.mxu0
        %v5484 = vadd.f32 %v5356, %v5483
        %v5485 = vpop.f32.mrf.mxu0
        %5486 = vmatprep.mubr.f32.mxu0 0.0
        %5487 = vmatmul.mubr.f32.gmra.mxu0 %v5369
        %v5488 = vpop.f32.mrf.mxu0
        %v5489 = vadd.f32 %v5356, %v5488
        %v5490 = vpop.f32.mrf.mxu0
        %5491 = vmatprep.mubr.f32.mxu0 0.0
        %5492 = vmatmul.mubr.f32.gmra.mxu0 %v5372
        %v5493 = vpop.f32.mrf.mxu0
        %v5494 = vadd.f32 %v5356, %v5493
        %v5495 = vpop.f32.mrf.mxu0
        %5496 = vmatprep.mubr.f32.mxu0 0.0
        %5497 = vmatmul.mubr.f32.gmra.mxu0 %v5375
        %v5498 = vpop.f32.mrf.mxu0
        %v5499 = vadd.f32 %v5356, %v5498
        %v5500 = vpop.f32.mrf.mxu0
        %5501 = vmatprep.mubr.f32.mxu0 0.0
        %5502 = vmatmul.mubr.f32.gmra.mxu0 %v5378
        %v5503 = vpop.f32.mrf.mxu0
        %v5504 = vadd.f32 %v5356, %v5503
        %v5505 = vpop.f32.mrf.mxu0
        %5506 = vmatprep.mubr.f32.mxu0 0.0
        %5507 = vmatmul.mubr.f32.gmra.mxu0 %v5381
        %v5508 = vpop.f32.mrf.mxu0
        %v5509 = vadd.f32 %v5356, %v5508
        %v5510 = vpop.f32.mrf.mxu0
        %5511 = vmatprep.mubr.f32.mxu0 0.0
        %5512 = vmatmul.mubr.f32.gmra.mxu0 %v5384
        %v5513 = vpop.f32.mrf.mxu0
        %v5514 = vadd.f32 %v5356, %v5513
        %v5515 = vpop.f32.mrf.mxu0
        %5516 = vmatprep.mubr.f32.mxu0 0.0
        %5517 = vmatmul.mubr.f32.gmra.mxu0 %v5387
        %v5518 = vpop.f32.mrf.mxu0
        %v5519 = vadd.f32 %v5356, %v5518
        %v5520 = vpop.f32.mrf.mxu0
        %5521 = vmatprep.mubr.f32.mxu0 0.0
        %5522 = vmatmul.mubr.f32.gmra.mxu0 %v5390
        %v5523 = vpop.f32.mrf.mxu0
        %v5524 = vadd.f32 %v5356, %v5523
        %v5525 = vpop.f32.mrf.mxu0
        %5526 = vmatprep.mubr.f32.mxu0 0.0
        %5527 = vmatmul.mubr.f32.gmra.mxu0 %v5393
        %v5528 = vpop.f32.mrf.mxu0
        %v5529 = vadd.f32 %v5356, %v5528
        %v5530 = vpop.f32.mrf.mxu0
        %5531 = vmatprep.mubr.f32.mxu0 0.0
        %5532 = vmatmul.mubr.f32.gmra.mxu0 %v5396
        %v5533 = vpop.f32.mrf.mxu0
        %v5534 = vadd.f32 %v5356, %v5533
        %v5535 = vpop.f32.mrf.mxu0
        %5536 = vmatprep.mubr.f32.mxu0 0.0
        %5537 = vmatmul.mubr.f32.gmra.mxu0 %v5399
        %v5538 = vpop.f32.mrf.mxu0
        %v5539 = vadd.f32 %v5356, %v5538
        %v5540 = vpop.f32.mrf.mxu0
        %5541 = vmatprep.mubr.f32.mxu0 0.0
        %5542 = vmatmul.mubr.f32.gmra.mxu0 %v5402
        %v5543 = vpop.f32.mrf.mxu0
        %v5544 = vadd.f32 %v5356, %v5543
        %v5545 = vpop.f32.mrf.mxu0
        %5546 = vmatprep.mubr.f32.mxu0 0.0
        %5547 = vmatmul.mubr.f32.gmra.mxu0 %v5405
        %v5548 = vpop.f32.mrf.mxu0
        %v5549 = vadd.f32 %v5356, %v5548
        %v5550 = vpop.f32.mrf.mxu0
        %5551 = vdwg.mxu0
        %5552 = vst [vmem:[%s323] sm:$0xff] %v5474
        %5553 = vst [vmem:[%s323 + $0x8] sm:$0xff] %v5479
        %5554 = vst [vmem:[%s323 + $0x10] sm:$0xff] %v5484
        %5555 = vst [vmem:[%s323 + $0x18] sm:$0xff] %v5489
        %5556 = vst [vmem:[%s323 + $0x20] sm:$0xff] %v5494
        %5557 = vst [vmem:[%s323 + $0x28] sm:$0xff] %v5499
        %5558 = vst [vmem:[%s323 + $0x30] sm:$0xff] %v5504
        %5559 = vst [vmem:[%s323 + $0x38] sm:$0xff] %v5509
        %5560 = vst [vmem:[%s323 + $0x40] sm:$0xff] %v5514
        %5561 = vst [vmem:[%s323 + $0x48] sm:$0xff] %v5519
        %5562 = vst [vmem:[%s323 + $0x50] sm:$0xff] %v5524
        %5563 = vst [vmem:[%s323 + $0x58] sm:$0xff] %v5529
        %5564 = vst [vmem:[%s323 + $0x60] sm:$0xff] %v5534
        %5565 = vst [vmem:[%s323 + $0x68] sm:$0xff] %v5539
        %5566 = vst [vmem:[%s323 + $0x70] sm:$0xff] %v5544
        %5567 = vst [vmem:[%s323 + $0x78] sm:$0xff] %v5549
        %s5568 = sand.u32 %s206, 1
        %s5569 = scalar_lea.sflag [#allocation4], %s5568
        %s5570 = sand.u32 %s206, 1
        %s5571 = smul.addr %s5570, 128
        %s5572 = scalar_lea.vmem [#allocation5], %s5571
        // Predicated region
        $region57: #{tpu_custom_call.1} parent=51 // pred_check
          %p5573 = pneg %p216
        $region58: #{tpu_custom_call.1} parent=51 // pred_check_branch
          %5575 = sbr.rel (%p5573) target = $region60
        $region59: #{tpu_custom_call.1} parent=51 // pred_region
          %s5576 = smul.u32 16, %s25
          %s5578 = ssub.s32 2048, 2048
          %5579 = vsyncadd %s5569, %s5578
          %s5580 = smul.addr %s5576, 128
          %s5581 = scalar_lea.hbm %s8, %s5580
          %s5582 = sshll.u32 %s5572, 4
          %s5583 = int_to_ptr.vmem [resolvable:$true] %s5582
          %5588 = dma.vmem_to_hbm [thread:$0]  %s5583, 2048, %s5581, %s5569, 128, 128, 8
        $region60: #{tpu_custom_call.1} parent=51 // pred_fallthru
          _
      $region52: #{tpu_custom_call.1} parent=5 // pred_fallthru
        _
      %p5589 = scmp.le.s32.totalorder 2, %s20
      // Predicated region
      $region61: #{tpu_custom_call.1} parent=5 // pred_check
        %p5590 = pneg %p5589
      $region62: #{tpu_custom_call.1} parent=5 // pred_check_branch
        %5592 = sbr.rel (%p5590) target = $region64
      $region63: #{tpu_custom_call.1} parent=5 // pred_region
        %s5593 = ssub.s32 %s20, 2
        // Predicated region
        $region65: #{tpu_custom_call.1} parent=63 // pred_check
          %p5594 = pneg %p222
        $region66: #{tpu_custom_call.1} parent=63 // pred_check_branch
          %5596 = sbr.rel (%p5594) target = $region68
        $region67: #{tpu_custom_call.1} parent=63 // pred_region
          %s5597 = sand.u32 %s207, 1
          %s5598 = scalar_lea.sflag [#allocation4], %s5597
          %s5599 = sand.u32 %s207, 1
          %s5600 = smul.addr %s5599, 128
          %s5601 = scalar_lea.vmem [#allocation5], %s5600
          %5602 = dma.done %s5598, 2048
        $region68: #{tpu_custom_call.1} parent=63 // pred_fallthru
          _
      $region64: #{tpu_custom_call.1} parent=5 // pred_fallthru
        _
    $region6: #{tpu_custom_call.1} parent=1 // loop_footer
      %s24 = sadd.s32 1, %s20
    $region7: #{tpu_custom_call.1} parent=1 // loop_footer_branch
      %19 = sbr.rel target = $region3
    $region8: #{tpu_custom_call.1} parent=1 // loop_exit
      _
    %5603 = vsyncpa [#allocation3], 1
    %s5604 = scalar_lea.sflag [#allocation3], 1
    %5605 = vsyncpa %s5604, 1
    %5606 = vsyncpa [#allocation4], 1
    %s5607 = scalar_lea.sflag [#allocation4], 1
    %5608 = vsyncpa %s5607, 1

</llo_original>
